<compile_context>
chip_gen: v7x
topology: tpu7x:2x2x1
jax: 0.10.0
libtpu: 0.0.40
codegen_flags: <defaults>
</compile_context>

<pallas_src>
import functools

import jax
import jax.numpy as jnp
from jax.experimental import pallas as pl
from jax.experimental.pallas import tpu as pltpu  # noqa: F401  (TPU backend)


# ----------------------------------------------------------------------------
# Fused Pallas kernel
# ----------------------------------------------------------------------------
def _fused_kernel(*refs, NB1, NB2):
    """Whole MSHCNN forward for the whole batch in one invocation.

    refs layout (all full-array VMEM blocks):
      for each of NB1 1D branches: xcol (BT,K*C) bf16, w1 (K*C,F) bf16,
                                   ss1 (2,F) f32, w2 (3,F,F) f32, ss2 (2,F) f32
      for each of NB2 2D branches: xcol (BT,K*C) bf16, w1k (K*C,F*C) bf16,
                                   ss1 (2,F*C) f32, w2 (F*C,F) f32, ss2 (2,F) f32
      then: pool (B,BT), edge_mask (BT,2), head_ss (2,F),
            fc1_w (F,100), fc1_b (1,100), fc2_w (100,NC), fc2_b (1,NC), out (B,NC)
    """
    nb = NB1 + NB2
    br = [refs[5 * i:5 * i + 5] for i in range(nb)]
    (pool_ref, emask_ref, head_ss_ref,
     fc1_w_ref, fc1_b_ref, fc2_w_ref, fc2_b_ref, out_ref) = refs[5 * nb:]

    pool = pool_ref[...]                      # (B, BT) per-batch sum-pool matrix
    emask = emask_ref[...]                    # (BT, 2) time-boundary masks
    m_first = emask[:, 0:1]                   # 0.0 where t == 0
    m_last = emask[:, 1:2]                    # 0.0 where t == T-1

    B = pool.shape[0]
    BT = pool.shape[1]
    F = head_ss_ref.shape[1]

    acc = jnp.zeros((B, F), jnp.float32)      # sum over branches & time
    zrow = jnp.zeros((1, F), jnp.float32)

    # ---------------- M1DCNN branches ----------------
    for i in range(NB1):
        xcol_ref, w1_ref, ss1_ref, w2_ref, ss2_ref = br[i]
        ss1 = ss1_ref[...]
        ss2 = ss2_ref[...]

        # conv1 (kernel K) as one im2col matmul, contraction K*C.
        h1 = jnp.dot(xcol_ref[...], w1_ref[...],
                     preferred_element_type=jnp.float32)          # (BT, F)
        h1 = jnp.maximum(h1 * ss1[0:1, :] + ss1[1:2, :], 0.0)     # BN(+bias)+ReLU

        # conv2 (kernel 3, padding 1): per-tap matmuls, then shift rows in time.
        a0 = jnp.dot(h1, w2_ref[0], preferred_element_type=jnp.float32)
        a1 = jnp.dot(h1, w2_ref[1], preferred_element_type=jnp.float32)
        a2 = jnp.dot(h1, w2_ref[2], preferred_element_type=jnp.float32)
        a0s = jnp.concatenate([zrow, a0[:BT - 1, :]], axis=0) * m_first  # h1[t-1]
        a2s = jnp.concatenate([a2[1:, :], zrow], axis=0) * m_last        # h1[t+1]
        h2 = jnp.maximum((a0s + a1 + a2s) * ss2[0:1, :] + ss2[1:2, :], 0.0)

        acc = acc + jnp.dot(pool, h2, preferred_element_type=jnp.float32)

    # ---------------- M2DCNN branches ----------------
    for j in range(NB2):
        xcol_ref, w1k_ref, ss1_ref, w2_ref, ss2_ref = br[NB1 + j]
        ss1 = ss1_ref[...]
        ss2 = ss2_ref[...]

        # conv1 (K,1) as im2col matmul against kron(w1, I_C) -> lane-dense (BT, F*C)
        h1 = jnp.dot(xcol_ref[...], w1k_ref[...],
                     preferred_element_type=jnp.float32)          # (BT, F*C)
        h1 = jnp.maximum(h1 * ss1[0:1, :] + ss1[1:2, :], 0.0)

        # conv2 (1,C): single matmul with contraction F*C.
        h2 = jnp.dot(h1, w2_ref[...], preferred_element_type=jnp.float32)
        h2 = jnp.maximum(h2 * ss2[0:1, :] + ss2[1:2, :], 0.0)     # (BT, F)

        acc = acc + jnp.dot(pool, h2, preferred_element_type=jnp.float32)

    # ---------------- head: bn_fusion (folded) + avg pool + fc1/relu + fc2 ---
    hss = head_ss_ref[...]
    p = acc * hss[0:1, :] + hss[1:2, :]                           # (B, F)
    h = jnp.maximum(jnp.dot(p, fc1_w_ref[...],
                            preferred_element_type=jnp.float32)
                    + fc1_b_ref[...], 0.0)
    logits = (jnp.dot(h, fc2_w_ref[...], preferred_element_type=jnp.float32)
              + fc2_b_ref[...])
    out_ref[...] = logits.astype(out_ref.dtype)


# ----------------------------------------------------------------------------
# Wrapper helpers
# ----------------------------------------------------------------------------
def feature_enh(x, pairs):
    """(B, C, T) -> (B, C + 2*len(pairs), T): append diff and sum per pair."""
    enh = [x]
    for i, j in pairs:
        diff = x[:, i, :] - x[:, j, :]
        summ = x[:, i, :] + x[:, j, :]
        enh.append(diff[:, None, :])
        enh.append(summ[:, None, :])
    return jnp.concatenate(enh, axis=1)


def im2col_time(xpad, K, T):
    """xpad: (B, T+K-1, C)  ->  (B*T, K*C) with column index k*C + c."""
    B, _, C = xpad.shape
    idx = jnp.arange(T)[:, None] + jnp.arange(K)[None, :]         # (T, K)
    patches = xpad[:, idx, :]                                     # (B, T, K, C)
    return patches.reshape(B * T, K * C)


def init_params(key, n_channels, time_points, pairs, n_classes=2, n_filters=10):
    C = n_channels + 2 * len(pairs)
    F = n_filters
    T = time_points
    eps = 1e-5

    # Eval-mode BatchNorm of a fresh module: y = (x + bias)/sqrt(1+eps).
    # Folded:  scale = gamma/sqrt(var+eps),  shift = (bias - mean)*scale + beta.
    def bn_fold(bias):
        scale = jnp.full((F,), 1.0 / jnp.sqrt(1.0 + eps), jnp.float32)
        shift = bias * scale
        return scale, shift

    keys = iter(jax.random.split(key, 64))

    def kaiming(shape, fan_in):
        return (jax.random.normal(next(keys), shape, jnp.float32)
                * jnp.sqrt(2.0 / fan_in))

    # ---- M1DCNN branches (kernels 40, 70, 85) ----
    m1d = []
    for k in (40, 70, 85):
        w1_t = kaiming((F, C, k), C * k)            # torch Conv1d(C,F,k) weight
        b1_t = jnp.zeros((F,), jnp.float32)
        w2_t = kaiming((F, F, 3), F * 3)            # torch Conv1d(F,F,3) weight
        b2_t = jnp.zeros((F,), jnp.float32)
        s1, sh1 = bn_fold(b1_t)
        s2, sh2 = bn_fold(b2_t)
        m1d.append(dict(
            K=k,
            # W1[k*C + c, f] = w1_t[f, c, k]
            w1=jnp.transpose(w1_t, (2, 1, 0)).reshape(k * C, F).astype(jnp.bfloat16),
            ss1=jnp.stack([s1, sh1], axis=0),
            # W2[d, f, f'] = w2_t[f', f, d]
            w2=jnp.transpose(w2_t, (2, 1, 0)),
            ss2=jnp.stack([s2, sh2], axis=0)))

    # ---- M2DCNN branches (kernels 45, 60, 90) ----
    eye_c = jnp.eye(C, dtype=jnp.float32)
    m2d = []
    for k in (45, 60, 90):
        w1_t = kaiming((F, 1, k, 1), 1 * k * 1)     # torch Conv2d(1,F,(k,1))
        b1_t = jnp.zeros((F,), jnp.float32)
        w2_t = kaiming((F, F, 1, C), F * 1 * C)     # torch Conv2d(F,F,(1,C))
        b2_t = jnp.zeros((F,), jnp.float32)
        s1, sh1 = bn_fold(b1_t)
        s2, sh2 = bn_fold(b2_t)
        w1_kf = jnp.transpose(w1_t[:, 0, :, 0], (1, 0))           # (K, F)
        w1_kron = jnp.kron(w1_kf, eye_c)                          # (K*C, F*C)
        # W2F[f*C + c, f'] = w2_t[f', f, 0, c]
        w2_flat = jnp.transpose(w2_t[:, :, 0, :], (1, 2, 0)).reshape(F * C, F)
        m2d.append(dict(
            K=k,
            w1k=w1_kron.astype(jnp.bfloat16),
            ss1=jnp.stack([jnp.repeat(s1, C), jnp.repeat(sh1, C)], axis=0),
            w2=w2_flat,
            ss2=jnp.stack([s2, sh2], axis=0)))

    # bn_fusion + avg pool folded: mean_t(r*s + sh) = (sum_t r) * s/(6T) + sh
    bnf_s = jnp.full((F,), 1.0 / jnp.sqrt(1.0 + eps), jnp.float32)
    bnf_sh = jnp.zeros((F,), jnp.float32)
    n_branch = len(m1d) + len(m2d)
    head_ss = jnp.stack([bnf_s / float(n_branch * T), bnf_sh], axis=0)

    fc1_t = kaiming((100, F), F)
    fc2_t = kaiming((n_classes, 100), 100)
    return dict(
        pairs=tuple(tuple(p) for p in pairs),
        m1d=m1d, m2d=m2d, head_ss=head_ss,
        fc1_w=jnp.transpose(fc1_t), fc1_b=jnp.zeros((1, 100), jnp.float32),
        fc2_w=jnp.transpose(fc2_t),
        fc2_b=jnp.zeros((1, n_classes), jnp.float32))


def mshcnn_forward(x, params):
    pairs = params["pairs"]
    B, _, T = x.shape
    x_enh = feature_enh(x, pairs)                    # (B, C_enh, T)
    C = x_enh.shape[1]
    NC = params["fc2_b"].shape[1]

    x_tm = jnp.transpose(x_enh, (0, 2, 1))           # (B, T, C) time-major
    # torch does x_enh.view(b, 1, t, c): a RAW memory reinterpretation of the
    # contiguous (B, C, T) buffer -> reproduced exactly by a row-major reshape.
    x_2d = jnp.reshape(x_enh, (B, T, C))

    args = []
    for br in params["m1d"]:
        K = br["K"]
        pad_l = (K - 1) // 2
        xpad = jnp.pad(x_tm, ((0, 0), (pad_l, K - 1 - pad_l), (0, 0)))
        args += [im2col_time(xpad, K, T).astype(jnp.bfloat16),
                 br["w1"], br["ss1"], br["w2"], br["ss2"]]
    for br in params["m2d"]:
        K = br["K"]
        pad_t = (K - 1) // 2
        xpad = jnp.pad(x_2d, ((0, 0), (pad_t, K - 1 - pad_t), (0, 0)))
        args += [im2col_time(xpad, K, T).astype(jnp.bfloat16),
                 br["w1k"], br["ss1"], br["w2"], br["ss2"]]

    # per-batch sum-pooling matrix and time-boundary masks for the k=3 conv.
    bt = B * T
    pool = (jnp.arange(B)[:, None] == (jnp.arange(bt) // T)[None, :]
            ).astype(jnp.float32)                                  # (B, BT)
    t_idx = jnp.arange(bt) % T
    edge_mask = jnp.stack([(t_idx != 0), (t_idx != T - 1)],
                          axis=1).astype(jnp.float32)              # (BT, 2)

    args += [pool, edge_mask, params["head_ss"],
             params["fc1_w"], params["fc1_b"],
             params["fc2_w"], params["fc2_b"]]

    kernel = functools.partial(_fused_kernel,
                               NB1=len(params["m1d"]),
                               NB2=len(params["m2d"]))
    # Single invocation (no grid): every operand is one full-array VMEM block;
    # total VMEM footprint is ~1.5 MiB, so no tiling is needed at these sizes.
    return pl.pallas_call(
        kernel,
        out_shape=jax.ShapeDtypeStruct((B, NC), jnp.float32),
    )(*args)


# ----------------------------------------------------------------------------
if __name__ == "__main__":
    key = jax.random.PRNGKey(0)
    B, n_channels, T = 2, 4, 16
    pairs = ((0, 3), (1, 2))
    n_classes = 2

    pkey, xkey = jax.random.split(key)
    params = init_params(pkey, n_channels, T, pairs, n_classes=n_classes)
    x = jax.random.normal(xkey, (B, n_channels, T), jnp.float32)

    fwd = jax.jit(functools.partial(mshcnn_forward, params=params))
    logits = jax.block_until_ready(fwd(x))

    assert logits.shape == (B, n_classes)
    assert bool(jnp.all(jnp.isfinite(logits)))
    print("KERNEL_OK")
</pallas_src>

<mosaic_0001>
module attributes {stable_mosaic.version = 11 : i64} {
  func.func @_fused_kernel(%arg0: memref<32x320xbf16, #tpu.memory_space<vmem>>, %arg1: memref<320x10xbf16, #tpu.memory_space<vmem>>, %arg2: memref<2x10xf32, #tpu.memory_space<vmem>>, %arg3: memref<3x10x10xf32, #tpu.memory_space<vmem>>, %arg4: memref<2x10xf32, #tpu.memory_space<vmem>>, %arg5: memref<32x560xbf16, #tpu.memory_space<vmem>>, %arg6: memref<560x10xbf16, #tpu.memory_space<vmem>>, %arg7: memref<2x10xf32, #tpu.memory_space<vmem>>, %arg8: memref<3x10x10xf32, #tpu.memory_space<vmem>>, %arg9: memref<2x10xf32, #tpu.memory_space<vmem>>, %arg10: memref<32x680xbf16, #tpu.memory_space<vmem>>, %arg11: memref<680x10xbf16, #tpu.memory_space<vmem>>, %arg12: memref<2x10xf32, #tpu.memory_space<vmem>>, %arg13: memref<3x10x10xf32, #tpu.memory_space<vmem>>, %arg14: memref<2x10xf32, #tpu.memory_space<vmem>>, %arg15: memref<32x360xbf16, #tpu.memory_space<vmem>>, %arg16: memref<360x80xbf16, #tpu.memory_space<vmem>>, %arg17: memref<2x80xf32, #tpu.memory_space<vmem>>, %arg18: memref<80x10xf32, #tpu.memory_space<vmem>>, %arg19: memref<2x10xf32, #tpu.memory_space<vmem>>, %arg20: memref<32x480xbf16, #tpu.memory_space<vmem>>, %arg21: memref<480x80xbf16, #tpu.memory_space<vmem>>, %arg22: memref<2x80xf32, #tpu.memory_space<vmem>>, %arg23: memref<80x10xf32, #tpu.memory_space<vmem>>, %arg24: memref<2x10xf32, #tpu.memory_space<vmem>>, %arg25: memref<32x720xbf16, #tpu.memory_space<vmem>>, %arg26: memref<720x80xbf16, #tpu.memory_space<vmem>>, %arg27: memref<2x80xf32, #tpu.memory_space<vmem>>, %arg28: memref<80x10xf32, #tpu.memory_space<vmem>>, %arg29: memref<2x10xf32, #tpu.memory_space<vmem>>, %arg30: memref<2x32xf32, #tpu.memory_space<vmem>>, %arg31: memref<32x2xf32, #tpu.memory_space<vmem>>, %arg32: memref<2x10xf32, #tpu.memory_space<vmem>>, %arg33: memref<10x100xf32, #tpu.memory_space<vmem>>, %arg34: memref<1x100xf32, #tpu.memory_space<vmem>>, %arg35: memref<100x2xf32, #tpu.memory_space<vmem>>, %arg36: memref<1x2xf32, #tpu.memory_space<vmem>>, %arg37: memref<2x2xf32, #tpu.memory_space<vmem>>) attributes {dimension_semantics = [], scalar_prefetch = 0 : i64, scratch_operands = 0 : i64, tpu.core_type = #tpu.core_type<tc>} {
    %c0 = arith.constant 0 : index
    %c0_0 = arith.constant 0 : index
    %0 = vector.load %arg30[%c0, %c0_0] : memref<2x32xf32, #tpu.memory_space<vmem>>, vector<2x32xf32>
    %c0_1 = arith.constant 0 : index
    %c0_2 = arith.constant 0 : index
    %1 = vector.load %arg31[%c0_1, %c0_2] : memref<32x2xf32, #tpu.memory_space<vmem>>, vector<32x2xf32>
    %2 = vector.extract_strided_slice %1 {offsets = [0, 0], sizes = [32, 1], strides = [1, 1]} : vector<32x2xf32> to vector<32x1xf32>
    %3 = vector.extract_strided_slice %1 {offsets = [0, 1], sizes = [32, 1], strides = [1, 1]} : vector<32x2xf32> to vector<32x1xf32>
    %cst = arith.constant 0.000000e+00 : f32
    %4 = vector.broadcast %cst : f32 to vector<2x10xf32>
    %cst_3 = arith.constant 0.000000e+00 : f32
    %5 = vector.broadcast %cst_3 : f32 to vector<1x10xf32>
    %c0_4 = arith.constant 0 : index
    %c0_5 = arith.constant 0 : index
    %6 = vector.load %arg2[%c0_4, %c0_5] : memref<2x10xf32, #tpu.memory_space<vmem>>, vector<2x10xf32>
    %c0_6 = arith.constant 0 : index
    %c0_7 = arith.constant 0 : index
    %7 = vector.load %arg4[%c0_6, %c0_7] : memref<2x10xf32, #tpu.memory_space<vmem>>, vector<2x10xf32>
    %c0_8 = arith.constant 0 : index
    %c0_9 = arith.constant 0 : index
    %8 = vector.load %arg0[%c0_8, %c0_9] : memref<32x320xbf16, #tpu.memory_space<vmem>>, vector<32x320xbf16>
    %c0_10 = arith.constant 0 : index
    %c0_11 = arith.constant 0 : index
    %9 = vector.load %arg1[%c0_10, %c0_11] : memref<320x10xbf16, #tpu.memory_space<vmem>>, vector<320x10xbf16>
    %cst_12 = arith.constant dense<0.000000e+00> : vector<32x10xf32>
    %10 = tpu.matmul %8, %9, %cst_12 {dimension_numbers = #tpu.dot_dimension_numbers<[1], [0], [0], [1], [0, 0, 1, 1], [], []>} : vector<32x320xbf16>, vector<320x10xbf16>, vector<32x10xf32> -> vector<32x10xf32>
    %11 = vector.extract_strided_slice %6 {offsets = [0, 0], sizes = [1, 10], strides = [1, 1]} : vector<2x10xf32> to vector<1x10xf32>
    %12 = vector.broadcast %11 : vector<1x10xf32> to vector<32x10xf32>
    %13 = arith.mulf %10, %12 : vector<32x10xf32>
    %14 = vector.extract_strided_slice %6 {offsets = [1, 0], sizes = [1, 10], strides = [1, 1]} : vector<2x10xf32> to vector<1x10xf32>
    %15 = vector.broadcast %14 : vector<1x10xf32> to vector<32x10xf32>
    %16 = arith.addf %13, %15 : vector<32x10xf32>
    %cst_13 = arith.constant 0.000000e+00 : f32
    %17 = vector.broadcast %cst_13 : f32 to vector<32x10xf32>
    %18 = arith.maximumf %16, %17 : vector<32x10xf32>
    %c0_14 = arith.constant 0 : index
    %c0_15 = arith.constant 0 : index
    %c0_16 = arith.constant 0 : index
    %19 = vector.load %arg3[%c0_14, %c0_15, %c0_16] : memref<3x10x10xf32, #tpu.memory_space<vmem>>, vector<1x10x10xf32>
    %20 = vector.shape_cast %19 : vector<1x10x10xf32> to vector<10x10xf32>
    %cst_17 = arith.constant dense<0.000000e+00> : vector<32x10xf32>
    %21 = tpu.matmul %18, %20, %cst_17 {dimension_numbers = #tpu.dot_dimension_numbers<[1], [0], [0], [1], [0, 0, 1, 1], [], []>} : vector<32x10xf32>, vector<10x10xf32>, vector<32x10xf32> -> vector<32x10xf32>
    %c1 = arith.constant 1 : index
    %c0_18 = arith.constant 0 : index
    %c0_19 = arith.constant 0 : index
    %22 = vector.load %arg3[%c1, %c0_18, %c0_19] : memref<3x10x10xf32, #tpu.memory_space<vmem>>, vector<1x10x10xf32>
    %23 = vector.shape_cast %22 : vector<1x10x10xf32> to vector<10x10xf32>
    %cst_20 = arith.constant dense<0.000000e+00> : vector<32x10xf32>
    %24 = tpu.matmul %18, %23, %cst_20 {dimension_numbers = #tpu.dot_dimension_numbers<[1], [0], [0], [1], [0, 0, 1, 1], [], []>} : vector<32x10xf32>, vector<10x10xf32>, vector<32x10xf32> -> vector<32x10xf32>
    %c2 = arith.constant 2 : index
    %c0_21 = arith.constant 0 : index
    %c0_22 = arith.constant 0 : index
    %25 = vector.load %arg3[%c2, %c0_21, %c0_22] : memref<3x10x10xf32, #tpu.memory_space<vmem>>, vector<1x10x10xf32>
    %26 = vector.shape_cast %25 : vector<1x10x10xf32> to vector<10x10xf32>
    %cst_23 = arith.constant dense<0.000000e+00> : vector<32x10xf32>
    %27 = tpu.matmul %18, %26, %cst_23 {dimension_numbers = #tpu.dot_dimension_numbers<[1], [0], [0], [1], [0, 0, 1, 1], [], []>} : vector<32x10xf32>, vector<10x10xf32>, vector<32x10xf32> -> vector<32x10xf32>
    %28 = vector.extract_strided_slice %21 {offsets = [0, 0], sizes = [31, 10], strides = [1, 1]} : vector<32x10xf32> to vector<31x10xf32>
    %29 = tpu.concatenate %5, %28 in 0 : vector<1x10xf32>, vector<31x10xf32> -> vector<32x10xf32>
    %30 = vector.broadcast %2 : vector<32x1xf32> to vector<32x10xf32>
    %31 = arith.mulf %29, %30 : vector<32x10xf32>
    %32 = vector.extract_strided_slice %27 {offsets = [1, 0], sizes = [31, 10], strides = [1, 1]} : vector<32x10xf32> to vector<31x10xf32>
    %33 = tpu.concatenate %32, %5 in 0 : vector<31x10xf32>, vector<1x10xf32> -> vector<32x10xf32>
    %34 = vector.broadcast %3 : vector<32x1xf32> to vector<32x10xf32>
    %35 = arith.mulf %33, %34 : vector<32x10xf32>
    %36 = arith.addf %31, %24 : vector<32x10xf32>
    %37 = arith.addf %36, %35 : vector<32x10xf32>
    %38 = vector.extract_strided_slice %7 {offsets = [0, 0], sizes = [1, 10], strides = [1, 1]} : vector<2x10xf32> to vector<1x10xf32>
    %39 = vector.broadcast %38 : vector<1x10xf32> to vector<32x10xf32>
    %40 = arith.mulf %37, %39 : vector<32x10xf32>
    %41 = vector.extract_strided_slice %7 {offsets = [1, 0], sizes = [1, 10], strides = [1, 1]} : vector<2x10xf32> to vector<1x10xf32>
    %42 = vector.broadcast %41 : vector<1x10xf32> to vector<32x10xf32>
    %43 = arith.addf %40, %42 : vector<32x10xf32>
    %cst_24 = arith.constant 0.000000e+00 : f32
    %44 = vector.broadcast %cst_24 : f32 to vector<32x10xf32>
    %45 = arith.maximumf %43, %44 : vector<32x10xf32>
    %cst_25 = arith.constant dense<0.000000e+00> : vector<2x10xf32>
    %46 = tpu.matmul %0, %45, %cst_25 {dimension_numbers = #tpu.dot_dimension_numbers<[1], [0], [0], [1], [0, 0, 1, 1], [], []>} : vector<2x32xf32>, vector<32x10xf32>, vector<2x10xf32> -> vector<2x10xf32>
    %47 = arith.addf %4, %46 : vector<2x10xf32>
    %c0_26 = arith.constant 0 : index
    %c0_27 = arith.constant 0 : index
    %48 = vector.load %arg7[%c0_26, %c0_27] : memref<2x10xf32, #tpu.memory_space<vmem>>, vector<2x10xf32>
    %c0_28 = arith.constant 0 : index
    %c0_29 = arith.constant 0 : index
    %49 = vector.load %arg9[%c0_28, %c0_29] : memref<2x10xf32, #tpu.memory_space<vmem>>, vector<2x10xf32>
    %c0_30 = arith.constant 0 : index
    %c0_31 = arith.constant 0 : index
    %50 = vector.load %arg5[%c0_30, %c0_31] : memref<32x560xbf16, #tpu.memory_space<vmem>>, vector<32x560xbf16>
    %c0_32 = arith.constant 0 : index
    %c0_33 = arith.constant 0 : index
    %51 = vector.load %arg6[%c0_32, %c0_33] : memref<560x10xbf16, #tpu.memory_space<vmem>>, vector<560x10xbf16>
    %cst_34 = arith.constant dense<0.000000e+00> : vector<32x10xf32>
    %52 = tpu.matmul %50, %51, %cst_34 {dimension_numbers = #tpu.dot_dimension_numbers<[1], [0], [0], [1], [0, 0, 1, 1], [], []>} : vector<32x560xbf16>, vector<560x10xbf16>, vector<32x10xf32> -> vector<32x10xf32>
    %53 = vector.extract_strided_slice %48 {offsets = [0, 0], sizes = [1, 10], strides = [1, 1]} : vector<2x10xf32> to vector<1x10xf32>
    %54 = vector.broadcast %53 : vector<1x10xf32> to vector<32x10xf32>
    %55 = arith.mulf %52, %54 : vector<32x10xf32>
    %56 = vector.extract_strided_slice %48 {offsets = [1, 0], sizes = [1, 10], strides = [1, 1]} : vector<2x10xf32> to vector<1x10xf32>
    %57 = vector.broadcast %56 : vector<1x10xf32> to vector<32x10xf32>
    %58 = arith.addf %55, %57 : vector<32x10xf32>
    %cst_35 = arith.constant 0.000000e+00 : f32
    %59 = vector.broadcast %cst_35 : f32 to vector<32x10xf32>
    %60 = arith.maximumf %58, %59 : vector<32x10xf32>
    %c0_36 = arith.constant 0 : index
    %c0_37 = arith.constant 0 : index
    %c0_38 = arith.constant 0 : index
    %61 = vector.load %arg8[%c0_36, %c0_37, %c0_38] : memref<3x10x10xf32, #tpu.memory_space<vmem>>, vector<1x10x10xf32>
    %62 = vector.shape_cast %61 : vector<1x10x10xf32> to vector<10x10xf32>
    %cst_39 = arith.constant dense<0.000000e+00> : vector<32x10xf32>
    %63 = tpu.matmul %60, %62, %cst_39 {dimension_numbers = #tpu.dot_dimension_numbers<[1], [0], [0], [1], [0, 0, 1, 1], [], []>} : vector<32x10xf32>, vector<10x10xf32>, vector<32x10xf32> -> vector<32x10xf32>
    %c1_40 = arith.constant 1 : index
    %c0_41 = arith.constant 0 : index
    %c0_42 = arith.constant 0 : index
    %64 = vector.load %arg8[%c1_40, %c0_41, %c0_42] : memref<3x10x10xf32, #tpu.memory_space<vmem>>, vector<1x10x10xf32>
    %65 = vector.shape_cast %64 : vector<1x10x10xf32> to vector<10x10xf32>
    %cst_43 = arith.constant dense<0.000000e+00> : vector<32x10xf32>
    %66 = tpu.matmul %60, %65, %cst_43 {dimension_numbers = #tpu.dot_dimension_numbers<[1], [0], [0], [1], [0, 0, 1, 1], [], []>} : vector<32x10xf32>, vector<10x10xf32>, vector<32x10xf32> -> vector<32x10xf32>
    %c2_44 = arith.constant 2 : index
    %c0_45 = arith.constant 0 : index
    %c0_46 = arith.constant 0 : index
    %67 = vector.load %arg8[%c2_44, %c0_45, %c0_46] : memref<3x10x10xf32, #tpu.memory_space<vmem>>, vector<1x10x10xf32>
    %68 = vector.shape_cast %67 : vector<1x10x10xf32> to vector<10x10xf32>
    %cst_47 = arith.constant dense<0.000000e+00> : vector<32x10xf32>
    %69 = tpu.matmul %60, %68, %cst_47 {dimension_numbers = #tpu.dot_dimension_numbers<[1], [0], [0], [1], [0, 0, 1, 1], [], []>} : vector<32x10xf32>, vector<10x10xf32>, vector<32x10xf32> -> vector<32x10xf32>
    %70 = vector.extract_strided_slice %63 {offsets = [0, 0], sizes = [31, 10], strides = [1, 1]} : vector<32x10xf32> to vector<31x10xf32>
    %71 = tpu.concatenate %5, %70 in 0 : vector<1x10xf32>, vector<31x10xf32> -> vector<32x10xf32>
    %72 = vector.broadcast %2 : vector<32x1xf32> to vector<32x10xf32>
    %73 = arith.mulf %71, %72 : vector<32x10xf32>
    %74 = vector.extract_strided_slice %69 {offsets = [1, 0], sizes = [31, 10], strides = [1, 1]} : vector<32x10xf32> to vector<31x10xf32>
    %75 = tpu.concatenate %74, %5 in 0 : vector<31x10xf32>, vector<1x10xf32> -> vector<32x10xf32>
    %76 = vector.broadcast %3 : vector<32x1xf32> to vector<32x10xf32>
    %77 = arith.mulf %75, %76 : vector<32x10xf32>
    %78 = arith.addf %73, %66 : vector<32x10xf32>
    %79 = arith.addf %78, %77 : vector<32x10xf32>
    %80 = vector.extract_strided_slice %49 {offsets = [0, 0], sizes = [1, 10], strides = [1, 1]} : vector<2x10xf32> to vector<1x10xf32>
    %81 = vector.broadcast %80 : vector<1x10xf32> to vector<32x10xf32>
    %82 = arith.mulf %79, %81 : vector<32x10xf32>
    %83 = vector.extract_strided_slice %49 {offsets = [1, 0], sizes = [1, 10], strides = [1, 1]} : vector<2x10xf32> to vector<1x10xf32>
    %84 = vector.broadcast %83 : vector<1x10xf32> to vector<32x10xf32>
    %85 = arith.addf %82, %84 : vector<32x10xf32>
    %cst_48 = arith.constant 0.000000e+00 : f32
    %86 = vector.broadcast %cst_48 : f32 to vector<32x10xf32>
    %87 = arith.maximumf %85, %86 : vector<32x10xf32>
    %cst_49 = arith.constant dense<0.000000e+00> : vector<2x10xf32>
    %88 = tpu.matmul %0, %87, %cst_49 {dimension_numbers = #tpu.dot_dimension_numbers<[1], [0], [0], [1], [0, 0, 1, 1], [], []>} : vector<2x32xf32>, vector<32x10xf32>, vector<2x10xf32> -> vector<2x10xf32>
    %89 = arith.addf %47, %88 : vector<2x10xf32>
    %c0_50 = arith.constant 0 : index
    %c0_51 = arith.constant 0 : index
    %90 = vector.load %arg12[%c0_50, %c0_51] : memref<2x10xf32, #tpu.memory_space<vmem>>, vector<2x10xf32>
    %c0_52 = arith.constant 0 : index
    %c0_53 = arith.constant 0 : index
    %91 = vector.load %arg14[%c0_52, %c0_53] : memref<2x10xf32, #tpu.memory_space<vmem>>, vector<2x10xf32>
    %c0_54 = arith.constant 0 : index
    %c0_55 = arith.constant 0 : index
    %92 = vector.load %arg10[%c0_54, %c0_55] : memref<32x680xbf16, #tpu.memory_space<vmem>>, vector<32x680xbf16>
    %c0_56 = arith.constant 0 : index
    %c0_57 = arith.constant 0 : index
    %93 = vector.load %arg11[%c0_56, %c0_57] : memref<680x10xbf16, #tpu.memory_space<vmem>>, vector<680x10xbf16>
    %cst_58 = arith.constant dense<0.000000e+00> : vector<32x10xf32>
    %94 = tpu.matmul %92, %93, %cst_58 {dimension_numbers = #tpu.dot_dimension_numbers<[1], [0], [0], [1], [0, 0, 1, 1], [], []>} : vector<32x680xbf16>, vector<680x10xbf16>, vector<32x10xf32> -> vector<32x10xf32>
    %95 = vector.extract_strided_slice %90 {offsets = [0, 0], sizes = [1, 10], strides = [1, 1]} : vector<2x10xf32> to vector<1x10xf32>
    %96 = vector.broadcast %95 : vector<1x10xf32> to vector<32x10xf32>
    %97 = arith.mulf %94, %96 : vector<32x10xf32>
    %98 = vector.extract_strided_slice %90 {offsets = [1, 0], sizes = [1, 10], strides = [1, 1]} : vector<2x10xf32> to vector<1x10xf32>
    %99 = vector.broadcast %98 : vector<1x10xf32> to vector<32x10xf32>
    %100 = arith.addf %97, %99 : vector<32x10xf32>
    %cst_59 = arith.constant 0.000000e+00 : f32
    %101 = vector.broadcast %cst_59 : f32 to vector<32x10xf32>
    %102 = arith.maximumf %100, %101 : vector<32x10xf32>
    %c0_60 = arith.constant 0 : index
    %c0_61 = arith.constant 0 : index
    %c0_62 = arith.constant 0 : index
    %103 = vector.load %arg13[%c0_60, %c0_61, %c0_62] : memref<3x10x10xf32, #tpu.memory_space<vmem>>, vector<1x10x10xf32>
    %104 = vector.shape_cast %103 : vector<1x10x10xf32> to vector<10x10xf32>
    %cst_63 = arith.constant dense<0.000000e+00> : vector<32x10xf32>
    %105 = tpu.matmul %102, %104, %cst_63 {dimension_numbers = #tpu.dot_dimension_numbers<[1], [0], [0], [1], [0, 0, 1, 1], [], []>} : vector<32x10xf32>, vector<10x10xf32>, vector<32x10xf32> -> vector<32x10xf32>
    %c1_64 = arith.constant 1 : index
    %c0_65 = arith.constant 0 : index
    %c0_66 = arith.constant 0 : index
    %106 = vector.load %arg13[%c1_64, %c0_65, %c0_66] : memref<3x10x10xf32, #tpu.memory_space<vmem>>, vector<1x10x10xf32>
    %107 = vector.shape_cast %106 : vector<1x10x10xf32> to vector<10x10xf32>
    %cst_67 = arith.constant dense<0.000000e+00> : vector<32x10xf32>
    %108 = tpu.matmul %102, %107, %cst_67 {dimension_numbers = #tpu.dot_dimension_numbers<[1], [0], [0], [1], [0, 0, 1, 1], [], []>} : vector<32x10xf32>, vector<10x10xf32>, vector<32x10xf32> -> vector<32x10xf32>
    %c2_68 = arith.constant 2 : index
    %c0_69 = arith.constant 0 : index
    %c0_70 = arith.constant 0 : index
    %109 = vector.load %arg13[%c2_68, %c0_69, %c0_70] : memref<3x10x10xf32, #tpu.memory_space<vmem>>, vector<1x10x10xf32>
    %110 = vector.shape_cast %109 : vector<1x10x10xf32> to vector<10x10xf32>
    %cst_71 = arith.constant dense<0.000000e+00> : vector<32x10xf32>
    %111 = tpu.matmul %102, %110, %cst_71 {dimension_numbers = #tpu.dot_dimension_numbers<[1], [0], [0], [1], [0, 0, 1, 1], [], []>} : vector<32x10xf32>, vector<10x10xf32>, vector<32x10xf32> -> vector<32x10xf32>
    %112 = vector.extract_strided_slice %105 {offsets = [0, 0], sizes = [31, 10], strides = [1, 1]} : vector<32x10xf32> to vector<31x10xf32>
    %113 = tpu.concatenate %5, %112 in 0 : vector<1x10xf32>, vector<31x10xf32> -> vector<32x10xf32>
    %114 = vector.broadcast %2 : vector<32x1xf32> to vector<32x10xf32>
    %115 = arith.mulf %113, %114 : vector<32x10xf32>
    %116 = vector.extract_strided_slice %111 {offsets = [1, 0], sizes = [31, 10], strides = [1, 1]} : vector<32x10xf32> to vector<31x10xf32>
    %117 = tpu.concatenate %116, %5 in 0 : vector<31x10xf32>, vector<1x10xf32> -> vector<32x10xf32>
    %118 = vector.broadcast %3 : vector<32x1xf32> to vector<32x10xf32>
    %119 = arith.mulf %117, %118 : vector<32x10xf32>
    %120 = arith.addf %115, %108 : vector<32x10xf32>
    %121 = arith.addf %120, %119 : vector<32x10xf32>
    %122 = vector.extract_strided_slice %91 {offsets = [0, 0], sizes = [1, 10], strides = [1, 1]} : vector<2x10xf32> to vector<1x10xf32>
    %123 = vector.broadcast %122 : vector<1x10xf32> to vector<32x10xf32>
    %124 = arith.mulf %121, %123 : vector<32x10xf32>
    %125 = vector.extract_strided_slice %91 {offsets = [1, 0], sizes = [1, 10], strides = [1, 1]} : vector<2x10xf32> to vector<1x10xf32>
    %126 = vector.broadcast %125 : vector<1x10xf32> to vector<32x10xf32>
    %127 = arith.addf %124, %126 : vector<32x10xf32>
    %cst_72 = arith.constant 0.000000e+00 : f32
    %128 = vector.broadcast %cst_72 : f32 to vector<32x10xf32>
    %129 = arith.maximumf %127, %128 : vector<32x10xf32>
    %cst_73 = arith.constant dense<0.000000e+00> : vector<2x10xf32>
    %130 = tpu.matmul %0, %129, %cst_73 {dimension_numbers = #tpu.dot_dimension_numbers<[1], [0], [0], [1], [0, 0, 1, 1], [], []>} : vector<2x32xf32>, vector<32x10xf32>, vector<2x10xf32> -> vector<2x10xf32>
    %131 = arith.addf %89, %130 : vector<2x10xf32>
    %c0_74 = arith.constant 0 : index
    %c0_75 = arith.constant 0 : index
    %132 = vector.load %arg17[%c0_74, %c0_75] : memref<2x80xf32, #tpu.memory_space<vmem>>, vector<2x80xf32>
    %c0_76 = arith.constant 0 : index
    %c0_77 = arith.constant 0 : index
    %133 = vector.load %arg19[%c0_76, %c0_77] : memref<2x10xf32, #tpu.memory_space<vmem>>, vector<2x10xf32>
    %c0_78 = arith.constant 0 : index
    %c0_79 = arith.constant 0 : index
    %134 = vector.load %arg15[%c0_78, %c0_79] : memref<32x360xbf16, #tpu.memory_space<vmem>>, vector<32x360xbf16>
    %c0_80 = arith.constant 0 : index
    %c0_81 = arith.constant 0 : index
    %135 = vector.load %arg16[%c0_80, %c0_81] : memref<360x80xbf16, #tpu.memory_space<vmem>>, vector<360x80xbf16>
    %cst_82 = arith.constant dense<0.000000e+00> : vector<32x80xf32>
    %136 = tpu.matmul %134, %135, %cst_82 {dimension_numbers = #tpu.dot_dimension_numbers<[1], [0], [0], [1], [0, 0, 1, 1], [], []>} : vector<32x360xbf16>, vector<360x80xbf16>, vector<32x80xf32> -> vector<32x80xf32>
    %137 = vector.extract_strided_slice %132 {offsets = [0, 0], sizes = [1, 80], strides = [1, 1]} : vector<2x80xf32> to vector<1x80xf32>
    %138 = vector.broadcast %137 : vector<1x80xf32> to vector<32x80xf32>
    %139 = arith.mulf %136, %138 : vector<32x80xf32>
    %140 = vector.extract_strided_slice %132 {offsets = [1, 0], sizes = [1, 80], strides = [1, 1]} : vector<2x80xf32> to vector<1x80xf32>
    %141 = vector.broadcast %140 : vector<1x80xf32> to vector<32x80xf32>
    %142 = arith.addf %139, %141 : vector<32x80xf32>
    %cst_83 = arith.constant 0.000000e+00 : f32
    %143 = vector.broadcast %cst_83 : f32 to vector<32x80xf32>
    %144 = arith.maximumf %142, %143 : vector<32x80xf32>
    %c0_84 = arith.constant 0 : index
    %c0_85 = arith.constant 0 : index
    %145 = vector.load %arg18[%c0_84, %c0_85] : memref<80x10xf32, #tpu.memory_space<vmem>>, vector<80x10xf32>
    %cst_86 = arith.constant dense<0.000000e+00> : vector<32x10xf32>
    %146 = tpu.matmul %144, %145, %cst_86 {dimension_numbers = #tpu.dot_dimension_numbers<[1], [0], [0], [1], [0, 0, 1, 1], [], []>} : vector<32x80xf32>, vector<80x10xf32>, vector<32x10xf32> -> vector<32x10xf32>
    %147 = vector.extract_strided_slice %133 {offsets = [0, 0], sizes = [1, 10], strides = [1, 1]} : vector<2x10xf32> to vector<1x10xf32>
    %148 = vector.broadcast %147 : vector<1x10xf32> to vector<32x10xf32>
    %149 = arith.mulf %146, %148 : vector<32x10xf32>
    %150 = vector.extract_strided_slice %133 {offsets = [1, 0], sizes = [1, 10], strides = [1, 1]} : vector<2x10xf32> to vector<1x10xf32>
    %151 = vector.broadcast %150 : vector<1x10xf32> to vector<32x10xf32>
    %152 = arith.addf %149, %151 : vector<32x10xf32>
    %cst_87 = arith.constant 0.000000e+00 : f32
    %153 = vector.broadcast %cst_87 : f32 to vector<32x10xf32>
    %154 = arith.maximumf %152, %153 : vector<32x10xf32>
    %cst_88 = arith.constant dense<0.000000e+00> : vector<2x10xf32>
    %155 = tpu.matmul %0, %154, %cst_88 {dimension_numbers = #tpu.dot_dimension_numbers<[1], [0], [0], [1], [0, 0, 1, 1], [], []>} : vector<2x32xf32>, vector<32x10xf32>, vector<2x10xf32> -> vector<2x10xf32>
    %156 = arith.addf %131, %155 : vector<2x10xf32>
    %c0_89 = arith.constant 0 : index
    %c0_90 = arith.constant 0 : index
    %157 = vector.load %arg22[%c0_89, %c0_90] : memref<2x80xf32, #tpu.memory_space<vmem>>, vector<2x80xf32>
    %c0_91 = arith.constant 0 : index
    %c0_92 = arith.constant 0 : index
    %158 = vector.load %arg24[%c0_91, %c0_92] : memref<2x10xf32, #tpu.memory_space<vmem>>, vector<2x10xf32>
    %c0_93 = arith.constant 0 : index
    %c0_94 = arith.constant 0 : index
    %159 = vector.load %arg20[%c0_93, %c0_94] : memref<32x480xbf16, #tpu.memory_space<vmem>>, vector<32x480xbf16>
    %c0_95 = arith.constant 0 : index
    %c0_96 = arith.constant 0 : index
    %160 = vector.load %arg21[%c0_95, %c0_96] : memref<480x80xbf16, #tpu.memory_space<vmem>>, vector<480x80xbf16>
    %cst_97 = arith.constant dense<0.000000e+00> : vector<32x80xf32>
    %161 = tpu.matmul %159, %160, %cst_97 {dimension_numbers = #tpu.dot_dimension_numbers<[1], [0], [0], [1], [0, 0, 1, 1], [], []>} : vector<32x480xbf16>, vector<480x80xbf16>, vector<32x80xf32> -> vector<32x80xf32>
    %162 = vector.extract_strided_slice %157 {offsets = [0, 0], sizes = [1, 80], strides = [1, 1]} : vector<2x80xf32> to vector<1x80xf32>
    %163 = vector.broadcast %162 : vector<1x80xf32> to vector<32x80xf32>
    %164 = arith.mulf %161, %163 : vector<32x80xf32>
    %165 = vector.extract_strided_slice %157 {offsets = [1, 0], sizes = [1, 80], strides = [1, 1]} : vector<2x80xf32> to vector<1x80xf32>
    %166 = vector.broadcast %165 : vector<1x80xf32> to vector<32x80xf32>
    %167 = arith.addf %164, %166 : vector<32x80xf32>
    %cst_98 = arith.constant 0.000000e+00 : f32
    %168 = vector.broadcast %cst_98 : f32 to vector<32x80xf32>
    %169 = arith.maximumf %167, %168 : vector<32x80xf32>
    %c0_99 = arith.constant 0 : index
    %c0_100 = arith.constant 0 : index
    %170 = vector.load %arg23[%c0_99, %c0_100] : memref<80x10xf32, #tpu.memory_space<vmem>>, vector<80x10xf32>
    %cst_101 = arith.constant dense<0.000000e+00> : vector<32x10xf32>
    %171 = tpu.matmul %169, %170, %cst_101 {dimension_numbers = #tpu.dot_dimension_numbers<[1], [0], [0], [1], [0, 0, 1, 1], [], []>} : vector<32x80xf32>, vector<80x10xf32>, vector<32x10xf32> -> vector<32x10xf32>
    %172 = vector.extract_strided_slice %158 {offsets = [0, 0], sizes = [1, 10], strides = [1, 1]} : vector<2x10xf32> to vector<1x10xf32>
    %173 = vector.broadcast %172 : vector<1x10xf32> to vector<32x10xf32>
    %174 = arith.mulf %171, %173 : vector<32x10xf32>
    %175 = vector.extract_strided_slice %158 {offsets = [1, 0], sizes = [1, 10], strides = [1, 1]} : vector<2x10xf32> to vector<1x10xf32>
    %176 = vector.broadcast %175 : vector<1x10xf32> to vector<32x10xf32>
    %177 = arith.addf %174, %176 : vector<32x10xf32>
    %cst_102 = arith.constant 0.000000e+00 : f32
    %178 = vector.broadcast %cst_102 : f32 to vector<32x10xf32>
    %179 = arith.maximumf %177, %178 : vector<32x10xf32>
    %cst_103 = arith.constant dense<0.000000e+00> : vector<2x10xf32>
    %180 = tpu.matmul %0, %179, %cst_103 {dimension_numbers = #tpu.dot_dimension_numbers<[1], [0], [0], [1], [0, 0, 1, 1], [], []>} : vector<2x32xf32>, vector<32x10xf32>, vector<2x10xf32> -> vector<2x10xf32>
    %181 = arith.addf %156, %180 : vector<2x10xf32>
    %c0_104 = arith.constant 0 : index
    %c0_105 = arith.constant 0 : index
    %182 = vector.load %arg27[%c0_104, %c0_105] : memref<2x80xf32, #tpu.memory_space<vmem>>, vector<2x80xf32>
    %c0_106 = arith.constant 0 : index
    %c0_107 = arith.constant 0 : index
    %183 = vector.load %arg29[%c0_106, %c0_107] : memref<2x10xf32, #tpu.memory_space<vmem>>, vector<2x10xf32>
    %c0_108 = arith.constant 0 : index
    %c0_109 = arith.constant 0 : index
    %184 = vector.load %arg25[%c0_108, %c0_109] : memref<32x720xbf16, #tpu.memory_space<vmem>>, vector<32x720xbf16>
    %c0_110 = arith.constant 0 : index
    %c0_111 = arith.constant 0 : index
    %185 = vector.load %arg26[%c0_110, %c0_111] : memref<720x80xbf16, #tpu.memory_space<vmem>>, vector<720x80xbf16>
    %cst_112 = arith.constant dense<0.000000e+00> : vector<32x80xf32>
    %186 = tpu.matmul %184, %185, %cst_112 {dimension_numbers = #tpu.dot_dimension_numbers<[1], [0], [0], [1], [0, 0, 1, 1], [], []>} : vector<32x720xbf16>, vector<720x80xbf16>, vector<32x80xf32> -> vector<32x80xf32>
    %187 = vector.extract_strided_slice %182 {offsets = [0, 0], sizes = [1, 80], strides = [1, 1]} : vector<2x80xf32> to vector<1x80xf32>
    %188 = vector.broadcast %187 : vector<1x80xf32> to vector<32x80xf32>
    %189 = arith.mulf %186, %188 : vector<32x80xf32>
    %190 = vector.extract_strided_slice %182 {offsets = [1, 0], sizes = [1, 80], strides = [1, 1]} : vector<2x80xf32> to vector<1x80xf32>
    %191 = vector.broadcast %190 : vector<1x80xf32> to vector<32x80xf32>
    %192 = arith.addf %189, %191 : vector<32x80xf32>
    %cst_113 = arith.constant 0.000000e+00 : f32
    %193 = vector.broadcast %cst_113 : f32 to vector<32x80xf32>
    %194 = arith.maximumf %192, %193 : vector<32x80xf32>
    %c0_114 = arith.constant 0 : index
    %c0_115 = arith.constant 0 : index
    %195 = vector.load %arg28[%c0_114, %c0_115] : memref<80x10xf32, #tpu.memory_space<vmem>>, vector<80x10xf32>
    %cst_116 = arith.constant dense<0.000000e+00> : vector<32x10xf32>
    %196 = tpu.matmul %194, %195, %cst_116 {dimension_numbers = #tpu.dot_dimension_numbers<[1], [0], [0], [1], [0, 0, 1, 1], [], []>} : vector<32x80xf32>, vector<80x10xf32>, vector<32x10xf32> -> vector<32x10xf32>
    %197 = vector.extract_strided_slice %183 {offsets = [0, 0], sizes = [1, 10], strides = [1, 1]} : vector<2x10xf32> to vector<1x10xf32>
    %198 = vector.broadcast %197 : vector<1x10xf32> to vector<32x10xf32>
    %199 = arith.mulf %196, %198 : vector<32x10xf32>
    %200 = vector.extract_strided_slice %183 {offsets = [1, 0], sizes = [1, 10], strides = [1, 1]} : vector<2x10xf32> to vector<1x10xf32>
    %201 = vector.broadcast %200 : vector<1x10xf32> to vector<32x10xf32>
    %202 = arith.addf %199, %201 : vector<32x10xf32>
    %cst_117 = arith.constant 0.000000e+00 : f32
    %203 = vector.broadcast %cst_117 : f32 to vector<32x10xf32>
    %204 = arith.maximumf %202, %203 : vector<32x10xf32>
    %cst_118 = arith.constant dense<0.000000e+00> : vector<2x10xf32>
    %205 = tpu.matmul %0, %204, %cst_118 {dimension_numbers = #tpu.dot_dimension_numbers<[1], [0], [0], [1], [0, 0, 1, 1], [], []>} : vector<2x32xf32>, vector<32x10xf32>, vector<2x10xf32> -> vector<2x10xf32>
    %206 = arith.addf %181, %205 : vector<2x10xf32>
    %c0_119 = arith.constant 0 : index
    %c0_120 = arith.constant 0 : index
    %207 = vector.load %arg32[%c0_119, %c0_120] : memref<2x10xf32, #tpu.memory_space<vmem>>, vector<2x10xf32>
    %208 = vector.extract_strided_slice %207 {offsets = [0, 0], sizes = [1, 10], strides = [1, 1]} : vector<2x10xf32> to vector<1x10xf32>
    %209 = vector.broadcast %208 : vector<1x10xf32> to vector<2x10xf32>
    %210 = arith.mulf %206, %209 : vector<2x10xf32>
    %211 = vector.extract_strided_slice %207 {offsets = [1, 0], sizes = [1, 10], strides = [1, 1]} : vector<2x10xf32> to vector<1x10xf32>
    %212 = vector.broadcast %211 : vector<1x10xf32> to vector<2x10xf32>
    %213 = arith.addf %210, %212 : vector<2x10xf32>
    %c0_121 = arith.constant 0 : index
    %c0_122 = arith.constant 0 : index
    %214 = vector.load %arg33[%c0_121, %c0_122] : memref<10x100xf32, #tpu.memory_space<vmem>>, vector<10x100xf32>
    %cst_123 = arith.constant dense<0.000000e+00> : vector<2x100xf32>
    %215 = tpu.matmul %213, %214, %cst_123 {dimension_numbers = #tpu.dot_dimension_numbers<[1], [0], [0], [1], [0, 0, 1, 1], [], []>} : vector<2x10xf32>, vector<10x100xf32>, vector<2x100xf32> -> vector<2x100xf32>
    %c0_124 = arith.constant 0 : index
    %c0_125 = arith.constant 0 : index
    %216 = vector.load %arg34[%c0_124, %c0_125] : memref<1x100xf32, #tpu.memory_space<vmem>>, vector<1x100xf32>
    %217 = vector.broadcast %216 : vector<1x100xf32> to vector<2x100xf32>
    %218 = arith.addf %215, %217 : vector<2x100xf32>
    %cst_126 = arith.constant 0.000000e+00 : f32
    %219 = vector.broadcast %cst_126 : f32 to vector<2x100xf32>
    %220 = arith.maximumf %218, %219 : vector<2x100xf32>
    %c0_127 = arith.constant 0 : index
    %c0_128 = arith.constant 0 : index
    %221 = vector.load %arg35[%c0_127, %c0_128] : memref<100x2xf32, #tpu.memory_space<vmem>>, vector<100x2xf32>
    %cst_129 = arith.constant dense<0.000000e+00> : vector<2x2xf32>
    %222 = tpu.matmul %220, %221, %cst_129 {dimension_numbers = #tpu.dot_dimension_numbers<[1], [0], [0], [1], [0, 0, 1, 1], [], []>} : vector<2x100xf32>, vector<100x2xf32>, vector<2x2xf32> -> vector<2x2xf32>
    %c0_130 = arith.constant 0 : index
    %c0_131 = arith.constant 0 : index
    %223 = vector.load %arg36[%c0_130, %c0_131] : memref<1x2xf32, #tpu.memory_space<vmem>>, vector<1x2xf32>
    %224 = vector.broadcast %223 : vector<1x2xf32> to vector<2x2xf32>
    %225 = arith.addf %222, %224 : vector<2x2xf32>
    %c0_132 = arith.constant 0 : index
    %c0_133 = arith.constant 0 : index
    %226 = vector.load %arg37[%c0_132, %c0_133] : memref<2x2xf32, #tpu.memory_space<vmem>>, vector<2x2xf32>
    tpu.vector_store %arg37[%c0_132, %c0_133], %225 {strides = array<i32>} : memref<2x2xf32, #tpu.memory_space<vmem>>, vector<2x2xf32>,
    return
  }
}

</mosaic_0001>

<llo_original>
// kernel: mshcnn_forward.1
$region0: #{mshcnn_forward.1}
  #allocation0 [shape = 'u32[]', space=smem, size = 0x4, offset = 0x4, fixed_abs, tag = 'smem constant byte address 0x4 - core index']
  #allocation1 [shape = 'u32[144,128]{1,0:T(1,128)}', space=vmem, size = 0x12000, scoped, tag = 'internal scratch']
  %s0 = inlined_call_operand.smem [shape: u32[38], index: -1, kind: input, shape index: {}]
  %s1 = sld [smem:[%s0]]
  %s2 = scalar_lea.smem %s0, 1
  %s3 = sld [smem:[%s2]]
  %s4 = scalar_lea.smem %s0, 2
  %s5 = sld [smem:[%s4]]
  %s6 = scalar_lea.smem %s0, 3
  %s7 = sld [smem:[%s6]]
  %s8 = scalar_lea.smem %s0, 4
  %s9 = sld [smem:[%s8]]
  %s10 = scalar_lea.smem %s0, 5
  %s11 = sld [smem:[%s10]]
  %s12 = scalar_lea.smem %s0, 6
  %s13 = sld [smem:[%s12]]
  %s14 = scalar_lea.smem %s0, 7
  %s15 = sld [smem:[%s14]]
  %s16 = scalar_lea.smem %s0, 8
  %s17 = sld [smem:[%s16]]
  %s18 = scalar_lea.smem %s0, 9
  %s19 = sld [smem:[%s18]]
  %s20 = scalar_lea.smem %s0, 10
  %s21 = sld [smem:[%s20]]
  %s22 = scalar_lea.smem %s0, 11
  %s23 = sld [smem:[%s22]]
  %s24 = scalar_lea.smem %s0, 12
  %s25 = sld [smem:[%s24]]
  %s26 = scalar_lea.smem %s0, 13
  %s27 = sld [smem:[%s26]]
  %s28 = scalar_lea.smem %s0, 14
  %s29 = sld [smem:[%s28]]
  %s30 = scalar_lea.smem %s0, 15
  %s31 = sld [smem:[%s30]]
  %s32 = scalar_lea.smem %s0, 16
  %s33 = sld [smem:[%s32]]
  %s34 = scalar_lea.smem %s0, 17
  %s35 = sld [smem:[%s34]]
  %s36 = scalar_lea.smem %s0, 18
  %s37 = sld [smem:[%s36]]
  %s38 = scalar_lea.smem %s0, 19
  %s39 = sld [smem:[%s38]]
  %s40 = scalar_lea.smem %s0, 20
  %s41 = sld [smem:[%s40]]
  %s42 = scalar_lea.smem %s0, 21
  %s43 = sld [smem:[%s42]]
  %s44 = scalar_lea.smem %s0, 22
  %s45 = sld [smem:[%s44]]
  %s46 = scalar_lea.smem %s0, 23
  %s47 = sld [smem:[%s46]]
  %s48 = scalar_lea.smem %s0, 24
  %s49 = sld [smem:[%s48]]
  %s50 = scalar_lea.smem %s0, 25
  %s51 = sld [smem:[%s50]]
  %s52 = scalar_lea.smem %s0, 26
  %s53 = sld [smem:[%s52]]
  %s54 = scalar_lea.smem %s0, 27
  %s55 = sld [smem:[%s54]]
  %s56 = scalar_lea.smem %s0, 28
  %s57 = sld [smem:[%s56]]
  %s58 = scalar_lea.smem %s0, 29
  %s59 = sld [smem:[%s58]]
  %s60 = scalar_lea.smem %s0, 30
  %s61 = sld [smem:[%s60]]
  %s62 = scalar_lea.smem %s0, 31
  %s63 = sld [smem:[%s62]]
  %s64 = scalar_lea.smem %s0, 32
  %s65 = sld [smem:[%s64]]
  %s66 = scalar_lea.smem %s0, 33
  %s67 = sld [smem:[%s66]]
  %s68 = scalar_lea.smem %s0, 34
  %s69 = sld [smem:[%s68]]
  %s70 = scalar_lea.smem %s0, 35
  %s71 = sld [smem:[%s70]]
  %s72 = scalar_lea.smem %s0, 36
  %s73 = sld [smem:[%s72]]
  %s74 = scalar_lea.smem %s0, 37
  %s75 = sld [smem:[%s74]]
  %s76 = sld [smem:[#allocation0]]
  $region158: #{mshcnn_forward.1} parent=0
    _
  %s78 = ssub.s32 1, %s76
  %s79 = scalar_select 0, %s78, %s76
  $region1: #{mshcnn_forward.1} parent=0
    #allocation2 [shape = 'u8[1024]{0}', space=vmem, size = 0x400, scoped, tag = 'output window, operand 0, single buffered']
    #allocation3 [shape = 's32[1]{0}', space=sflag, size = 0x4, scoped, tag = 'scoped memory for mshcnn_forward.1']
    %80 = vsyncpa [#allocation3], 0
    // Predicated region
    $region2: #{mshcnn_forward.1} parent=1 // pred_check
      _
    $region3: #{mshcnn_forward.1} parent=1 // pred_check_branch
      %82 = sbr.rel (0) target = $region5
    $region4: #{mshcnn_forward.1} parent=1 // pred_region
      _
    $region5: #{mshcnn_forward.1} parent=1 // pred_fallthru
      _
    // Predicated region
    $region6: #{mshcnn_forward.1} parent=1 // pred_check
      _
    $region7: #{mshcnn_forward.1} parent=1 // pred_check_branch
      %84 = sbr.rel (0) target = $region9
    $region8: #{mshcnn_forward.1} parent=1 // pred_region
      _
    $region9: #{mshcnn_forward.1} parent=1 // pred_fallthru
      _
    // Predicated region
    $region10: #{mshcnn_forward.1} parent=1 // pred_check
      _
    $region11: #{mshcnn_forward.1} parent=1 // pred_check_branch
      %86 = sbr.rel (0) target = $region13
    $region12: #{mshcnn_forward.1} parent=1 // pred_region
      _
    $region13: #{mshcnn_forward.1} parent=1 // pred_fallthru
      _
    // Predicated region
    $region14: #{mshcnn_forward.1} parent=1 // pred_check
      _
    $region15: #{mshcnn_forward.1} parent=1 // pred_check_branch
      %88 = sbr.rel (0) target = $region17
    $region16: #{mshcnn_forward.1} parent=1 // pred_region
      _
    $region17: #{mshcnn_forward.1} parent=1 // pred_fallthru
      _
    // Predicated region
    $region18: #{mshcnn_forward.1} parent=1 // pred_check
      _
    $region19: #{mshcnn_forward.1} parent=1 // pred_check_branch
      %90 = sbr.rel (0) target = $region21
    $region20: #{mshcnn_forward.1} parent=1 // pred_region
      _
    $region21: #{mshcnn_forward.1} parent=1 // pred_fallthru
      _
    // Predicated region
    $region22: #{mshcnn_forward.1} parent=1 // pred_check
      _
    $region23: #{mshcnn_forward.1} parent=1 // pred_check_branch
      %92 = sbr.rel (0) target = $region25
    $region24: #{mshcnn_forward.1} parent=1 // pred_region
      _
    $region25: #{mshcnn_forward.1} parent=1 // pred_fallthru
      _
    // Predicated region
    $region26: #{mshcnn_forward.1} parent=1 // pred_check
      _
    $region27: #{mshcnn_forward.1} parent=1 // pred_check_branch
      %94 = sbr.rel (0) target = $region29
    $region28: #{mshcnn_forward.1} parent=1 // pred_region
      _
    $region29: #{mshcnn_forward.1} parent=1 // pred_fallthru
      _
    // Predicated region
    $region30: #{mshcnn_forward.1} parent=1 // pred_check
      _
    $region31: #{mshcnn_forward.1} parent=1 // pred_check_branch
      %96 = sbr.rel (0) target = $region33
    $region32: #{mshcnn_forward.1} parent=1 // pred_region
      _
    $region33: #{mshcnn_forward.1} parent=1 // pred_fallthru
      _
    // Predicated region
    $region34: #{mshcnn_forward.1} parent=1 // pred_check
      _
    $region35: #{mshcnn_forward.1} parent=1 // pred_check_branch
      %98 = sbr.rel (0) target = $region37
    $region36: #{mshcnn_forward.1} parent=1 // pred_region
      _
    $region37: #{mshcnn_forward.1} parent=1 // pred_fallthru
      _
    // Predicated region
    $region38: #{mshcnn_forward.1} parent=1 // pred_check
      _
    $region39: #{mshcnn_forward.1} parent=1 // pred_check_branch
      %100 = sbr.rel (0) target = $region41
    $region40: #{mshcnn_forward.1} parent=1 // pred_region
      _
    $region41: #{mshcnn_forward.1} parent=1 // pred_fallthru
      _
    // Predicated region
    $region42: #{mshcnn_forward.1} parent=1 // pred_check
      _
    $region43: #{mshcnn_forward.1} parent=1 // pred_check_branch
      %102 = sbr.rel (0) target = $region45
    $region44: #{mshcnn_forward.1} parent=1 // pred_region
      _
    $region45: #{mshcnn_forward.1} parent=1 // pred_fallthru
      _
    // Predicated region
    $region46: #{mshcnn_forward.1} parent=1 // pred_check
      _
    $region47: #{mshcnn_forward.1} parent=1 // pred_check_branch
      %104 = sbr.rel (0) target = $region49
    $region48: #{mshcnn_forward.1} parent=1 // pred_region
      _
    $region49: #{mshcnn_forward.1} parent=1 // pred_fallthru
      _
    // Predicated region
    $region50: #{mshcnn_forward.1} parent=1 // pred_check
      _
    $region51: #{mshcnn_forward.1} parent=1 // pred_check_branch
      %106 = sbr.rel (0) target = $region53
    $region52: #{mshcnn_forward.1} parent=1 // pred_region
      _
    $region53: #{mshcnn_forward.1} parent=1 // pred_fallthru
      _
    // Predicated region
    $region54: #{mshcnn_forward.1} parent=1 // pred_check
      _
    $region55: #{mshcnn_forward.1} parent=1 // pred_check_branch
      %108 = sbr.rel (0) target = $region57
    $region56: #{mshcnn_forward.1} parent=1 // pred_region
      _
    $region57: #{mshcnn_forward.1} parent=1 // pred_fallthru
      _
    // Predicated region
    $region58: #{mshcnn_forward.1} parent=1 // pred_check
      _
    $region59: #{mshcnn_forward.1} parent=1 // pred_check_branch
      %110 = sbr.rel (0) target = $region61
    $region60: #{mshcnn_forward.1} parent=1 // pred_region
      _
    $region61: #{mshcnn_forward.1} parent=1 // pred_fallthru
      _
    // Predicated region
    $region62: #{mshcnn_forward.1} parent=1 // pred_check
      _
    $region63: #{mshcnn_forward.1} parent=1 // pred_check_branch
      %112 = sbr.rel (0) target = $region65
    $region64: #{mshcnn_forward.1} parent=1 // pred_region
      _
    $region65: #{mshcnn_forward.1} parent=1 // pred_fallthru
      _
    // Predicated region
    $region66: #{mshcnn_forward.1} parent=1 // pred_check
      _
    $region67: #{mshcnn_forward.1} parent=1 // pred_check_branch
      %114 = sbr.rel (0) target = $region69
    $region68: #{mshcnn_forward.1} parent=1 // pred_region
      _
    $region69: #{mshcnn_forward.1} parent=1 // pred_fallthru
      _
    // Predicated region
    $region70: #{mshcnn_forward.1} parent=1 // pred_check
      _
    $region71: #{mshcnn_forward.1} parent=1 // pred_check_branch
      %116 = sbr.rel (0) target = $region73
    $region72: #{mshcnn_forward.1} parent=1 // pred_region
      _
    $region73: #{mshcnn_forward.1} parent=1 // pred_fallthru
      _
    // Predicated region
    $region74: #{mshcnn_forward.1} parent=1 // pred_check
      _
    $region75: #{mshcnn_forward.1} parent=1 // pred_check_branch
      %118 = sbr.rel (0) target = $region77
    $region76: #{mshcnn_forward.1} parent=1 // pred_region
      _
    $region77: #{mshcnn_forward.1} parent=1 // pred_fallthru
      _
    // Predicated region
    $region78: #{mshcnn_forward.1} parent=1 // pred_check
      _
    $region79: #{mshcnn_forward.1} parent=1 // pred_check_branch
      %120 = sbr.rel (0) target = $region81
    $region80: #{mshcnn_forward.1} parent=1 // pred_region
      _
    $region81: #{mshcnn_forward.1} parent=1 // pred_fallthru
      _
    // Predicated region
    $region82: #{mshcnn_forward.1} parent=1 // pred_check
      _
    $region83: #{mshcnn_forward.1} parent=1 // pred_check_branch
      %122 = sbr.rel (0) target = $region85
    $region84: #{mshcnn_forward.1} parent=1 // pred_region
      _
    $region85: #{mshcnn_forward.1} parent=1 // pred_fallthru
      _
    // Predicated region
    $region86: #{mshcnn_forward.1} parent=1 // pred_check
      _
    $region87: #{mshcnn_forward.1} parent=1 // pred_check_branch
      %124 = sbr.rel (0) target = $region89
    $region88: #{mshcnn_forward.1} parent=1 // pred_region
      _
    $region89: #{mshcnn_forward.1} parent=1 // pred_fallthru
      _
    // Predicated region
    $region90: #{mshcnn_forward.1} parent=1 // pred_check
      _
    $region91: #{mshcnn_forward.1} parent=1 // pred_check_branch
      %126 = sbr.rel (0) target = $region93
    $region92: #{mshcnn_forward.1} parent=1 // pred_region
      _
    $region93: #{mshcnn_forward.1} parent=1 // pred_fallthru
      _
    // Predicated region
    $region94: #{mshcnn_forward.1} parent=1 // pred_check
      _
    $region95: #{mshcnn_forward.1} parent=1 // pred_check_branch
      %128 = sbr.rel (0) target = $region97
    $region96: #{mshcnn_forward.1} parent=1 // pred_region
      _
    $region97: #{mshcnn_forward.1} parent=1 // pred_fallthru
      _
    // Predicated region
    $region98: #{mshcnn_forward.1} parent=1 // pred_check
      _
    $region99: #{mshcnn_forward.1} parent=1 // pred_check_branch
      %130 = sbr.rel (0) target = $region101
    $region100: #{mshcnn_forward.1} parent=1 // pred_region
      _
    $region101: #{mshcnn_forward.1} parent=1 // pred_fallthru
      _
    // Predicated region
    $region102: #{mshcnn_forward.1} parent=1 // pred_check
      _
    $region103: #{mshcnn_forward.1} parent=1 // pred_check_branch
      %132 = sbr.rel (0) target = $region105
    $region104: #{mshcnn_forward.1} parent=1 // pred_region
      _
    $region105: #{mshcnn_forward.1} parent=1 // pred_fallthru
      _
    // Predicated region
    $region106: #{mshcnn_forward.1} parent=1 // pred_check
      _
    $region107: #{mshcnn_forward.1} parent=1 // pred_check_branch
      %134 = sbr.rel (0) target = $region109
    $region108: #{mshcnn_forward.1} parent=1 // pred_region
      _
    $region109: #{mshcnn_forward.1} parent=1 // pred_fallthru
      _
    // Predicated region
    $region110: #{mshcnn_forward.1} parent=1 // pred_check
      _
    $region111: #{mshcnn_forward.1} parent=1 // pred_check_branch
      %136 = sbr.rel (0) target = $region113
    $region112: #{mshcnn_forward.1} parent=1 // pred_region
      _
    $region113: #{mshcnn_forward.1} parent=1 // pred_fallthru
      _
    // Predicated region
    $region114: #{mshcnn_forward.1} parent=1 // pred_check
      _
    $region115: #{mshcnn_forward.1} parent=1 // pred_check_branch
      %138 = sbr.rel (0) target = $region117
    $region116: #{mshcnn_forward.1} parent=1 // pred_region
      _
    $region117: #{mshcnn_forward.1} parent=1 // pred_fallthru
      _
    // Predicated region
    $region118: #{mshcnn_forward.1} parent=1 // pred_check
      _
    $region119: #{mshcnn_forward.1} parent=1 // pred_check_branch
      %140 = sbr.rel (0) target = $region121
    $region120: #{mshcnn_forward.1} parent=1 // pred_region
      _
    $region121: #{mshcnn_forward.1} parent=1 // pred_fallthru
      _
    // Predicated region
    $region122: #{mshcnn_forward.1} parent=1 // pred_check
      _
    $region123: #{mshcnn_forward.1} parent=1 // pred_check_branch
      %142 = sbr.rel (0) target = $region125
    $region124: #{mshcnn_forward.1} parent=1 // pred_region
      _
    $region125: #{mshcnn_forward.1} parent=1 // pred_fallthru
      _
    // Predicated region
    $region126: #{mshcnn_forward.1} parent=1 // pred_check
      _
    $region127: #{mshcnn_forward.1} parent=1 // pred_check_branch
      %144 = sbr.rel (0) target = $region129
    $region128: #{mshcnn_forward.1} parent=1 // pred_region
      _
    $region129: #{mshcnn_forward.1} parent=1 // pred_fallthru
      _
    // Predicated region
    $region130: #{mshcnn_forward.1} parent=1 // pred_check
      _
    $region131: #{mshcnn_forward.1} parent=1 // pred_check_branch
      %146 = sbr.rel (0) target = $region133
    $region132: #{mshcnn_forward.1} parent=1 // pred_region
      _
    $region133: #{mshcnn_forward.1} parent=1 // pred_fallthru
      _
    // Predicated region
    $region134: #{mshcnn_forward.1} parent=1 // pred_check
      _
    $region135: #{mshcnn_forward.1} parent=1 // pred_check_branch
      %148 = sbr.rel (0) target = $region137
    $region136: #{mshcnn_forward.1} parent=1 // pred_region
      _
    $region137: #{mshcnn_forward.1} parent=1 // pred_fallthru
      _
    // Predicated region
    $region138: #{mshcnn_forward.1} parent=1 // pred_check
      _
    $region139: #{mshcnn_forward.1} parent=1 // pred_check_branch
      %150 = sbr.rel (0) target = $region141
    $region140: #{mshcnn_forward.1} parent=1 // pred_region
      _
    $region141: #{mshcnn_forward.1} parent=1 // pred_fallthru
      _
    // Predicated region
    $region142: #{mshcnn_forward.1} parent=1 // pred_check
      _
    $region143: #{mshcnn_forward.1} parent=1 // pred_check_branch
      %152 = sbr.rel (0) target = $region145
    $region144: #{mshcnn_forward.1} parent=1 // pred_region
      _
    $region145: #{mshcnn_forward.1} parent=1 // pred_fallthru
      _
    // Predicated region
    $region146: #{mshcnn_forward.1} parent=1 // pred_check
      _
    $region147: #{mshcnn_forward.1} parent=1 // pred_check_branch
      %154 = sbr.rel (0) target = $region149
    $region148: #{mshcnn_forward.1} parent=1 // pred_region
      _
    $region149: #{mshcnn_forward.1} parent=1 // pred_fallthru
      _
    %v156 = vld [vmem:[%s61] sm:$0x3]
    %v157 = vld [vmem:[%s63] sm:$0xff]
    %v158 = vld [vmem:[%s63 + $0x8] sm:$0xff]
    %v159 = vld [vmem:[%s63 + $0x10] sm:$0xff]
    %v160 = vld [vmem:[%s63 + $0x18] sm:$0xff]
    %v161 = vld [vmem:[%s5] sm:$0x3]
    %v162 = vld [vmem:[%s9] sm:$0x3]
    %v163 = vld [vmem:[%s1] sm:$0xff]
    %v164 = vld [vmem:[%s1 + $0x8] sm:$0xf]
    %v165 = vld [vmem:[%s1 + $0xc] sm:$0xff]
    %v166 = vld [vmem:[%s1 + $0x14] sm:$0xf]
    %v167 = vld [vmem:[%s1 + $0x18] sm:$0xff]
    %v168 = vld [vmem:[%s1 + $0x20] sm:$0xf]
    %v169 = vld [vmem:[%s1 + $0x24] sm:$0xff]
    %v170 = vld [vmem:[%s1 + $0x2c] sm:$0xf]
    %v171 = vld [vmem:[%s3] sm:$0xf]
    %v172 = vld [vmem:[%s3 + $0x4] sm:$0xf]
    %v173 = vld [vmem:[%s3 + $0x8] sm:$0xf]
    %v174 = vld [vmem:[%s3 + $0xc] sm:$0xf]
    %v175 = vld [vmem:[%s3 + $0x10] sm:$0xf]
    %v176 = vld [vmem:[%s3 + $0x14] sm:$0xf]
    %v177 = vld [vmem:[%s3 + $0x18] sm:$0xf]
    %v178 = vld [vmem:[%s3 + $0x1c] sm:$0xf]
    %v179 = vld [vmem:[%s3 + $0x20] sm:$0xf]
    %v180 = vld [vmem:[%s3 + $0x24] sm:$0xf]
    %v181 = vld [vmem:[%s3 + $0x28] sm:$0xf]
    %v182 = vld [vmem:[%s3 + $0x2c] sm:$0xf]
    %v183 = vld [vmem:[%s3 + $0x30] sm:$0xf]
    %v184 = vld [vmem:[%s3 + $0x34] sm:$0xf]
    %v185 = vld [vmem:[%s3 + $0x38] sm:$0xf]
    %v186 = vld [vmem:[%s3 + $0x3c] sm:$0xf]
    %v187 = vld [vmem:[%s3 + $0x40] sm:$0xf]
    %v188 = vld [vmem:[%s3 + $0x44] sm:$0xf]
    %v189 = vld [vmem:[%s3 + $0x48] sm:$0xf]
    %v190 = vld [vmem:[%s3 + $0x4c] sm:$0xf]
    %v191 = vld [vmem:[%s3 + $0x50] sm:$0xf]
    %v192 = vld [vmem:[%s3 + $0x54] sm:$0xf]
    %v193 = vld [vmem:[%s3 + $0x58] sm:$0xf]
    %v194 = vld [vmem:[%s3 + $0x5c] sm:$0xf]
    %v195 = vld [vmem:[%s3 + $0x60] sm:$0xf]
    %v196 = vld [vmem:[%s3 + $0x64] sm:$0xf]
    %v197 = vld [vmem:[%s3 + $0x68] sm:$0xf]
    %v198 = vld [vmem:[%s3 + $0x6c] sm:$0xf]
    %v199 = vld [vmem:[%s3 + $0x70] sm:$0xf]
    %v200 = vld [vmem:[%s3 + $0x74] sm:$0xf]
    %v201 = vld [vmem:[%s3 + $0x78] sm:$0xf]
    %v202 = vld [vmem:[%s3 + $0x7c] sm:$0xf]
    %v203 = vld [vmem:[%s3 + $0x80] sm:$0xf]
    %v204 = vld [vmem:[%s3 + $0x84] sm:$0xf]
    %v205 = vld [vmem:[%s3 + $0x88] sm:$0xf]
    %v206 = vld [vmem:[%s3 + $0x8c] sm:$0xf]
    %v207 = vld [vmem:[%s3 + $0x90] sm:$0xf]
    %v208 = vld [vmem:[%s3 + $0x94] sm:$0xf]
    %v209 = vld [vmem:[%s3 + $0x98] sm:$0xf]
    %v210 = vld [vmem:[%s3 + $0x9c] sm:$0xf]
    %v219 = vunpack.c.l.b16 %v163
    %v220 = vunpack.c.h.b16 %v163
    %v221 = vunpack.c.l.b16 %v164
    %v222 = vunpack.c.l.b16 %v165
    %v223 = vunpack.c.h.b16 %v165
    %v224 = vunpack.c.l.b16 %v166
    %v225 = vunpack.c.l.b16 %v167
    %v226 = vunpack.c.h.b16 %v167
    %v227 = vunpack.c.l.b16 %v168
    %v228 = vunpack.c.l.b16 %v169
    %v229 = vunpack.c.h.b16 %v169
    %v230 = vunpack.c.l.b16 %v170
    %v231 = vpack.c.b16 %v222, %v219
    %v232 = vpack.c.b16 %v223, %v220
    %v233 = vpack.c.b16 %v224, %v221
    %v234 = vpack.c.b16 %v228, %v225
    %v235 = vpack.c.b16 %v229, %v226
    %v236 = vpack.c.b16 %v230, %v227
    %v281 = vunpack.c.l.b16 %v171
    %v282 = vunpack.c.l.b16 %v172
    %v283 = vunpack.c.l.b16 %v173
    %v284 = vunpack.c.l.b16 %v174
    %v285 = vunpack.c.l.b16 %v175
    %v286 = vunpack.c.l.b16 %v176
    %v287 = vunpack.c.l.b16 %v177
    %v288 = vunpack.c.l.b16 %v178
    %v289 = vunpack.c.l.b16 %v179
    %v290 = vunpack.c.l.b16 %v180
    %v291 = vunpack.c.l.b16 %v181
    %v292 = vunpack.c.l.b16 %v182
    %v293 = vunpack.c.l.b16 %v183
    %v294 = vunpack.c.l.b16 %v184
    %v295 = vunpack.c.l.b16 %v185
    %v296 = vunpack.c.l.b16 %v186
    %v297 = vunpack.c.l.b16 %v187
    %v298 = vunpack.c.l.b16 %v188
    %v299 = vunpack.c.l.b16 %v189
    %v300 = vunpack.c.l.b16 %v190
    %v301 = vunpack.c.l.b16 %v191
    %v302 = vunpack.c.l.b16 %v192
    %v303 = vunpack.c.l.b16 %v193
    %v304 = vunpack.c.l.b16 %v194
    %v305 = vunpack.c.l.b16 %v195
    %v306 = vunpack.c.l.b16 %v196
    %v307 = vunpack.c.l.b16 %v197
    %v308 = vunpack.c.l.b16 %v198
    %v309 = vunpack.c.l.b16 %v199
    %v310 = vunpack.c.l.b16 %v200
    %v311 = vunpack.c.l.b16 %v201
    %v312 = vunpack.c.l.b16 %v202
    %v313 = vunpack.c.l.b16 %v203
    %v314 = vunpack.c.l.b16 %v204
    %v315 = vunpack.c.l.b16 %v205
    %v316 = vunpack.c.l.b16 %v206
    %v317 = vunpack.c.l.b16 %v207
    %v318 = vunpack.c.l.b16 %v208
    %v319 = vunpack.c.l.b16 %v209
    %v320 = vunpack.c.l.b16 %v210
    %v321 = vpack.c.b16 %v282, %v281
    %v322 = vpack.c.b16 %v284, %v283
    %v323 = vpack.c.b16 %v286, %v285
    %v324 = vpack.c.b16 %v288, %v287
    %v325 = vpack.c.b16 %v290, %v289
    %v326 = vpack.c.b16 %v292, %v291
    %v327 = vpack.c.b16 %v294, %v293
    %v328 = vpack.c.b16 %v296, %v295
    %v329 = vpack.c.b16 %v298, %v297
    %v330 = vpack.c.b16 %v300, %v299
    %v331 = vpack.c.b16 %v302, %v301
    %v332 = vpack.c.b16 %v304, %v303
    %v333 = vpack.c.b16 %v306, %v305
    %v334 = vpack.c.b16 %v308, %v307
    %v335 = vpack.c.b16 %v310, %v309
    %v336 = vpack.c.b16 %v312, %v311
    %v337 = vpack.c.b16 %v314, %v313
    %v338 = vpack.c.b16 %v316, %v315
    %v339 = vpack.c.b16 %v318, %v317
    %v340 = vpack.c.b16 %v320, %v319
    %vm361 = vcmask 523264
    %v363 = vsel %vm361, %v233, 0
    %v366 = vsel %vm361, %v236, 0
    %368 = vmatprep.subr.bf16.mxu0 0
    %369 = vmatpush1.bf16.msra.mxu0 %v321
    %370 = vmatprep.subr.bf16.mxu0 0
    %371 = vmatpush1.bf16.msra.mxu0 %v322
    %372 = vmatprep.subr.bf16.mxu0 0
    %373 = vmatpush1.bf16.msra.mxu0 %v323
    %374 = vmatprep.subr.bf16.mxu0 0
    %375 = vmatpush1.bf16.msra.mxu0 %v324
    %376 = vmatprep.subr.bf16.mxu0 0
    %377 = vmatpush1.bf16.msra.mxu0 %v325
    %378 = vmatprep.subr.bf16.mxu0 0
    %379 = vmatpush1.bf16.msra.mxu0 %v326
    %380 = vmatprep.subr.bf16.mxu0 0
    %381 = vmatpush1.bf16.msra.mxu0 %v327
    %382 = vmatprep.subr.bf16.mxu0 0
    %383 = vmatpush1.bf16.msra.mxu0 %v328
    %384 = vmatprep.subr.bf16.mxu0 0
    %385 = vmatpush1.bf16.msra.mxu0 %v329
    %386 = vmatprep.subr.bf16.mxu0 0
    %387 = vmatpush1.bf16.msra.mxu0 %v330
    %388 = vmatprep.subr.bf16.mxu0 0
    %389 = vmatpush1.bf16.msra.mxu0 %v331
    %390 = vmatprep.subr.bf16.mxu0 0
    %391 = vmatpush1.bf16.msra.mxu0 %v332
    %392 = vmatprep.subr.bf16.mxu0 0
    %393 = vmatpush1.bf16.msra.mxu0 %v333
    %394 = vmatprep.subr.bf16.mxu0 0
    %395 = vmatpush1.bf16.msra.mxu0 %v334
    %396 = vmatprep.subr.bf16.mxu0 0
    %397 = vmatpush1.bf16.msra.mxu0 %v335
    %398 = vmatprep.subr.bf16.mxu0 0
    %399 = vmatpush1.bf16.msra.mxu0 %v336
    %400 = vmatprep.mubr.bf16.mxu0 %v232
    %401 = vmatmul.mubr.bf16.gmra.mrb[0].mxu0 %v231
    %v402 = vpop.f32.mrb[0].mxu0
    %v403 = vadd.f32 0.0, %v402
    %v404 = vpop.f32.mrb[0].mxu0
    %v405 = vpop.f32.mrb[0].mxu0
    %v406 = vadd.f32 0.0, %v405
    %v407 = vpop.f32.mrb[0].mxu0
    %408 = vmatprep.mubr.bf16.mxu0 %v235
    %409 = vmatmul.mubr.bf16.gmra.mrb[0].mxu0 %v234
    %v410 = vpop.f32.mrb[0].mxu0
    %v411 = vadd.f32 0.0, %v410
    %v412 = vpop.f32.mrb[0].mxu0
    %v413 = vpop.f32.mrb[0].mxu0
    %v414 = vadd.f32 0.0, %v413
    %v415 = vpop.f32.mrb[0].mxu0
    %416 = vdwg.mxu0
    %417 = vmatprep.subr.bf16.mxu0 0
    %418 = vmatpush1.bf16.msra.mxu0 %v337
    %419 = vmatprep.subr.bf16.mxu0 0
    %420 = vmatpush1.bf16.msra.mxu0 %v338
    %421 = vmatprep.subr.bf16.mxu0 0
    %422 = vmatpush1.bf16.msra.mxu0 %v339
    %423 = vmatprep.subr.bf16.mxu0 0
    %424 = vmatpush1.bf16.msra.mxu0 %v340
    %425 = vmatprep.subr.bf16.mxu0 0
    %426 = vmatpush1.bf16.msra.mxu0 0
    %427 = vmatprep.subr.bf16.mxu0 0
    %428 = vmatpush1.bf16.msra.mxu0 0
    %429 = vmatprep.subr.bf16.mxu0 0
    %430 = vmatpush1.bf16.msra.mxu0 0
    %431 = vmatprep.subr.bf16.mxu0 0
    %432 = vmatpush1.bf16.msra.mxu0 0
    %433 = vmatprep.subr.bf16.mxu0 0
    %434 = vmatpush1.bf16.msra.mxu0 0
    %435 = vmatprep.subr.bf16.mxu0 0
    %436 = vmatpush1.bf16.msra.mxu0 0
    %437 = vmatprep.subr.bf16.mxu0 0
    %438 = vmatpush1.bf16.msra.mxu0 0
    %439 = vmatprep.subr.bf16.mxu0 0
    %440 = vmatpush1.bf16.msra.mxu0 0
    %441 = vmatprep.subr.bf16.mxu0 0
    %442 = vmatpush1.bf16.msra.mxu0 0
    %443 = vmatprep.subr.bf16.mxu0 0
    %444 = vmatpush1.bf16.msra.mxu0 0
    %445 = vmatprep.subr.bf16.mxu0 0
    %446 = vmatpush1.bf16.msra.mxu0 0
    %447 = vmatprep.subr.bf16.mxu0 0
    %448 = vmatpush1.bf16.msra.mxu0 0
    %449 = vmatprep.mubr.bf16.mxu0 0
    %450 = vmatmul.mubr.bf16.gmra.mrb[0].mxu0 %v363
    %v451 = vpop.f32.mrb[0].mxu0
    %v452 = vadd.f32 %v403, %v451
    %v453 = vpop.f32.mrb[0].mxu0
    %v454 = vpop.f32.mrb[0].mxu0
    %v455 = vadd.f32 %v406, %v454
    %v456 = vpop.f32.mrb[0].mxu0
    %457 = vmatprep.mubr.bf16.mxu0 0
    %458 = vmatmul.mubr.bf16.gmra.mrb[0].mxu0 %v366
    %v459 = vpop.f32.mrb[0].mxu0
    %v460 = vadd.f32 %v411, %v459
    %v461 = vpop.f32.mrb[0].mxu0
    %v462 = vpop.f32.mrb[0].mxu0
    %v463 = vadd.f32 %v414, %v462
    %v464 = vpop.f32.mrb[0].mxu0
    %465 = vdwg.mxu0
    %v466 = vlaneseq
    %v467 = vshrl.u32 %v466, 7
    %v468 = vsub.s32 0, %v467
    %v469 = vrot.slane %v161, %v468
    %v470 = vmul.f32 %v452, %v469
    %v471 = vmul.f32 %v455, %v469
    %v472 = vmul.f32 %v460, %v469
    %v473 = vmul.f32 %v463, %v469
    %v474 = vlaneseq
    %v475 = vshrl.u32 %v474, 7
    %v476 = vsub.s32 1, %v475
    %v477 = vrot.slane %v161, %v476
    %v478 = vadd.f32 %v470, %v477
    %v479 = vadd.f32 %v471, %v477
    %v480 = vadd.f32 %v472, %v477
    %v481 = vadd.f32 %v473, %v477
    %v482 = vmax.f32 %v478, 0.0
    %v483 = vmax.f32 %v479, 0.0
    %v484 = vmax.f32 %v480, 0.0
    %v485 = vmax.f32 %v481, 0.0
    %v486 = vld [vmem:[%s7] sm:$0xff]
    %v487 = vld [vmem:[%s7 + $0x8] sm:$0x3]
    %vm488 = vcmask 80896
    %v490 = vsel %vm488, %v482, 0
    %v493 = vsel %vm488, %v483, 0
    %v496 = vsel %vm488, %v484, 0
    %v499 = vsel %vm488, %v485, 0
    %vm501 = vcmask 1041408
    %v503 = vsel %vm501, %v487, 0
    %505 = vmatprep.subr.mxu0 0.0
    %506 = vmatpush1.msra.mxu0 %v486
    %507 = vmatprep.subr.mxu0 0.0
    %508 = vmatpush1.msra.mxu0 %v503
    %509 = vmatprep.subr.mxu0 0.0
    %510 = vmatpush1.msra.mxu0 0.0
    %511 = vmatprep.subr.mxu0 0.0
    %512 = vmatpush1.msra.mxu0 0.0
    %513 = vmatprep.subr.mxu0 0.0
    %514 = vmatpush1.msra.mxu0 0.0
    %515 = vmatprep.subr.mxu0 0.0
    %516 = vmatpush1.msra.mxu0 0.0
    %517 = vmatprep.subr.mxu0 0.0
    %518 = vmatpush1.msra.mxu0 0.0
    %519 = vmatprep.subr.mxu0 0.0
    %520 = vmatpush1.msra.mxu0 0.0
    %521 = vmatprep.subr.mxu0 0.0
    %522 = vmatpush1.msra.mxu0 0.0
    %523 = vmatprep.subr.mxu0 0.0
    %524 = vmatpush1.msra.mxu0 0.0
    %525 = vmatprep.subr.mxu0 0.0
    %526 = vmatpush1.msra.mxu0 0.0
    %527 = vmatprep.subr.mxu0 0.0
    %528 = vmatpush1.msra.mxu0 0.0
    %529 = vmatprep.subr.mxu0 0.0
    %530 = vmatpush1.msra.mxu0 0.0
    %531 = vmatprep.subr.mxu0 0.0
    %532 = vmatpush1.msra.mxu0 0.0
    %533 = vmatprep.subr.mxu0 0.0
    %534 = vmatpush1.msra.mxu0 0.0
    %535 = vmatprep.subr.mxu0 0.0
    %536 = vmatpush1.msra.mxu0 0.0
    %537 = vmatprep.subr.mxu0 0.0
    %538 = vmatpush1.msra.mxu0 0.0
    %539 = vmatprep.subr.mxu0 0.0
    %540 = vmatpush1.msra.mxu0 0.0
    %541 = vmatprep.subr.mxu0 0.0
    %542 = vmatpush1.msra.mxu0 0.0
    %543 = vmatprep.subr.mxu0 0.0
    %544 = vmatpush1.msra.mxu0 0.0
    %545 = vmatprep.subr.mxu0 0.0
    %546 = vmatpush1.msra.mxu0 0.0
    %547 = vmatprep.subr.mxu0 0.0
    %548 = vmatpush1.msra.mxu0 0.0
    %549 = vmatprep.subr.mxu0 0.0
    %550 = vmatpush1.msra.mxu0 0.0
    %551 = vmatprep.subr.mxu0 0.0
    %552 = vmatpush1.msra.mxu0 0.0
    %553 = vmatprep.subr.mxu0 0.0
    %554 = vmatpush1.msra.mxu0 0.0
    %555 = vmatprep.subr.mxu0 0.0
    %556 = vmatpush1.msra.mxu0 0.0
    %557 = vmatprep.subr.mxu0 0.0
    %558 = vmatpush1.msra.mxu0 0.0
    %559 = vmatprep.subr.mxu0 0.0
    %560 = vmatpush1.msra.mxu0 0.0
    %561 = vmatprep.subr.mxu0 0.0
    %562 = vmatpush1.msra.mxu0 0.0
    %563 = vmatprep.subr.mxu0 0.0
    %564 = vmatpush1.msra.mxu0 0.0
    %565 = vmatprep.subr.mxu0 0.0
    %566 = vmatpush1.msra.mxu0 0.0
    %567 = vmatprep.subr.mxu0 0.0
    %568 = vmatpush1.msra.mxu0 0.0
    %569 = vmatprep.mubr.f32.mxu0 0.0
    %570 = vmatmul.mubr.f32.gmra.mrb[0].mxu0 %v490
    %v571 = vpop.f32.mrb[0].mxu0
    %v572 = vadd.f32 0.0, %v571
    %v573 = vpop.f32.mrb[0].mxu0
    %574 = vmatprep.mubr.f32.mxu0 0.0
    %575 = vmatmul.mubr.f32.gmra.mrb[0].mxu0 %v493
    %v576 = vpop.f32.mrb[0].mxu0
    %v577 = vadd.f32 0.0, %v576
    %v578 = vpop.f32.mrb[0].mxu0
    %579 = vmatprep.mubr.f32.mxu0 0.0
    %580 = vmatmul.mubr.f32.gmra.mrb[0].mxu0 %v496
    %v581 = vpop.f32.mrb[0].mxu0
    %v582 = vadd.f32 0.0, %v581
    %v583 = vpop.f32.mrb[0].mxu0
    %584 = vmatprep.mubr.f32.mxu0 0.0
    %585 = vmatmul.mubr.f32.gmra.mrb[0].mxu0 %v499
    %v586 = vpop.f32.mrb[0].mxu0
    %v587 = vadd.f32 0.0, %v586
    %v588 = vpop.f32.mrb[0].mxu0
    %589 = vdwg.mxu0
    %s590 = scalar_lea.vmem %s7, 16
    %v591 = vld [vmem:[%s590] sm:$0xff]
    %v592 = vld [vmem:[%s590 + $0x8] sm:$0x3]
    %v594 = vsel %vm501, %v592, 0
    %596 = vmatprep.subr.mxu0 0.0
    %597 = vmatpush1.msra.mxu0 %v591
    %598 = vmatprep.subr.mxu0 0.0
    %599 = vmatpush1.msra.mxu0 %v594
    %600 = vmatprep.subr.mxu0 0.0
    %601 = vmatpush1.msra.mxu0 0.0
    %602 = vmatprep.subr.mxu0 0.0
    %603 = vmatpush1.msra.mxu0 0.0
    %604 = vmatprep.subr.mxu0 0.0
    %605 = vmatpush1.msra.mxu0 0.0
    %606 = vmatprep.subr.mxu0 0.0
    %607 = vmatpush1.msra.mxu0 0.0
    %608 = vmatprep.subr.mxu0 0.0
    %609 = vmatpush1.msra.mxu0 0.0
    %610 = vmatprep.subr.mxu0 0.0
    %611 = vmatpush1.msra.mxu0 0.0
    %612 = vmatprep.subr.mxu0 0.0
    %613 = vmatpush1.msra.mxu0 0.0
    %614 = vmatprep.subr.mxu0 0.0
    %615 = vmatpush1.msra.mxu0 0.0
    %616 = vmatprep.subr.mxu0 0.0
    %617 = vmatpush1.msra.mxu0 0.0
    %618 = vmatprep.subr.mxu0 0.0
    %619 = vmatpush1.msra.mxu0 0.0
    %620 = vmatprep.subr.mxu0 0.0
    %621 = vmatpush1.msra.mxu0 0.0
    %622 = vmatprep.subr.mxu0 0.0
    %623 = vmatpush1.msra.mxu0 0.0
    %624 = vmatprep.subr.mxu0 0.0
    %625 = vmatpush1.msra.mxu0 0.0
    %626 = vmatprep.subr.mxu0 0.0
    %627 = vmatpush1.msra.mxu0 0.0
    %628 = vmatprep.subr.mxu0 0.0
    %629 = vmatpush1.msra.mxu0 0.0
    %630 = vmatprep.subr.mxu0 0.0
    %631 = vmatpush1.msra.mxu0 0.0
    %632 = vmatprep.subr.mxu0 0.0
    %633 = vmatpush1.msra.mxu0 0.0
    %634 = vmatprep.subr.mxu0 0.0
    %635 = vmatpush1.msra.mxu0 0.0
    %636 = vmatprep.subr.mxu0 0.0
    %637 = vmatpush1.msra.mxu0 0.0
    %638 = vmatprep.subr.mxu0 0.0
    %639 = vmatpush1.msra.mxu0 0.0
    %640 = vmatprep.subr.mxu0 0.0
    %641 = vmatpush1.msra.mxu0 0.0
    %642 = vmatprep.subr.mxu0 0.0
    %643 = vmatpush1.msra.mxu0 0.0
    %644 = vmatprep.subr.mxu0 0.0
    %645 = vmatpush1.msra.mxu0 0.0
    %646 = vmatprep.subr.mxu0 0.0
    %647 = vmatpush1.msra.mxu0 0.0
    %648 = vmatprep.subr.mxu0 0.0
    %649 = vmatpush1.msra.mxu0 0.0
    %650 = vmatprep.subr.mxu0 0.0
    %651 = vmatpush1.msra.mxu0 0.0
    %652 = vmatprep.subr.mxu0 0.0
    %653 = vmatpush1.msra.mxu0 0.0
    %654 = vmatprep.subr.mxu0 0.0
    %655 = vmatpush1.msra.mxu0 0.0
    %656 = vmatprep.subr.mxu0 0.0
    %657 = vmatpush1.msra.mxu0 0.0
    %658 = vmatprep.subr.mxu0 0.0
    %659 = vmatpush1.msra.mxu0 0.0
    %660 = vmatprep.mubr.f32.mxu0 0.0
    %661 = vmatmul.mubr.f32.gmra.mrb[0].mxu0 %v490
    %v662 = vpop.f32.mrb[0].mxu0
    %v663 = vadd.f32 0.0, %v662
    %v664 = vpop.f32.mrb[0].mxu0
    %665 = vmatprep.mubr.f32.mxu0 0.0
    %666 = vmatmul.mubr.f32.gmra.mrb[0].mxu0 %v493
    %v667 = vpop.f32.mrb[0].mxu0
    %v668 = vadd.f32 0.0, %v667
    %v669 = vpop.f32.mrb[0].mxu0
    %670 = vmatprep.mubr.f32.mxu0 0.0
    %671 = vmatmul.mubr.f32.gmra.mrb[0].mxu0 %v496
    %v672 = vpop.f32.mrb[0].mxu0
    %v673 = vadd.f32 0.0, %v672
    %v674 = vpop.f32.mrb[0].mxu0
    %675 = vmatprep.mubr.f32.mxu0 0.0
    %676 = vmatmul.mubr.f32.gmra.mrb[0].mxu0 %v499
    %v677 = vpop.f32.mrb[0].mxu0
    %v678 = vadd.f32 0.0, %v677
    %v679 = vpop.f32.mrb[0].mxu0
    %680 = vdwg.mxu0
    %s681 = scalar_lea.vmem %s7, 32
    %v682 = vld [vmem:[%s681] sm:$0xff]
    %v683 = vld [vmem:[%s681 + $0x8] sm:$0x3]
    %v685 = vsel %vm501, %v683, 0
    %687 = vmatprep.subr.mxu0 0.0
    %688 = vmatpush1.msra.mxu0 %v682
    %689 = vmatprep.subr.mxu0 0.0
    %690 = vmatpush1.msra.mxu0 %v685
    %691 = vmatprep.subr.mxu0 0.0
    %692 = vmatpush1.msra.mxu0 0.0
    %693 = vmatprep.subr.mxu0 0.0
    %694 = vmatpush1.msra.mxu0 0.0
    %695 = vmatprep.subr.mxu0 0.0
    %696 = vmatpush1.msra.mxu0 0.0
    %697 = vmatprep.subr.mxu0 0.0
    %698 = vmatpush1.msra.mxu0 0.0
    %699 = vmatprep.subr.mxu0 0.0
    %700 = vmatpush1.msra.mxu0 0.0
    %701 = vmatprep.subr.mxu0 0.0
    %702 = vmatpush1.msra.mxu0 0.0
    %703 = vmatprep.subr.mxu0 0.0
    %704 = vmatpush1.msra.mxu0 0.0
    %705 = vmatprep.subr.mxu0 0.0
    %706 = vmatpush1.msra.mxu0 0.0
    %707 = vmatprep.subr.mxu0 0.0
    %708 = vmatpush1.msra.mxu0 0.0
    %709 = vmatprep.subr.mxu0 0.0
    %710 = vmatpush1.msra.mxu0 0.0
    %711 = vmatprep.subr.mxu0 0.0
    %712 = vmatpush1.msra.mxu0 0.0
    %713 = vmatprep.subr.mxu0 0.0
    %714 = vmatpush1.msra.mxu0 0.0
    %715 = vmatprep.subr.mxu0 0.0
    %716 = vmatpush1.msra.mxu0 0.0
    %717 = vmatprep.subr.mxu0 0.0
    %718 = vmatpush1.msra.mxu0 0.0
    %719 = vmatprep.subr.mxu0 0.0
    %720 = vmatpush1.msra.mxu0 0.0
    %721 = vmatprep.subr.mxu0 0.0
    %722 = vmatpush1.msra.mxu0 0.0
    %723 = vmatprep.subr.mxu0 0.0
    %724 = vmatpush1.msra.mxu0 0.0
    %725 = vmatprep.subr.mxu0 0.0
    %726 = vmatpush1.msra.mxu0 0.0
    %727 = vmatprep.subr.mxu0 0.0
    %728 = vmatpush1.msra.mxu0 0.0
    %729 = vmatprep.subr.mxu0 0.0
    %730 = vmatpush1.msra.mxu0 0.0
    %731 = vmatprep.subr.mxu0 0.0
    %732 = vmatpush1.msra.mxu0 0.0
    %733 = vmatprep.subr.mxu0 0.0
    %734 = vmatpush1.msra.mxu0 0.0
    %735 = vmatprep.subr.mxu0 0.0
    %736 = vmatpush1.msra.mxu0 0.0
    %737 = vmatprep.subr.mxu0 0.0
    %738 = vmatpush1.msra.mxu0 0.0
    %739 = vmatprep.subr.mxu0 0.0
    %740 = vmatpush1.msra.mxu0 0.0
    %741 = vmatprep.subr.mxu0 0.0
    %742 = vmatpush1.msra.mxu0 0.0
    %743 = vmatprep.subr.mxu0 0.0
    %744 = vmatpush1.msra.mxu0 0.0
    %745 = vmatprep.subr.mxu0 0.0
    %746 = vmatpush1.msra.mxu0 0.0
    %747 = vmatprep.subr.mxu0 0.0
    %748 = vmatpush1.msra.mxu0 0.0
    %749 = vmatprep.subr.mxu0 0.0
    %750 = vmatpush1.msra.mxu0 0.0
    %751 = vmatprep.mubr.f32.mxu0 0.0
    %752 = vmatmul.mubr.f32.gmra.mrb[0].mxu0 %v490
    %v753 = vpop.f32.mrb[0].mxu0
    %v754 = vadd.f32 0.0, %v753
    %v755 = vpop.f32.mrb[0].mxu0
    %756 = vmatprep.mubr.f32.mxu0 0.0
    %757 = vmatmul.mubr.f32.gmra.mrb[0].mxu0 %v493
    %v758 = vpop.f32.mrb[0].mxu0
    %v759 = vadd.f32 0.0, %v758
    %v760 = vpop.f32.mrb[0].mxu0
    %761 = vmatprep.mubr.f32.mxu0 0.0
    %762 = vmatmul.mubr.f32.gmra.mrb[0].mxu0 %v496
    %v763 = vpop.f32.mrb[0].mxu0
    %v764 = vadd.f32 0.0, %v763
    %v765 = vpop.f32.mrb[0].mxu0
    %766 = vmatprep.mubr.f32.mxu0 0.0
    %767 = vmatmul.mubr.f32.gmra.mrb[0].mxu0 %v499
    %v768 = vpop.f32.mrb[0].mxu0
    %v769 = vadd.f32 0.0, %v768
    %v770 = vpop.f32.mrb[0].mxu0
    %771 = vdwg.mxu0
    %vm776 = vcmask 1040384
    %v777 = vrot.slane %v572, 7
    %v778 = vrot.slane %v577, 7
    %v779 = vsel %vm776, %v777, %v778
    %v780 = vrot.slane %v582, 7
    %v781 = vsel %vm776, %v778, %v780
    %v782 = vrot.slane %v587, 7
    %v783 = vsel %vm776, %v780, %v782
    %v788 = vsel %vm776, 0.0, %v777
    %790 = vset.pattern.permute.xlu0 0
    %791 = vperm.xlu0 %790, %v157
    %v792 = vpop.permute.xlu0 %791
    %795 = vset.pattern.permute.xlu0 0
    %796 = vperm.xlu0 %795, %v158
    %v797 = vpop.permute.xlu0 %796
    %800 = vset.pattern.permute.xlu0 0
    %801 = vperm.xlu0 %800, %v159
    %v802 = vpop.permute.xlu0 %801
    %805 = vset.pattern.permute.xlu0 0
    %806 = vperm.xlu0 %805, %v160
    %v807 = vpop.permute.xlu0 %806
    %v809 = vmul.f32 %v788, %v792
    %v810 = vmul.f32 %v779, %v797
    %v811 = vmul.f32 %v781, %v802
    %v812 = vmul.f32 %v783, %v807
    %vm817 = vcmask 1046528
    %v818 = vrot.slane %v754, 1
    %v819 = vrot.slane %v759, 1
    %v820 = vsel %vm817, %v818, %v819
    %v821 = vrot.slane %v764, 1
    %v822 = vsel %vm817, %v819, %v821
    %v823 = vrot.slane %v769, 1
    %v824 = vsel %vm817, %v821, %v823
    %v829 = vsel %vm817, %v823, 0.0
    %830 = vset.pattern.permute.xlu0 1
    %831 = vperm.xlu0 %830, %v157
    %v832 = vpop.permute.xlu0 %831
    %834 = vset.pattern.permute.xlu0 1
    %835 = vperm.xlu0 %834, %v158
    %v836 = vpop.permute.xlu0 %835
    %838 = vset.pattern.permute.xlu0 1
    %839 = vperm.xlu0 %838, %v159
    %v840 = vpop.permute.xlu0 %839
    %842 = vset.pattern.permute.xlu0 1
    %843 = vperm.xlu0 %842, %v160
    %v844 = vpop.permute.xlu0 %843
    %v846 = vmul.f32 %v820, %v832
    %v847 = vmul.f32 %v822, %v836
    %v848 = vmul.f32 %v824, %v840
    %v849 = vmul.f32 %v829, %v844
    %v850 = vadd.f32 %v809, %v663
    %v851 = vadd.f32 %v810, %v668
    %v852 = vadd.f32 %v811, %v673
    %v853 = vadd.f32 %v812, %v678
    %v854 = vadd.f32 %v850, %v846
    %v855 = vadd.f32 %v851, %v847
    %v856 = vadd.f32 %v852, %v848
    %v857 = vadd.f32 %v853, %v849
    %v858 = vlaneseq
    %v859 = vshrl.u32 %v858, 7
    %v860 = vsub.s32 0, %v859
    %v861 = vrot.slane %v162, %v860
    %v862 = vmul.f32 %v854, %v861
    %v863 = vmul.f32 %v855, %v861
    %v864 = vmul.f32 %v856, %v861
    %v865 = vmul.f32 %v857, %v861
    %v866 = vlaneseq
    %v867 = vshrl.u32 %v866, 7
    %v868 = vsub.s32 1, %v867
    %v869 = vrot.slane %v162, %v868
    %v870 = vadd.f32 %v862, %v869
    %v871 = vadd.f32 %v863, %v869
    %v872 = vadd.f32 %v864, %v869
    %v873 = vadd.f32 %v865, %v869
    %v874 = vmax.f32 %v870, 0.0
    %v875 = vmax.f32 %v871, 0.0
    %v876 = vmax.f32 %v872, 0.0
    %v877 = vmax.f32 %v873, 0.0
    %v878 = vld [vmem:[%s15] sm:$0x3]
    %v879 = vld [vmem:[%s19] sm:$0x3]
    %v880 = vld [vmem:[%s11] sm:$0xff]
    %v881 = vld [vmem:[%s11 + $0x8] sm:$0xff]
    %v882 = vld [vmem:[%s11 + $0x10] sm:$0xf]
    %v883 = vld [vmem:[%s11 + $0x14] sm:$0xff]
    %v884 = vld [vmem:[%s11 + $0x1c] sm:$0xff]
    %v885 = vld [vmem:[%s11 + $0x24] sm:$0xf]
    %v886 = vld [vmem:[%s11 + $0x28] sm:$0xff]
    %v887 = vld [vmem:[%s11 + $0x30] sm:$0xff]
    %v888 = vld [vmem:[%s11 + $0x38] sm:$0xf]
    %v889 = vld [vmem:[%s11 + $0x3c] sm:$0xff]
    %v890 = vld [vmem:[%s11 + $0x44] sm:$0xff]
    %v891 = vld [vmem:[%s11 + $0x4c] sm:$0xf]
    %v892 = vld [vmem:[%s13] sm:$0xf]
    %v893 = vld [vmem:[%s13 + $0x4] sm:$0xf]
    %v894 = vld [vmem:[%s13 + $0x8] sm:$0xf]
    %v895 = vld [vmem:[%s13 + $0xc] sm:$0xf]
    %v896 = vld [vmem:[%s13 + $0x10] sm:$0xf]
    %v897 = vld [vmem:[%s13 + $0x14] sm:$0xf]
    %v898 = vld [vmem:[%s13 + $0x18] sm:$0xf]
    %v899 = vld [vmem:[%s13 + $0x1c] sm:$0xf]
    %v900 = vld [vmem:[%s13 + $0x20] sm:$0xf]
    %v901 = vld [vmem:[%s13 + $0x24] sm:$0xf]
    %v902 = vld [vmem:[%s13 + $0x28] sm:$0xf]
    %v903 = vld [vmem:[%s13 + $0x2c] sm:$0xf]
    %v904 = vld [vmem:[%s13 + $0x30] sm:$0xf]
    %v905 = vld [vmem:[%s13 + $0x34] sm:$0xf]
    %v906 = vld [vmem:[%s13 + $0x38] sm:$0xf]
    %v907 = vld [vmem:[%s13 + $0x3c] sm:$0xf]
    %v908 = vld [vmem:[%s13 + $0x40] sm:$0xf]
    %v909 = vld [vmem:[%s13 + $0x44] sm:$0xf]
    %v910 = vld [vmem:[%s13 + $0x48] sm:$0xf]
    %v911 = vld [vmem:[%s13 + $0x4c] sm:$0xf]
    %v912 = vld [vmem:[%s13 + $0x50] sm:$0xf]
    %v913 = vld [vmem:[%s13 + $0x54] sm:$0xf]
    %v914 = vld [vmem:[%s13 + $0x58] sm:$0xf]
    %v915 = vld [vmem:[%s13 + $0x5c] sm:$0xf]
    %v916 = vld [vmem:[%s13 + $0x60] sm:$0xf]
    %v917 = vld [vmem:[%s13 + $0x64] sm:$0xf]
    %v918 = vld [vmem:[%s13 + $0x68] sm:$0xf]
    %v919 = vld [vmem:[%s13 + $0x6c] sm:$0xf]
    %v920 = vld [vmem:[%s13 + $0x70] sm:$0xf]
    %v921 = vld [vmem:[%s13 + $0x74] sm:$0xf]
    %v922 = vld [vmem:[%s13 + $0x78] sm:$0xf]
    %v923 = vld [vmem:[%s13 + $0x7c] sm:$0xf]
    %v924 = vld [vmem:[%s13 + $0x80] sm:$0xf]
    %v925 = vld [vmem:[%s13 + $0x84] sm:$0xf]
    %v926 = vld [vmem:[%s13 + $0x88] sm:$0xf]
    %v927 = vld [vmem:[%s13 + $0x8c] sm:$0xf]
    %v928 = vld [vmem:[%s13 + $0x90] sm:$0xf]
    %v929 = vld [vmem:[%s13 + $0x94] sm:$0xf]
    %v930 = vld [vmem:[%s13 + $0x98] sm:$0xf]
    %v931 = vld [vmem:[%s13 + $0x9c] sm:$0xf]
    %v932 = vld [vmem:[%s13 + $0xa0] sm:$0xf]
    %v933 = vld [vmem:[%s13 + $0xa4] sm:$0xf]
    %v934 = vld [vmem:[%s13 + $0xa8] sm:$0xf]
    %v935 = vld [vmem:[%s13 + $0xac] sm:$0xf]
    %v936 = vld [vmem:[%s13 + $0xb0] sm:$0xf]
    %v937 = vld [vmem:[%s13 + $0xb4] sm:$0xf]
    %v938 = vld [vmem:[%s13 + $0xb8] sm:$0xf]
    %v939 = vld [vmem:[%s13 + $0xbc] sm:$0xf]
    %v940 = vld [vmem:[%s13 + $0xc0] sm:$0xf]
    %v941 = vld [vmem:[%s13 + $0xc4] sm:$0xf]
    %v942 = vld [vmem:[%s13 + $0xc8] sm:$0xf]
    %v943 = vld [vmem:[%s13 + $0xcc] sm:$0xf]
    %v944 = vld [vmem:[%s13 + $0xd0] sm:$0xf]
    %v945 = vld [vmem:[%s13 + $0xd4] sm:$0xf]
    %v946 = vld [vmem:[%s13 + $0xd8] sm:$0xf]
    %v947 = vld [vmem:[%s13 + $0xdc] sm:$0xf]
    %v948 = vld [vmem:[%s13 + $0xe0] sm:$0xf]
    %v949 = vld [vmem:[%s13 + $0xe4] sm:$0xf]
    %v950 = vld [vmem:[%s13 + $0xe8] sm:$0xf]
    %v951 = vld [vmem:[%s13 + $0xec] sm:$0xf]
    %v952 = vld [vmem:[%s13 + $0xf0] sm:$0xf]
    %v953 = vld [vmem:[%s13 + $0xf4] sm:$0xf]
    %v954 = vld [vmem:[%s13 + $0xf8] sm:$0xf]
    %v955 = vld [vmem:[%s13 + $0xfc] sm:$0xf]
    %v956 = vld [vmem:[%s13 + $0x100] sm:$0xf]
    %v957 = vld [vmem:[%s13 + $0x104] sm:$0xf]
    %v958 = vld [vmem:[%s13 + $0x108] sm:$0xf]
    %v959 = vld [vmem:[%s13 + $0x10c] sm:$0xf]
    %v960 = vld [vmem:[%s13 + $0x110] sm:$0xf]
    %v961 = vld [vmem:[%s13 + $0x114] sm:$0xf]
    %v974 = vunpack.c.l.b16 %v880
    %v975 = vunpack.c.h.b16 %v880
    %v976 = vunpack.c.l.b16 %v881
    %v977 = vunpack.c.h.b16 %v881
    %v978 = vunpack.c.l.b16 %v882
    %v979 = vunpack.c.l.b16 %v883
    %v980 = vunpack.c.h.b16 %v883
    %v981 = vunpack.c.l.b16 %v884
    %v982 = vunpack.c.h.b16 %v884
    %v983 = vunpack.c.l.b16 %v885
    %v984 = vunpack.c.l.b16 %v886
    %v985 = vunpack.c.h.b16 %v886
    %v986 = vunpack.c.l.b16 %v887
    %v987 = vunpack.c.h.b16 %v887
    %v988 = vunpack.c.l.b16 %v888
    %v989 = vunpack.c.l.b16 %v889
    %v990 = vunpack.c.h.b16 %v889
    %v991 = vunpack.c.l.b16 %v890
    %v992 = vunpack.c.h.b16 %v890
    %v993 = vunpack.c.l.b16 %v891
    %v994 = vpack.c.b16 %v979, %v974
    %v995 = vpack.c.b16 %v980, %v975
    %v996 = vpack.c.b16 %v981, %v976
    %v997 = vpack.c.b16 %v982, %v977
    %v998 = vpack.c.b16 %v983, %v978
    %v999 = vpack.c.b16 %v989, %v984
    %v1000 = vpack.c.b16 %v990, %v985
    %v1001 = vpack.c.b16 %v991, %v986
    %v1002 = vpack.c.b16 %v992, %v987
    %v1003 = vpack.c.b16 %v993, %v988
    %v1082 = vunpack.c.l.b16 %v892
    %v1083 = vunpack.c.l.b16 %v893
    %v1084 = vunpack.c.l.b16 %v894
    %v1085 = vunpack.c.l.b16 %v895
    %v1086 = vunpack.c.l.b16 %v896
    %v1087 = vunpack.c.l.b16 %v897
    %v1088 = vunpack.c.l.b16 %v898
    %v1089 = vunpack.c.l.b16 %v899
    %v1090 = vunpack.c.l.b16 %v900
    %v1091 = vunpack.c.l.b16 %v901
    %v1092 = vunpack.c.l.b16 %v902
    %v1093 = vunpack.c.l.b16 %v903
    %v1094 = vunpack.c.l.b16 %v904
    %v1095 = vunpack.c.l.b16 %v905
    %v1096 = vunpack.c.l.b16 %v906
    %v1097 = vunpack.c.l.b16 %v907
    %v1098 = vunpack.c.l.b16 %v908
    %v1099 = vunpack.c.l.b16 %v909
    %v1100 = vunpack.c.l.b16 %v910
    %v1101 = vunpack.c.l.b16 %v911
    %v1102 = vunpack.c.l.b16 %v912
    %v1103 = vunpack.c.l.b16 %v913
    %v1104 = vunpack.c.l.b16 %v914
    %v1105 = vunpack.c.l.b16 %v915
    %v1106 = vunpack.c.l.b16 %v916
    %v1107 = vunpack.c.l.b16 %v917
    %v1108 = vunpack.c.l.b16 %v918
    %v1109 = vunpack.c.l.b16 %v919
    %v1110 = vunpack.c.l.b16 %v920
    %v1111 = vunpack.c.l.b16 %v921
    %v1112 = vunpack.c.l.b16 %v922
    %v1113 = vunpack.c.l.b16 %v923
    %v1114 = vunpack.c.l.b16 %v924
    %v1115 = vunpack.c.l.b16 %v925
    %v1116 = vunpack.c.l.b16 %v926
    %v1117 = vunpack.c.l.b16 %v927
    %v1118 = vunpack.c.l.b16 %v928
    %v1119 = vunpack.c.l.b16 %v929
    %v1120 = vunpack.c.l.b16 %v930
    %v1121 = vunpack.c.l.b16 %v931
    %v1122 = vunpack.c.l.b16 %v932
    %v1123 = vunpack.c.l.b16 %v933
    %v1124 = vunpack.c.l.b16 %v934
    %v1125 = vunpack.c.l.b16 %v935
    %v1126 = vunpack.c.l.b16 %v936
    %v1127 = vunpack.c.l.b16 %v937
    %v1128 = vunpack.c.l.b16 %v938
    %v1129 = vunpack.c.l.b16 %v939
    %v1130 = vunpack.c.l.b16 %v940
    %v1131 = vunpack.c.l.b16 %v941
    %v1132 = vunpack.c.l.b16 %v942
    %v1133 = vunpack.c.l.b16 %v943
    %v1134 = vunpack.c.l.b16 %v944
    %v1135 = vunpack.c.l.b16 %v945
    %v1136 = vunpack.c.l.b16 %v946
    %v1137 = vunpack.c.l.b16 %v947
    %v1138 = vunpack.c.l.b16 %v948
    %v1139 = vunpack.c.l.b16 %v949
    %v1140 = vunpack.c.l.b16 %v950
    %v1141 = vunpack.c.l.b16 %v951
    %v1142 = vunpack.c.l.b16 %v952
    %v1143 = vunpack.c.l.b16 %v953
    %v1144 = vunpack.c.l.b16 %v954
    %v1145 = vunpack.c.l.b16 %v955
    %v1146 = vunpack.c.l.b16 %v956
    %v1147 = vunpack.c.l.b16 %v957
    %v1148 = vunpack.c.l.b16 %v958
    %v1149 = vunpack.c.l.b16 %v959
    %v1150 = vunpack.c.l.b16 %v960
    %v1151 = vunpack.c.l.b16 %v961
    %v1152 = vpack.c.b16 %v1083, %v1082
    %v1153 = vpack.c.b16 %v1085, %v1084
    %v1154 = vpack.c.b16 %v1087, %v1086
    %v1155 = vpack.c.b16 %v1089, %v1088
    %v1156 = vpack.c.b16 %v1091, %v1090
    %v1157 = vpack.c.b16 %v1093, %v1092
    %v1158 = vpack.c.b16 %v1095, %v1094
    %v1159 = vpack.c.b16 %v1097, %v1096
    %v1160 = vpack.c.b16 %v1099, %v1098
    %v1161 = vpack.c.b16 %v1101, %v1100
    %v1162 = vpack.c.b16 %v1103, %v1102
    %v1163 = vpack.c.b16 %v1105, %v1104
    %v1164 = vpack.c.b16 %v1107, %v1106
    %v1165 = vpack.c.b16 %v1109, %v1108
    %v1166 = vpack.c.b16 %v1111, %v1110
    %v1167 = vpack.c.b16 %v1113, %v1112
    %v1168 = vpack.c.b16 %v1115, %v1114
    %v1169 = vpack.c.b16 %v1117, %v1116
    %v1170 = vpack.c.b16 %v1119, %v1118
    %v1171 = vpack.c.b16 %v1121, %v1120
    %v1172 = vpack.c.b16 %v1123, %v1122
    %v1173 = vpack.c.b16 %v1125, %v1124
    %v1174 = vpack.c.b16 %v1127, %v1126
    %v1175 = vpack.c.b16 %v1129, %v1128
    %v1176 = vpack.c.b16 %v1131, %v1130
    %v1177 = vpack.c.b16 %v1133, %v1132
    %v1178 = vpack.c.b16 %v1135, %v1134
    %v1179 = vpack.c.b16 %v1137, %v1136
    %v1180 = vpack.c.b16 %v1139, %v1138
    %v1181 = vpack.c.b16 %v1141, %v1140
    %v1182 = vpack.c.b16 %v1143, %v1142
    %v1183 = vpack.c.b16 %v1145, %v1144
    %v1184 = vpack.c.b16 %v1147, %v1146
    %v1185 = vpack.c.b16 %v1149, %v1148
    %v1186 = vpack.c.b16 %v1151, %v1150
    %vm1222 = vcmask 392192
    %v1224 = vsel %vm1222, %v998, 0
    %v1227 = vsel %vm1222, %v1003, 0
    %1229 = vmatprep.subr.bf16.mxu0 0
    %1230 = vmatpush1.bf16.msra.mxu0 %v1152
    %1231 = vmatprep.subr.bf16.mxu0 0
    %1232 = vmatpush1.bf16.msra.mxu0 %v1153
    %1233 = vmatprep.subr.bf16.mxu0 0
    %1234 = vmatpush1.bf16.msra.mxu0 %v1154
    %1235 = vmatprep.subr.bf16.mxu0 0
    %1236 = vmatpush1.bf16.msra.mxu0 %v1155
    %1237 = vmatprep.subr.bf16.mxu0 0
    %1238 = vmatpush1.bf16.msra.mxu0 %v1156
    %1239 = vmatprep.subr.bf16.mxu0 0
    %1240 = vmatpush1.bf16.msra.mxu0 %v1157
    %1241 = vmatprep.subr.bf16.mxu0 0
    %1242 = vmatpush1.bf16.msra.mxu0 %v1158
    %1243 = vmatprep.subr.bf16.mxu0 0
    %1244 = vmatpush1.bf16.msra.mxu0 %v1159
    %1245 = vmatprep.subr.bf16.mxu0 0
    %1246 = vmatpush1.bf16.msra.mxu0 %v1160
    %1247 = vmatprep.subr.bf16.mxu0 0
    %1248 = vmatpush1.bf16.msra.mxu0 %v1161
    %1249 = vmatprep.subr.bf16.mxu0 0
    %1250 = vmatpush1.bf16.msra.mxu0 %v1162
    %1251 = vmatprep.subr.bf16.mxu0 0
    %1252 = vmatpush1.bf16.msra.mxu0 %v1163
    %1253 = vmatprep.subr.bf16.mxu0 0
    %1254 = vmatpush1.bf16.msra.mxu0 %v1164
    %1255 = vmatprep.subr.bf16.mxu0 0
    %1256 = vmatpush1.bf16.msra.mxu0 %v1165
    %1257 = vmatprep.subr.bf16.mxu0 0
    %1258 = vmatpush1.bf16.msra.mxu0 %v1166
    %1259 = vmatprep.subr.bf16.mxu0 0
    %1260 = vmatpush1.bf16.msra.mxu0 %v1167
    %1261 = vmatprep.mubr.bf16.mxu0 %v995
    %1262 = vmatmul.mubr.bf16.gmra.mrb[0].mxu0 %v994
    %v1263 = vpop.f32.mrb[0].mxu0
    %v1264 = vadd.f32 0.0, %v1263
    %v1265 = vpop.f32.mrb[0].mxu0
    %v1266 = vpop.f32.mrb[0].mxu0
    %v1267 = vadd.f32 0.0, %v1266
    %v1268 = vpop.f32.mrb[0].mxu0
    %1269 = vmatprep.mubr.bf16.mxu0 %v1000
    %1270 = vmatmul.mubr.bf16.gmra.mrb[0].mxu0 %v999
    %v1271 = vpop.f32.mrb[0].mxu0
    %v1272 = vadd.f32 0.0, %v1271
    %v1273 = vpop.f32.mrb[0].mxu0
    %v1274 = vpop.f32.mrb[0].mxu0
    %v1275 = vadd.f32 0.0, %v1274
    %v1276 = vpop.f32.mrb[0].mxu0
    %1277 = vdwg.mxu0
    %1278 = vmatprep.subr.bf16.mxu0 0
    %1279 = vmatpush1.bf16.msra.mxu0 %v1168
    %1280 = vmatprep.subr.bf16.mxu0 0
    %1281 = vmatpush1.bf16.msra.mxu0 %v1169
    %1282 = vmatprep.subr.bf16.mxu0 0
    %1283 = vmatpush1.bf16.msra.mxu0 %v1170
    %1284 = vmatprep.subr.bf16.mxu0 0
    %1285 = vmatpush1.bf16.msra.mxu0 %v1171
    %1286 = vmatprep.subr.bf16.mxu0 0
    %1287 = vmatpush1.bf16.msra.mxu0 %v1172
    %1288 = vmatprep.subr.bf16.mxu0 0
    %1289 = vmatpush1.bf16.msra.mxu0 %v1173
    %1290 = vmatprep.subr.bf16.mxu0 0
    %1291 = vmatpush1.bf16.msra.mxu0 %v1174
    %1292 = vmatprep.subr.bf16.mxu0 0
    %1293 = vmatpush1.bf16.msra.mxu0 %v1175
    %1294 = vmatprep.subr.bf16.mxu0 0
    %1295 = vmatpush1.bf16.msra.mxu0 %v1176
    %1296 = vmatprep.subr.bf16.mxu0 0
    %1297 = vmatpush1.bf16.msra.mxu0 %v1177
    %1298 = vmatprep.subr.bf16.mxu0 0
    %1299 = vmatpush1.bf16.msra.mxu0 %v1178
    %1300 = vmatprep.subr.bf16.mxu0 0
    %1301 = vmatpush1.bf16.msra.mxu0 %v1179
    %1302 = vmatprep.subr.bf16.mxu0 0
    %1303 = vmatpush1.bf16.msra.mxu0 %v1180
    %1304 = vmatprep.subr.bf16.mxu0 0
    %1305 = vmatpush1.bf16.msra.mxu0 %v1181
    %1306 = vmatprep.subr.bf16.mxu0 0
    %1307 = vmatpush1.bf16.msra.mxu0 %v1182
    %1308 = vmatprep.subr.bf16.mxu0 0
    %1309 = vmatpush1.bf16.msra.mxu0 %v1183
    %1310 = vmatprep.mubr.bf16.mxu0 %v997
    %1311 = vmatmul.mubr.bf16.gmra.mrb[0].mxu0 %v996
    %v1312 = vpop.f32.mrb[0].mxu0
    %v1313 = vadd.f32 %v1264, %v1312
    %v1314 = vpop.f32.mrb[0].mxu0
    %v1315 = vpop.f32.mrb[0].mxu0
    %v1316 = vadd.f32 %v1267, %v1315
    %v1317 = vpop.f32.mrb[0].mxu0
    %1318 = vmatprep.mubr.bf16.mxu0 %v1002
    %1319 = vmatmul.mubr.bf16.gmra.mrb[0].mxu0 %v1001
    %v1320 = vpop.f32.mrb[0].mxu0
    %v1321 = vadd.f32 %v1272, %v1320
    %v1322 = vpop.f32.mrb[0].mxu0
    %v1323 = vpop.f32.mrb[0].mxu0
    %v1324 = vadd.f32 %v1275, %v1323
    %v1325 = vpop.f32.mrb[0].mxu0
    %1326 = vdwg.mxu0
    %1327 = vmatprep.subr.bf16.mxu0 0
    %1328 = vmatpush1.bf16.msra.mxu0 %v1184
    %1329 = vmatprep.subr.bf16.mxu0 0
    %1330 = vmatpush1.bf16.msra.mxu0 %v1185
    %1331 = vmatprep.subr.bf16.mxu0 0
    %1332 = vmatpush1.bf16.msra.mxu0 %v1186
    %1333 = vmatprep.subr.bf16.mxu0 0
    %1334 = vmatpush1.bf16.msra.mxu0 0
    %1335 = vmatprep.subr.bf16.mxu0 0
    %1336 = vmatpush1.bf16.msra.mxu0 0
    %1337 = vmatprep.subr.bf16.mxu0 0
    %1338 = vmatpush1.bf16.msra.mxu0 0
    %1339 = vmatprep.subr.bf16.mxu0 0
    %1340 = vmatpush1.bf16.msra.mxu0 0
    %1341 = vmatprep.subr.bf16.mxu0 0
    %1342 = vmatpush1.bf16.msra.mxu0 0
    %1343 = vmatprep.subr.bf16.mxu0 0
    %1344 = vmatpush1.bf16.msra.mxu0 0
    %1345 = vmatprep.subr.bf16.mxu0 0
    %1346 = vmatpush1.bf16.msra.mxu0 0
    %1347 = vmatprep.subr.bf16.mxu0 0
    %1348 = vmatpush1.bf16.msra.mxu0 0
    %1349 = vmatprep.subr.bf16.mxu0 0
    %1350 = vmatpush1.bf16.msra.mxu0 0
    %1351 = vmatprep.subr.bf16.mxu0 0
    %1352 = vmatpush1.bf16.msra.mxu0 0
    %1353 = vmatprep.subr.bf16.mxu0 0
    %1354 = vmatpush1.bf16.msra.mxu0 0
    %1355 = vmatprep.subr.bf16.mxu0 0
    %1356 = vmatpush1.bf16.msra.mxu0 0
    %1357 = vmatprep.subr.bf16.mxu0 0
    %1358 = vmatpush1.bf16.msra.mxu0 0
    %1359 = vmatprep.mubr.bf16.mxu0 0
    %1360 = vmatmul.mubr.bf16.gmra.mrb[0].mxu0 %v1224
    %v1361 = vpop.f32.mrb[0].mxu0
    %v1362 = vadd.f32 %v1313, %v1361
    %v1363 = vpop.f32.mrb[0].mxu0
    %v1364 = vpop.f32.mrb[0].mxu0
    %v1365 = vadd.f32 %v1316, %v1364
    %v1366 = vpop.f32.mrb[0].mxu0
    %1367 = vmatprep.mubr.bf16.mxu0 0
    %1368 = vmatmul.mubr.bf16.gmra.mrb[0].mxu0 %v1227
    %v1369 = vpop.f32.mrb[0].mxu0
    %v1370 = vadd.f32 %v1321, %v1369
    %v1371 = vpop.f32.mrb[0].mxu0
    %v1372 = vpop.f32.mrb[0].mxu0
    %v1373 = vadd.f32 %v1324, %v1372
    %v1374 = vpop.f32.mrb[0].mxu0
    %1375 = vdwg.mxu0
    %v1376 = vlaneseq
    %v1377 = vshrl.u32 %v1376, 7
    %v1378 = vsub.s32 0, %v1377
    %v1379 = vrot.slane %v878, %v1378
    %v1380 = vmul.f32 %v1362, %v1379
    %v1381 = vmul.f32 %v1365, %v1379
    %v1382 = vmul.f32 %v1370, %v1379
    %v1383 = vmul.f32 %v1373, %v1379
    %v1384 = vlaneseq
    %v1385 = vshrl.u32 %v1384, 7
    %v1386 = vsub.s32 1, %v1385
    %v1387 = vrot.slane %v878, %v1386
    %v1388 = vadd.f32 %v1380, %v1387
    %v1389 = vadd.f32 %v1381, %v1387
    %v1390 = vadd.f32 %v1382, %v1387
    %v1391 = vadd.f32 %v1383, %v1387
    %v1392 = vmax.f32 %v1388, 0.0
    %v1393 = vmax.f32 %v1389, 0.0
    %v1394 = vmax.f32 %v1390, 0.0
    %v1395 = vmax.f32 %v1391, 0.0
    %v1396 = vld [vmem:[%s17] sm:$0xff]
    %v1397 = vld [vmem:[%s17 + $0x8] sm:$0x3]
    %v1399 = vsel %vm488, %v1392, 0
    %v1402 = vsel %vm488, %v1393, 0
    %v1405 = vsel %vm488, %v1394, 0
    %v1408 = vsel %vm488, %v1395, 0
    %v1411 = vsel %vm501, %v1397, 0
    %1413 = vmatprep.subr.mxu0 0.0
    %1414 = vmatpush1.msra.mxu0 %v1396
    %1415 = vmatprep.subr.mxu0 0.0
    %1416 = vmatpush1.msra.mxu0 %v1411
    %1417 = vmatprep.subr.mxu0 0.0
    %1418 = vmatpush1.msra.mxu0 0.0
    %1419 = vmatprep.subr.mxu0 0.0
    %1420 = vmatpush1.msra.mxu0 0.0
    %1421 = vmatprep.subr.mxu0 0.0
    %1422 = vmatpush1.msra.mxu0 0.0
    %1423 = vmatprep.subr.mxu0 0.0
    %1424 = vmatpush1.msra.mxu0 0.0
    %1425 = vmatprep.subr.mxu0 0.0
    %1426 = vmatpush1.msra.mxu0 0.0
    %1427 = vmatprep.subr.mxu0 0.0
    %1428 = vmatpush1.msra.mxu0 0.0
    %1429 = vmatprep.subr.mxu0 0.0
    %1430 = vmatpush1.msra.mxu0 0.0
    %1431 = vmatprep.subr.mxu0 0.0
    %1432 = vmatpush1.msra.mxu0 0.0
    %1433 = vmatprep.subr.mxu0 0.0
    %1434 = vmatpush1.msra.mxu0 0.0
    %1435 = vmatprep.subr.mxu0 0.0
    %1436 = vmatpush1.msra.mxu0 0.0
    %1437 = vmatprep.subr.mxu0 0.0
    %1438 = vmatpush1.msra.mxu0 0.0
    %1439 = vmatprep.subr.mxu0 0.0
    %1440 = vmatpush1.msra.mxu0 0.0
    %1441 = vmatprep.subr.mxu0 0.0
    %1442 = vmatpush1.msra.mxu0 0.0
    %1443 = vmatprep.subr.mxu0 0.0
    %1444 = vmatpush1.msra.mxu0 0.0
    %1445 = vmatprep.subr.mxu0 0.0
    %1446 = vmatpush1.msra.mxu0 0.0
    %1447 = vmatprep.subr.mxu0 0.0
    %1448 = vmatpush1.msra.mxu0 0.0
    %1449 = vmatprep.subr.mxu0 0.0
    %1450 = vmatpush1.msra.mxu0 0.0
    %1451 = vmatprep.subr.mxu0 0.0
    %1452 = vmatpush1.msra.mxu0 0.0
    %1453 = vmatprep.subr.mxu0 0.0
    %1454 = vmatpush1.msra.mxu0 0.0
    %1455 = vmatprep.subr.mxu0 0.0
    %1456 = vmatpush1.msra.mxu0 0.0
    %1457 = vmatprep.subr.mxu0 0.0
    %1458 = vmatpush1.msra.mxu0 0.0
    %1459 = vmatprep.subr.mxu0 0.0
    %1460 = vmatpush1.msra.mxu0 0.0
    %1461 = vmatprep.subr.mxu0 0.0
    %1462 = vmatpush1.msra.mxu0 0.0
    %1463 = vmatprep.subr.mxu0 0.0
    %1464 = vmatpush1.msra.mxu0 0.0
    %1465 = vmatprep.subr.mxu0 0.0
    %1466 = vmatpush1.msra.mxu0 0.0
    %1467 = vmatprep.subr.mxu0 0.0
    %1468 = vmatpush1.msra.mxu0 0.0
    %1469 = vmatprep.subr.mxu0 0.0
    %1470 = vmatpush1.msra.mxu0 0.0
    %1471 = vmatprep.subr.mxu0 0.0
    %1472 = vmatpush1.msra.mxu0 0.0
    %1473 = vmatprep.subr.mxu0 0.0
    %1474 = vmatpush1.msra.mxu0 0.0
    %1475 = vmatprep.subr.mxu0 0.0
    %1476 = vmatpush1.msra.mxu0 0.0
    %1477 = vmatprep.mubr.f32.mxu0 0.0
    %1478 = vmatmul.mubr.f32.gmra.mrb[0].mxu0 %v1399
    %v1479 = vpop.f32.mrb[0].mxu0
    %v1480 = vadd.f32 0.0, %v1479
    %v1481 = vpop.f32.mrb[0].mxu0
    %1482 = vmatprep.mubr.f32.mxu0 0.0
    %1483 = vmatmul.mubr.f32.gmra.mrb[0].mxu0 %v1402
    %v1484 = vpop.f32.mrb[0].mxu0
    %v1485 = vadd.f32 0.0, %v1484
    %v1486 = vpop.f32.mrb[0].mxu0
    %1487 = vmatprep.mubr.f32.mxu0 0.0
    %1488 = vmatmul.mubr.f32.gmra.mrb[0].mxu0 %v1405
    %v1489 = vpop.f32.mrb[0].mxu0
    %v1490 = vadd.f32 0.0, %v1489
    %v1491 = vpop.f32.mrb[0].mxu0
    %1492 = vmatprep.mubr.f32.mxu0 0.0
    %1493 = vmatmul.mubr.f32.gmra.mrb[0].mxu0 %v1408
    %v1494 = vpop.f32.mrb[0].mxu0
    %v1495 = vadd.f32 0.0, %v1494
    %v1496 = vpop.f32.mrb[0].mxu0
    %1497 = vdwg.mxu0
    %s1498 = scalar_lea.vmem %s17, 16
    %v1499 = vld [vmem:[%s1498] sm:$0xff]
    %v1500 = vld [vmem:[%s1498 + $0x8] sm:$0x3]
    %v1502 = vsel %vm501, %v1500, 0
    %1504 = vmatprep.subr.mxu0 0.0
    %1505 = vmatpush1.msra.mxu0 %v1499
    %1506 = vmatprep.subr.mxu0 0.0
    %1507 = vmatpush1.msra.mxu0 %v1502
    %1508 = vmatprep.subr.mxu0 0.0
    %1509 = vmatpush1.msra.mxu0 0.0
    %1510 = vmatprep.subr.mxu0 0.0
    %1511 = vmatpush1.msra.mxu0 0.0
    %1512 = vmatprep.subr.mxu0 0.0
    %1513 = vmatpush1.msra.mxu0 0.0
    %1514 = vmatprep.subr.mxu0 0.0
    %1515 = vmatpush1.msra.mxu0 0.0
    %1516 = vmatprep.subr.mxu0 0.0
    %1517 = vmatpush1.msra.mxu0 0.0
    %1518 = vmatprep.subr.mxu0 0.0
    %1519 = vmatpush1.msra.mxu0 0.0
    %1520 = vmatprep.subr.mxu0 0.0
    %1521 = vmatpush1.msra.mxu0 0.0
    %1522 = vmatprep.subr.mxu0 0.0
    %1523 = vmatpush1.msra.mxu0 0.0
    %1524 = vmatprep.subr.mxu0 0.0
    %1525 = vmatpush1.msra.mxu0 0.0
    %1526 = vmatprep.subr.mxu0 0.0
    %1527 = vmatpush1.msra.mxu0 0.0
    %1528 = vmatprep.subr.mxu0 0.0
    %1529 = vmatpush1.msra.mxu0 0.0
    %1530 = vmatprep.subr.mxu0 0.0
    %1531 = vmatpush1.msra.mxu0 0.0
    %1532 = vmatprep.subr.mxu0 0.0
    %1533 = vmatpush1.msra.mxu0 0.0
    %1534 = vmatprep.subr.mxu0 0.0
    %1535 = vmatpush1.msra.mxu0 0.0
    %1536 = vmatprep.subr.mxu0 0.0
    %1537 = vmatpush1.msra.mxu0 0.0
    %1538 = vmatprep.subr.mxu0 0.0
    %1539 = vmatpush1.msra.mxu0 0.0
    %1540 = vmatprep.subr.mxu0 0.0
    %1541 = vmatpush1.msra.mxu0 0.0
    %1542 = vmatprep.subr.mxu0 0.0
    %1543 = vmatpush1.msra.mxu0 0.0
    %1544 = vmatprep.subr.mxu0 0.0
    %1545 = vmatpush1.msra.mxu0 0.0
    %1546 = vmatprep.subr.mxu0 0.0
    %1547 = vmatpush1.msra.mxu0 0.0
    %1548 = vmatprep.subr.mxu0 0.0
    %1549 = vmatpush1.msra.mxu0 0.0
    %1550 = vmatprep.subr.mxu0 0.0
    %1551 = vmatpush1.msra.mxu0 0.0
    %1552 = vmatprep.subr.mxu0 0.0
    %1553 = vmatpush1.msra.mxu0 0.0
    %1554 = vmatprep.subr.mxu0 0.0
    %1555 = vmatpush1.msra.mxu0 0.0
    %1556 = vmatprep.subr.mxu0 0.0
    %1557 = vmatpush1.msra.mxu0 0.0
    %1558 = vmatprep.subr.mxu0 0.0
    %1559 = vmatpush1.msra.mxu0 0.0
    %1560 = vmatprep.subr.mxu0 0.0
    %1561 = vmatpush1.msra.mxu0 0.0
    %1562 = vmatprep.subr.mxu0 0.0
    %1563 = vmatpush1.msra.mxu0 0.0
    %1564 = vmatprep.subr.mxu0 0.0
    %1565 = vmatpush1.msra.mxu0 0.0
    %1566 = vmatprep.subr.mxu0 0.0
    %1567 = vmatpush1.msra.mxu0 0.0
    %1568 = vmatprep.mubr.f32.mxu0 0.0
    %1569 = vmatmul.mubr.f32.gmra.mrb[0].mxu0 %v1399
    %v1570 = vpop.f32.mrb[0].mxu0
    %v1571 = vadd.f32 0.0, %v1570
    %v1572 = vpop.f32.mrb[0].mxu0
    %1573 = vmatprep.mubr.f32.mxu0 0.0
    %1574 = vmatmul.mubr.f32.gmra.mrb[0].mxu0 %v1402
    %v1575 = vpop.f32.mrb[0].mxu0
    %v1576 = vadd.f32 0.0, %v1575
    %v1577 = vpop.f32.mrb[0].mxu0
    %1578 = vmatprep.mubr.f32.mxu0 0.0
    %1579 = vmatmul.mubr.f32.gmra.mrb[0].mxu0 %v1405
    %v1580 = vpop.f32.mrb[0].mxu0
    %v1581 = vadd.f32 0.0, %v1580
    %v1582 = vpop.f32.mrb[0].mxu0
    %1583 = vmatprep.mubr.f32.mxu0 0.0
    %1584 = vmatmul.mubr.f32.gmra.mrb[0].mxu0 %v1408
    %v1585 = vpop.f32.mrb[0].mxu0
    %v1586 = vadd.f32 0.0, %v1585
    %v1587 = vpop.f32.mrb[0].mxu0
    %1588 = vdwg.mxu0
    %s1589 = scalar_lea.vmem %s17, 32
    %v1590 = vld [vmem:[%s1589] sm:$0xff]
    %v1591 = vld [vmem:[%s1589 + $0x8] sm:$0x3]
    %v1593 = vsel %vm501, %v1591, 0
    %1595 = vmatprep.subr.mxu0 0.0
    %1596 = vmatpush1.msra.mxu0 %v1590
    %1597 = vmatprep.subr.mxu0 0.0
    %1598 = vmatpush1.msra.mxu0 %v1593
    %1599 = vmatprep.subr.mxu0 0.0
    %1600 = vmatpush1.msra.mxu0 0.0
    %1601 = vmatprep.subr.mxu0 0.0
    %1602 = vmatpush1.msra.mxu0 0.0
    %1603 = vmatprep.subr.mxu0 0.0
    %1604 = vmatpush1.msra.mxu0 0.0
    %1605 = vmatprep.subr.mxu0 0.0
    %1606 = vmatpush1.msra.mxu0 0.0
    %1607 = vmatprep.subr.mxu0 0.0
    %1608 = vmatpush1.msra.mxu0 0.0
    %1609 = vmatprep.subr.mxu0 0.0
    %1610 = vmatpush1.msra.mxu0 0.0
    %1611 = vmatprep.subr.mxu0 0.0
    %1612 = vmatpush1.msra.mxu0 0.0
    %1613 = vmatprep.subr.mxu0 0.0
    %1614 = vmatpush1.msra.mxu0 0.0
    %1615 = vmatprep.subr.mxu0 0.0
    %1616 = vmatpush1.msra.mxu0 0.0
    %1617 = vmatprep.subr.mxu0 0.0
    %1618 = vmatpush1.msra.mxu0 0.0
    %1619 = vmatprep.subr.mxu0 0.0
    %1620 = vmatpush1.msra.mxu0 0.0
    %1621 = vmatprep.subr.mxu0 0.0
    %1622 = vmatpush1.msra.mxu0 0.0
    %1623 = vmatprep.subr.mxu0 0.0
    %1624 = vmatpush1.msra.mxu0 0.0
    %1625 = vmatprep.subr.mxu0 0.0
    %1626 = vmatpush1.msra.mxu0 0.0
    %1627 = vmatprep.subr.mxu0 0.0
    %1628 = vmatpush1.msra.mxu0 0.0
    %1629 = vmatprep.subr.mxu0 0.0
    %1630 = vmatpush1.msra.mxu0 0.0
    %1631 = vmatprep.subr.mxu0 0.0
    %1632 = vmatpush1.msra.mxu0 0.0
    %1633 = vmatprep.subr.mxu0 0.0
    %1634 = vmatpush1.msra.mxu0 0.0
    %1635 = vmatprep.subr.mxu0 0.0
    %1636 = vmatpush1.msra.mxu0 0.0
    %1637 = vmatprep.subr.mxu0 0.0
    %1638 = vmatpush1.msra.mxu0 0.0
    %1639 = vmatprep.subr.mxu0 0.0
    %1640 = vmatpush1.msra.mxu0 0.0
    %1641 = vmatprep.subr.mxu0 0.0
    %1642 = vmatpush1.msra.mxu0 0.0
    %1643 = vmatprep.subr.mxu0 0.0
    %1644 = vmatpush1.msra.mxu0 0.0
    %1645 = vmatprep.subr.mxu0 0.0
    %1646 = vmatpush1.msra.mxu0 0.0
    %1647 = vmatprep.subr.mxu0 0.0
    %1648 = vmatpush1.msra.mxu0 0.0
    %1649 = vmatprep.subr.mxu0 0.0
    %1650 = vmatpush1.msra.mxu0 0.0
    %1651 = vmatprep.subr.mxu0 0.0
    %1652 = vmatpush1.msra.mxu0 0.0
    %1653 = vmatprep.subr.mxu0 0.0
    %1654 = vmatpush1.msra.mxu0 0.0
    %1655 = vmatprep.subr.mxu0 0.0
    %1656 = vmatpush1.msra.mxu0 0.0
    %1657 = vmatprep.subr.mxu0 0.0
    %1658 = vmatpush1.msra.mxu0 0.0
    %1659 = vmatprep.mubr.f32.mxu0 0.0
    %1660 = vmatmul.mubr.f32.gmra.mrb[0].mxu0 %v1399
    %v1661 = vpop.f32.mrb[0].mxu0
    %v1662 = vadd.f32 0.0, %v1661
    %v1663 = vpop.f32.mrb[0].mxu0
    %1664 = vmatprep.mubr.f32.mxu0 0.0
    %1665 = vmatmul.mubr.f32.gmra.mrb[0].mxu0 %v1402
    %v1666 = vpop.f32.mrb[0].mxu0
    %v1667 = vadd.f32 0.0, %v1666
    %v1668 = vpop.f32.mrb[0].mxu0
    %1669 = vmatprep.mubr.f32.mxu0 0.0
    %1670 = vmatmul.mubr.f32.gmra.mrb[0].mxu0 %v1405
    %v1671 = vpop.f32.mrb[0].mxu0
    %v1672 = vadd.f32 0.0, %v1671
    %v1673 = vpop.f32.mrb[0].mxu0
    %1674 = vmatprep.mubr.f32.mxu0 0.0
    %1675 = vmatmul.mubr.f32.gmra.mrb[0].mxu0 %v1408
    %v1676 = vpop.f32.mrb[0].mxu0
    %v1677 = vadd.f32 0.0, %v1676
    %v1678 = vpop.f32.mrb[0].mxu0
    %1679 = vdwg.mxu0
    %v1684 = vrot.slane %v1480, 7
    %v1685 = vrot.slane %v1485, 7
    %v1686 = vsel %vm776, %v1684, %v1685
    %v1687 = vrot.slane %v1490, 7
    %v1688 = vsel %vm776, %v1685, %v1687
    %v1689 = vrot.slane %v1495, 7
    %v1690 = vsel %vm776, %v1687, %v1689
    %v1695 = vsel %vm776, 0.0, %v1684
    %v1696 = vmul.f32 %v1695, %v792
    %v1697 = vmul.f32 %v1686, %v797
    %v1698 = vmul.f32 %v1688, %v802
    %v1699 = vmul.f32 %v1690, %v807
    %v1704 = vrot.slane %v1662, 1
    %v1705 = vrot.slane %v1667, 1
    %v1706 = vsel %vm817, %v1704, %v1705
    %v1707 = vrot.slane %v1672, 1
    %v1708 = vsel %vm817, %v1705, %v1707
    %v1709 = vrot.slane %v1677, 1
    %v1710 = vsel %vm817, %v1707, %v1709
    %v1715 = vsel %vm817, %v1709, 0.0
    %v1716 = vmul.f32 %v1706, %v832
    %v1717 = vmul.f32 %v1708, %v836
    %v1718 = vmul.f32 %v1710, %v840
    %v1719 = vmul.f32 %v1715, %v844
    %v1720 = vadd.f32 %v1696, %v1571
    %v1721 = vadd.f32 %v1697, %v1576
    %v1722 = vadd.f32 %v1698, %v1581
    %v1723 = vadd.f32 %v1699, %v1586
    %v1724 = vadd.f32 %v1720, %v1716
    %v1725 = vadd.f32 %v1721, %v1717
    %v1726 = vadd.f32 %v1722, %v1718
    %v1727 = vadd.f32 %v1723, %v1719
    %v1728 = vlaneseq
    %v1729 = vshrl.u32 %v1728, 7
    %v1730 = vsub.s32 0, %v1729
    %v1731 = vrot.slane %v879, %v1730
    %v1732 = vmul.f32 %v1724, %v1731
    %v1733 = vmul.f32 %v1725, %v1731
    %v1734 = vmul.f32 %v1726, %v1731
    %v1735 = vmul.f32 %v1727, %v1731
    %v1736 = vlaneseq
    %v1737 = vshrl.u32 %v1736, 7
    %v1738 = vsub.s32 1, %v1737
    %v1739 = vrot.slane %v879, %v1738
    %v1740 = vadd.f32 %v1732, %v1739
    %v1741 = vadd.f32 %v1733, %v1739
    %v1742 = vadd.f32 %v1734, %v1739
    %v1743 = vadd.f32 %v1735, %v1739
    %v1744 = vmax.f32 %v1740, 0.0
    %v1745 = vmax.f32 %v1741, 0.0
    %v1746 = vmax.f32 %v1742, 0.0
    %v1747 = vmax.f32 %v1743, 0.0
    %vm1748 = vcmask 261120
    %v1750 = vsel %vm1748, %v156, 0
    %1752 = vmatprep.subr.mxu0 0.0
    %1753 = vmatpush1.msra.mxu0 %v1744
    %1754 = vmatprep.subr.mxu0 0.0
    %1755 = vmatpush1.msra.mxu0 %v1745
    %1756 = vmatprep.subr.mxu0 0.0
    %1757 = vmatpush1.msra.mxu0 %v1746
    %1758 = vmatprep.subr.mxu0 0.0
    %1759 = vmatpush1.msra.mxu0 %v1747
    %1760 = vmatprep.subr.mxu0 0.0
    %1761 = vmatpush1.msra.mxu0 0.0
    %1762 = vmatprep.subr.mxu0 0.0
    %1763 = vmatpush1.msra.mxu0 0.0
    %1764 = vmatprep.subr.mxu0 0.0
    %1765 = vmatpush1.msra.mxu0 0.0
    %1766 = vmatprep.subr.mxu0 0.0
    %1767 = vmatpush1.msra.mxu0 0.0
    %1768 = vmatprep.subr.mxu0 0.0
    %1769 = vmatpush1.msra.mxu0 0.0
    %1770 = vmatprep.subr.mxu0 0.0
    %1771 = vmatpush1.msra.mxu0 0.0
    %1772 = vmatprep.subr.mxu0 0.0
    %1773 = vmatpush1.msra.mxu0 0.0
    %1774 = vmatprep.subr.mxu0 0.0
    %1775 = vmatpush1.msra.mxu0 0.0
    %1776 = vmatprep.subr.mxu0 0.0
    %1777 = vmatpush1.msra.mxu0 0.0
    %1778 = vmatprep.subr.mxu0 0.0
    %1779 = vmatpush1.msra.mxu0 0.0
    %1780 = vmatprep.subr.mxu0 0.0
    %1781 = vmatpush1.msra.mxu0 0.0
    %1782 = vmatprep.subr.mxu0 0.0
    %1783 = vmatpush1.msra.mxu0 0.0
    %1784 = vmatprep.subr.mxu0 0.0
    %1785 = vmatpush1.msra.mxu0 0.0
    %1786 = vmatprep.subr.mxu0 0.0
    %1787 = vmatpush1.msra.mxu0 0.0
    %1788 = vmatprep.subr.mxu0 0.0
    %1789 = vmatpush1.msra.mxu0 0.0
    %1790 = vmatprep.subr.mxu0 0.0
    %1791 = vmatpush1.msra.mxu0 0.0
    %1792 = vmatprep.subr.mxu0 0.0
    %1793 = vmatpush1.msra.mxu0 0.0
    %1794 = vmatprep.subr.mxu0 0.0
    %1795 = vmatpush1.msra.mxu0 0.0
    %1796 = vmatprep.subr.mxu0 0.0
    %1797 = vmatpush1.msra.mxu0 0.0
    %1798 = vmatprep.subr.mxu0 0.0
    %1799 = vmatpush1.msra.mxu0 0.0
    %1800 = vmatprep.subr.mxu0 0.0
    %1801 = vmatpush1.msra.mxu0 0.0
    %1802 = vmatprep.subr.mxu0 0.0
    %1803 = vmatpush1.msra.mxu0 0.0
    %1804 = vmatprep.subr.mxu0 0.0
    %1805 = vmatpush1.msra.mxu0 0.0
    %1806 = vmatprep.subr.mxu0 0.0
    %1807 = vmatpush1.msra.mxu0 0.0
    %1808 = vmatprep.subr.mxu0 0.0
    %1809 = vmatpush1.msra.mxu0 0.0
    %1810 = vmatprep.subr.mxu0 0.0
    %1811 = vmatpush1.msra.mxu0 0.0
    %1812 = vmatprep.subr.mxu0 0.0
    %1813 = vmatpush1.msra.mxu0 0.0
    %1814 = vmatprep.subr.mxu0 0.0
    %1815 = vmatpush1.msra.mxu0 0.0
    %1816 = vmatprep.mubr.f32.mxu0 0.0
    %1817 = vmatmul.mubr.f32.gmra.mrb[0].mxu0 %v1750
    %v1818 = vpop.f32.mrb[0].mxu0
    %v1819 = vadd.f32 0.0, %v1818
    %v1820 = vpop.f32.mrb[0].mxu0
    %1821 = vdwg.mxu0
    %1822 = vmatprep.subr.mxu0 0.0
    %1823 = vmatpush1.msra.mxu0 %v874
    %1824 = vmatprep.subr.mxu0 0.0
    %1825 = vmatpush1.msra.mxu0 %v875
    %1826 = vmatprep.subr.mxu0 0.0
    %1827 = vmatpush1.msra.mxu0 %v876
    %1828 = vmatprep.subr.mxu0 0.0
    %1829 = vmatpush1.msra.mxu0 %v877
    %1830 = vmatprep.subr.mxu0 0.0
    %1831 = vmatpush1.msra.mxu0 0.0
    %1832 = vmatprep.subr.mxu0 0.0
    %1833 = vmatpush1.msra.mxu0 0.0
    %1834 = vmatprep.subr.mxu0 0.0
    %1835 = vmatpush1.msra.mxu0 0.0
    %1836 = vmatprep.subr.mxu0 0.0
    %1837 = vmatpush1.msra.mxu0 0.0
    %1838 = vmatprep.subr.mxu0 0.0
    %1839 = vmatpush1.msra.mxu0 0.0
    %1840 = vmatprep.subr.mxu0 0.0
    %1841 = vmatpush1.msra.mxu0 0.0
    %1842 = vmatprep.subr.mxu0 0.0
    %1843 = vmatpush1.msra.mxu0 0.0
    %1844 = vmatprep.subr.mxu0 0.0
    %1845 = vmatpush1.msra.mxu0 0.0
    %1846 = vmatprep.subr.mxu0 0.0
    %1847 = vmatpush1.msra.mxu0 0.0
    %1848 = vmatprep.subr.mxu0 0.0
    %1849 = vmatpush1.msra.mxu0 0.0
    %1850 = vmatprep.subr.mxu0 0.0
    %1851 = vmatpush1.msra.mxu0 0.0
    %1852 = vmatprep.subr.mxu0 0.0
    %1853 = vmatpush1.msra.mxu0 0.0
    %1854 = vmatprep.subr.mxu0 0.0
    %1855 = vmatpush1.msra.mxu0 0.0
    %1856 = vmatprep.subr.mxu0 0.0
    %1857 = vmatpush1.msra.mxu0 0.0
    %1858 = vmatprep.subr.mxu0 0.0
    %1859 = vmatpush1.msra.mxu0 0.0
    %1860 = vmatprep.subr.mxu0 0.0
    %1861 = vmatpush1.msra.mxu0 0.0
    %1862 = vmatprep.subr.mxu0 0.0
    %1863 = vmatpush1.msra.mxu0 0.0
    %1864 = vmatprep.subr.mxu0 0.0
    %1865 = vmatpush1.msra.mxu0 0.0
    %1866 = vmatprep.subr.mxu0 0.0
    %1867 = vmatpush1.msra.mxu0 0.0
    %1868 = vmatprep.subr.mxu0 0.0
    %1869 = vmatpush1.msra.mxu0 0.0
    %1870 = vmatprep.subr.mxu0 0.0
    %1871 = vmatpush1.msra.mxu0 0.0
    %1872 = vmatprep.subr.mxu0 0.0
    %1873 = vmatpush1.msra.mxu0 0.0
    %1874 = vmatprep.subr.mxu0 0.0
    %1875 = vmatpush1.msra.mxu0 0.0
    %1876 = vmatprep.subr.mxu0 0.0
    %1877 = vmatpush1.msra.mxu0 0.0
    %1878 = vmatprep.subr.mxu0 0.0
    %1879 = vmatpush1.msra.mxu0 0.0
    %1880 = vmatprep.subr.mxu0 0.0
    %1881 = vmatpush1.msra.mxu0 0.0
    %1882 = vmatprep.subr.mxu0 0.0
    %1883 = vmatpush1.msra.mxu0 0.0
    %1884 = vmatprep.subr.mxu0 0.0
    %1885 = vmatpush1.msra.mxu0 0.0
    %1886 = vmatprep.mubr.f32.mxu0 0.0
    %1887 = vmatmul.mubr.f32.gmra.mrb[0].mxu0 %v1750
    %v1888 = vpop.f32.mrb[0].mxu0
    %v1889 = vadd.f32 %v1819, %v1888
    %v1890 = vpop.f32.mrb[0].mxu0
    %1891 = vdwg.mxu0
    %v1892 = vld [vmem:[%s25] sm:$0x3]
    %v1893 = vld [vmem:[%s29] sm:$0x3]
    %v1894 = vld [vmem:[%s21] sm:$0xff]
    %v1895 = vld [vmem:[%s21 + $0x8] sm:$0xff]
    %v1896 = vld [vmem:[%s21 + $0x10] sm:$0xff]
    %v1897 = vld [vmem:[%s21 + $0x18] sm:$0xff]
    %v1898 = vld [vmem:[%s21 + $0x20] sm:$0xff]
    %v1899 = vld [vmem:[%s21 + $0x28] sm:$0xff]
    %v1900 = vld [vmem:[%s21 + $0x30] sm:$0xff]
    %v1901 = vld [vmem:[%s21 + $0x38] sm:$0xff]
    %v1902 = vld [vmem:[%s21 + $0x40] sm:$0xff]
    %v1903 = vld [vmem:[%s21 + $0x48] sm:$0xff]
    %v1904 = vld [vmem:[%s21 + $0x50] sm:$0xff]
    %v1905 = vld [vmem:[%s21 + $0x58] sm:$0xff]
    %v1906 = vld [vmem:[%s23] sm:$0xf]
    %v1907 = vld [vmem:[%s23 + $0x4] sm:$0xf]
    %v1908 = vld [vmem:[%s23 + $0x8] sm:$0xf]
    %v1909 = vld [vmem:[%s23 + $0xc] sm:$0xf]
    %v1910 = vld [vmem:[%s23 + $0x10] sm:$0xf]
    %v1911 = vld [vmem:[%s23 + $0x14] sm:$0xf]
    %v1912 = vld [vmem:[%s23 + $0x18] sm:$0xf]
    %v1913 = vld [vmem:[%s23 + $0x1c] sm:$0xf]
    %v1914 = vld [vmem:[%s23 + $0x20] sm:$0xf]
    %v1915 = vld [vmem:[%s23 + $0x24] sm:$0xf]
    %v1916 = vld [vmem:[%s23 + $0x28] sm:$0xf]
    %v1917 = vld [vmem:[%s23 + $0x2c] sm:$0xf]
    %v1918 = vld [vmem:[%s23 + $0x30] sm:$0xf]
    %v1919 = vld [vmem:[%s23 + $0x34] sm:$0xf]
    %v1920 = vld [vmem:[%s23 + $0x38] sm:$0xf]
    %v1921 = vld [vmem:[%s23 + $0x3c] sm:$0xf]
    %v1922 = vld [vmem:[%s23 + $0x40] sm:$0xf]
    %v1923 = vld [vmem:[%s23 + $0x44] sm:$0xf]
    %v1924 = vld [vmem:[%s23 + $0x48] sm:$0xf]
    %v1925 = vld [vmem:[%s23 + $0x4c] sm:$0xf]
    %v1926 = vld [vmem:[%s23 + $0x50] sm:$0xf]
    %v1927 = vld [vmem:[%s23 + $0x54] sm:$0xf]
    %v1928 = vld [vmem:[%s23 + $0x58] sm:$0xf]
    %v1929 = vld [vmem:[%s23 + $0x5c] sm:$0xf]
    %v1930 = vld [vmem:[%s23 + $0x60] sm:$0xf]
    %v1931 = vld [vmem:[%s23 + $0x64] sm:$0xf]
    %v1932 = vld [vmem:[%s23 + $0x68] sm:$0xf]
    %v1933 = vld [vmem:[%s23 + $0x6c] sm:$0xf]
    %v1934 = vld [vmem:[%s23 + $0x70] sm:$0xf]
    %v1935 = vld [vmem:[%s23 + $0x74] sm:$0xf]
    %v1936 = vld [vmem:[%s23 + $0x78] sm:$0xf]
    %v1937 = vld [vmem:[%s23 + $0x7c] sm:$0xf]
    %v1938 = vld [vmem:[%s23 + $0x80] sm:$0xf]
    %v1939 = vld [vmem:[%s23 + $0x84] sm:$0xf]
    %v1940 = vld [vmem:[%s23 + $0x88] sm:$0xf]
    %v1941 = vld [vmem:[%s23 + $0x8c] sm:$0xf]
    %v1942 = vld [vmem:[%s23 + $0x90] sm:$0xf]
    %v1943 = vld [vmem:[%s23 + $0x94] sm:$0xf]
    %v1944 = vld [vmem:[%s23 + $0x98] sm:$0xf]
    %v1945 = vld [vmem:[%s23 + $0x9c] sm:$0xf]
    %v1946 = vld [vmem:[%s23 + $0xa0] sm:$0xf]
    %v1947 = vld [vmem:[%s23 + $0xa4] sm:$0xf]
    %v1948 = vld [vmem:[%s23 + $0xa8] sm:$0xf]
    %v1949 = vld [vmem:[%s23 + $0xac] sm:$0xf]
    %v1950 = vld [vmem:[%s23 + $0xb0] sm:$0xf]
    %v1951 = vld [vmem:[%s23 + $0xb4] sm:$0xf]
    %v1952 = vld [vmem:[%s23 + $0xb8] sm:$0xf]
    %v1953 = vld [vmem:[%s23 + $0xbc] sm:$0xf]
    %v1954 = vld [vmem:[%s23 + $0xc0] sm:$0xf]
    %v1955 = vld [vmem:[%s23 + $0xc4] sm:$0xf]
    %v1956 = vld [vmem:[%s23 + $0xc8] sm:$0xf]
    %v1957 = vld [vmem:[%s23 + $0xcc] sm:$0xf]
    %v1958 = vld [vmem:[%s23 + $0xd0] sm:$0xf]
    %v1959 = vld [vmem:[%s23 + $0xd4] sm:$0xf]
    %v1960 = vld [vmem:[%s23 + $0xd8] sm:$0xf]
    %v1961 = vld [vmem:[%s23 + $0xdc] sm:$0xf]
    %v1962 = vld [vmem:[%s23 + $0xe0] sm:$0xf]
    %v1963 = vld [vmem:[%s23 + $0xe4] sm:$0xf]
    %v1964 = vld [vmem:[%s23 + $0xe8] sm:$0xf]
    %v1965 = vld [vmem:[%s23 + $0xec] sm:$0xf]
    %v1966 = vld [vmem:[%s23 + $0xf0] sm:$0xf]
    %v1967 = vld [vmem:[%s23 + $0xf4] sm:$0xf]
    %v1968 = vld [vmem:[%s23 + $0xf8] sm:$0xf]
    %v1969 = vld [vmem:[%s23 + $0xfc] sm:$0xf]
    %v1970 = vld [vmem:[%s23 + $0x100] sm:$0xf]
    %v1971 = vld [vmem:[%s23 + $0x104] sm:$0xf]
    %v1972 = vld [vmem:[%s23 + $0x108] sm:$0xf]
    %v1973 = vld [vmem:[%s23 + $0x10c] sm:$0xf]
    %v1974 = vld [vmem:[%s23 + $0x110] sm:$0xf]
    %v1975 = vld [vmem:[%s23 + $0x114] sm:$0xf]
    %v1976 = vld [vmem:[%s23 + $0x118] sm:$0xf]
    %v1977 = vld [vmem:[%s23 + $0x11c] sm:$0xf]
    %v1978 = vld [vmem:[%s23 + $0x120] sm:$0xf]
    %v1979 = vld [vmem:[%s23 + $0x124] sm:$0xf]
    %v1980 = vld [vmem:[%s23 + $0x128] sm:$0xf]
    %v1981 = vld [vmem:[%s23 + $0x12c] sm:$0xf]
    %v1982 = vld [vmem:[%s23 + $0x130] sm:$0xf]
    %v1983 = vld [vmem:[%s23 + $0x134] sm:$0xf]
    %v1984 = vld [vmem:[%s23 + $0x138] sm:$0xf]
    %v1985 = vld [vmem:[%s23 + $0x13c] sm:$0xf]
    %v1986 = vld [vmem:[%s23 + $0x140] sm:$0xf]
    %v1987 = vld [vmem:[%s23 + $0x144] sm:$0xf]
    %v1988 = vld [vmem:[%s23 + $0x148] sm:$0xf]
    %v1989 = vld [vmem:[%s23 + $0x14c] sm:$0xf]
    %v1990 = vld [vmem:[%s23 + $0x150] sm:$0xf]
    %v2003 = vunpack.c.l.b16 %v1894
    %v2004 = vunpack.c.h.b16 %v1894
    %v2005 = vunpack.c.l.b16 %v1895
    %v2006 = vunpack.c.h.b16 %v1895
    %v2007 = vunpack.c.l.b16 %v1896
    %v2008 = vunpack.c.h.b16 %v1896
    %v2009 = vunpack.c.l.b16 %v1897
    %v2010 = vunpack.c.h.b16 %v1897
    %v2011 = vunpack.c.l.b16 %v1898
    %v2012 = vunpack.c.h.b16 %v1898
    %v2013 = vunpack.c.l.b16 %v1899
    %v2014 = vunpack.c.h.b16 %v1899
    %v2015 = vunpack.c.l.b16 %v1900
    %v2016 = vunpack.c.h.b16 %v1900
    %v2017 = vunpack.c.l.b16 %v1901
    %v2018 = vunpack.c.h.b16 %v1901
    %v2019 = vunpack.c.l.b16 %v1902
    %v2020 = vunpack.c.h.b16 %v1902
    %v2021 = vunpack.c.l.b16 %v1903
    %v2022 = vunpack.c.h.b16 %v1903
    %v2023 = vunpack.c.l.b16 %v1904
    %v2024 = vunpack.c.h.b16 %v1904
    %v2025 = vunpack.c.l.b16 %v1905
    %v2026 = vunpack.c.h.b16 %v1905
    %v2027 = vpack.c.b16 %v2009, %v2003
    %v2028 = vpack.c.b16 %v2010, %v2004
    %v2029 = vpack.c.b16 %v2011, %v2005
    %v2030 = vpack.c.b16 %v2012, %v2006
    %v2031 = vpack.c.b16 %v2013, %v2007
    %v2032 = vpack.c.b16 %v2014, %v2008
    %v2033 = vpack.c.b16 %v2021, %v2015
    %v2034 = vpack.c.b16 %v2022, %v2016
    %v2035 = vpack.c.b16 %v2023, %v2017
    %v2036 = vpack.c.b16 %v2024, %v2018
    %v2037 = vpack.c.b16 %v2025, %v2019
    %v2038 = vpack.c.b16 %v2026, %v2020
    %v2134 = vunpack.c.l.b16 %v1906
    %v2135 = vunpack.c.l.b16 %v1907
    %v2136 = vunpack.c.l.b16 %v1908
    %v2137 = vunpack.c.l.b16 %v1909
    %v2138 = vunpack.c.l.b16 %v1910
    %v2139 = vunpack.c.l.b16 %v1911
    %v2140 = vunpack.c.l.b16 %v1912
    %v2141 = vunpack.c.l.b16 %v1913
    %v2142 = vunpack.c.l.b16 %v1914
    %v2143 = vunpack.c.l.b16 %v1915
    %v2144 = vunpack.c.l.b16 %v1916
    %v2145 = vunpack.c.l.b16 %v1917
    %v2146 = vunpack.c.l.b16 %v1918
    %v2147 = vunpack.c.l.b16 %v1919
    %v2148 = vunpack.c.l.b16 %v1920
    %v2149 = vunpack.c.l.b16 %v1921
    %v2150 = vunpack.c.l.b16 %v1922
    %v2151 = vunpack.c.l.b16 %v1923
    %v2152 = vunpack.c.l.b16 %v1924
    %v2153 = vunpack.c.l.b16 %v1925
    %v2154 = vunpack.c.l.b16 %v1926
    %v2155 = vunpack.c.l.b16 %v1927
    %v2156 = vunpack.c.l.b16 %v1928
    %v2157 = vunpack.c.l.b16 %v1929
    %v2158 = vunpack.c.l.b16 %v1930
    %v2159 = vunpack.c.l.b16 %v1931
    %v2160 = vunpack.c.l.b16 %v1932
    %v2161 = vunpack.c.l.b16 %v1933
    %v2162 = vunpack.c.l.b16 %v1934
    %v2163 = vunpack.c.l.b16 %v1935
    %v2164 = vunpack.c.l.b16 %v1936
    %v2165 = vunpack.c.l.b16 %v1937
    %v2166 = vunpack.c.l.b16 %v1938
    %v2167 = vunpack.c.l.b16 %v1939
    %v2168 = vunpack.c.l.b16 %v1940
    %v2169 = vunpack.c.l.b16 %v1941
    %v2170 = vunpack.c.l.b16 %v1942
    %v2171 = vunpack.c.l.b16 %v1943
    %v2172 = vunpack.c.l.b16 %v1944
    %v2173 = vunpack.c.l.b16 %v1945
    %v2174 = vunpack.c.l.b16 %v1946
    %v2175 = vunpack.c.l.b16 %v1947
    %v2176 = vunpack.c.l.b16 %v1948
    %v2177 = vunpack.c.l.b16 %v1949
    %v2178 = vunpack.c.l.b16 %v1950
    %v2179 = vunpack.c.l.b16 %v1951
    %v2180 = vunpack.c.l.b16 %v1952
    %v2181 = vunpack.c.l.b16 %v1953
    %v2182 = vunpack.c.l.b16 %v1954
    %v2183 = vunpack.c.l.b16 %v1955
    %v2184 = vunpack.c.l.b16 %v1956
    %v2185 = vunpack.c.l.b16 %v1957
    %v2186 = vunpack.c.l.b16 %v1958
    %v2187 = vunpack.c.l.b16 %v1959
    %v2188 = vunpack.c.l.b16 %v1960
    %v2189 = vunpack.c.l.b16 %v1961
    %v2190 = vunpack.c.l.b16 %v1962
    %v2191 = vunpack.c.l.b16 %v1963
    %v2192 = vunpack.c.l.b16 %v1964
    %v2193 = vunpack.c.l.b16 %v1965
    %v2194 = vunpack.c.l.b16 %v1966
    %v2195 = vunpack.c.l.b16 %v1967
    %v2196 = vunpack.c.l.b16 %v1968
    %v2197 = vunpack.c.l.b16 %v1969
    %v2198 = vunpack.c.l.b16 %v1970
    %v2199 = vunpack.c.l.b16 %v1971
    %v2200 = vunpack.c.l.b16 %v1972
    %v2201 = vunpack.c.l.b16 %v1973
    %v2202 = vunpack.c.l.b16 %v1974
    %v2203 = vunpack.c.l.b16 %v1975
    %v2204 = vunpack.c.l.b16 %v1976
    %v2205 = vunpack.c.l.b16 %v1977
    %v2206 = vunpack.c.l.b16 %v1978
    %v2207 = vunpack.c.l.b16 %v1979
    %v2208 = vunpack.c.l.b16 %v1980
    %v2209 = vunpack.c.l.b16 %v1981
    %v2210 = vunpack.c.l.b16 %v1982
    %v2211 = vunpack.c.l.b16 %v1983
    %v2212 = vunpack.c.l.b16 %v1984
    %v2213 = vunpack.c.l.b16 %v1985
    %v2214 = vunpack.c.l.b16 %v1986
    %v2215 = vunpack.c.l.b16 %v1987
    %v2216 = vunpack.c.l.b16 %v1988
    %v2217 = vunpack.c.l.b16 %v1989
    %v2218 = vunpack.c.l.b16 %v1990
    %v2219 = vpack.c.b16 %v2135, %v2134
    %v2220 = vpack.c.b16 %v2137, %v2136
    %v2221 = vpack.c.b16 %v2139, %v2138
    %v2222 = vpack.c.b16 %v2141, %v2140
    %v2223 = vpack.c.b16 %v2143, %v2142
    %v2224 = vpack.c.b16 %v2145, %v2144
    %v2225 = vpack.c.b16 %v2147, %v2146
    %v2226 = vpack.c.b16 %v2149, %v2148
    %v2227 = vpack.c.b16 %v2151, %v2150
    %v2228 = vpack.c.b16 %v2153, %v2152
    %v2229 = vpack.c.b16 %v2155, %v2154
    %v2230 = vpack.c.b16 %v2157, %v2156
    %v2231 = vpack.c.b16 %v2159, %v2158
    %v2232 = vpack.c.b16 %v2161, %v2160
    %v2233 = vpack.c.b16 %v2163, %v2162
    %v2234 = vpack.c.b16 %v2165, %v2164
    %v2235 = vpack.c.b16 %v2167, %v2166
    %v2236 = vpack.c.b16 %v2169, %v2168
    %v2237 = vpack.c.b16 %v2171, %v2170
    %v2238 = vpack.c.b16 %v2173, %v2172
    %v2239 = vpack.c.b16 %v2175, %v2174
    %v2240 = vpack.c.b16 %v2177, %v2176
    %v2241 = vpack.c.b16 %v2179, %v2178
    %v2242 = vpack.c.b16 %v2181, %v2180
    %v2243 = vpack.c.b16 %v2183, %v2182
    %v2244 = vpack.c.b16 %v2185, %v2184
    %v2245 = vpack.c.b16 %v2187, %v2186
    %v2246 = vpack.c.b16 %v2189, %v2188
    %v2247 = vpack.c.b16 %v2191, %v2190
    %v2248 = vpack.c.b16 %v2193, %v2192
    %v2249 = vpack.c.b16 %v2195, %v2194
    %v2250 = vpack.c.b16 %v2197, %v2196
    %v2251 = vpack.c.b16 %v2199, %v2198
    %v2252 = vpack.c.b16 %v2201, %v2200
    %v2253 = vpack.c.b16 %v2203, %v2202
    %v2254 = vpack.c.b16 %v2205, %v2204
    %v2255 = vpack.c.b16 %v2207, %v2206
    %v2256 = vpack.c.b16 %v2209, %v2208
    %v2257 = vpack.c.b16 %v2211, %v2210
    %v2258 = vpack.c.b16 %v2213, %v2212
    %v2259 = vpack.c.b16 %v2215, %v2214
    %v2260 = vpack.c.b16 %v2217, %v2216
    %v2261 = vpack.c.b16 %v2218, %v2218
    %vm2304 = vcmask 326656
    %v2306 = vsel %vm2304, %v2032, 0
    %v2309 = vsel %vm2304, %v2038, 0
    %vm2311 = vcmask 1043456
    %v2313 = vsel %vm2311, %v2261, 0
    %2315 = vmatprep.subr.bf16.mxu0 0
    %2316 = vmatpush1.bf16.msra.mxu0 %v2219
    %2317 = vmatprep.subr.bf16.mxu0 0
    %2318 = vmatpush1.bf16.msra.mxu0 %v2220
    %2319 = vmatprep.subr.bf16.mxu0 0
    %2320 = vmatpush1.bf16.msra.mxu0 %v2221
    %2321 = vmatprep.subr.bf16.mxu0 0
    %2322 = vmatpush1.bf16.msra.mxu0 %v2222
    %2323 = vmatprep.subr.bf16.mxu0 0
    %2324 = vmatpush1.bf16.msra.mxu0 %v2223
    %2325 = vmatprep.subr.bf16.mxu0 0
    %2326 = vmatpush1.bf16.msra.mxu0 %v2224
    %2327 = vmatprep.subr.bf16.mxu0 0
    %2328 = vmatpush1.bf16.msra.mxu0 %v2225
    %2329 = vmatprep.subr.bf16.mxu0 0
    %2330 = vmatpush1.bf16.msra.mxu0 %v2226
    %2331 = vmatprep.subr.bf16.mxu0 0
    %2332 = vmatpush1.bf16.msra.mxu0 %v2227
    %2333 = vmatprep.subr.bf16.mxu0 0
    %2334 = vmatpush1.bf16.msra.mxu0 %v2228
    %2335 = vmatprep.subr.bf16.mxu0 0
    %2336 = vmatpush1.bf16.msra.mxu0 %v2229
    %2337 = vmatprep.subr.bf16.mxu0 0
    %2338 = vmatpush1.bf16.msra.mxu0 %v2230
    %2339 = vmatprep.subr.bf16.mxu0 0
    %2340 = vmatpush1.bf16.msra.mxu0 %v2231
    %2341 = vmatprep.subr.bf16.mxu0 0
    %2342 = vmatpush1.bf16.msra.mxu0 %v2232
    %2343 = vmatprep.subr.bf16.mxu0 0
    %2344 = vmatpush1.bf16.msra.mxu0 %v2233
    %2345 = vmatprep.subr.bf16.mxu0 0
    %2346 = vmatpush1.bf16.msra.mxu0 %v2234
    %2347 = vmatprep.mubr.bf16.mxu0 %v2028
    %2348 = vmatmul.mubr.bf16.gmra.mrb[0].mxu0 %v2027
    %v2349 = vpop.f32.mrb[0].mxu0
    %v2350 = vadd.f32 0.0, %v2349
    %v2351 = vpop.f32.mrb[0].mxu0
    %v2352 = vpop.f32.mrb[0].mxu0
    %v2353 = vadd.f32 0.0, %v2352
    %v2354 = vpop.f32.mrb[0].mxu0
    %2355 = vmatprep.mubr.bf16.mxu0 %v2034
    %2356 = vmatmul.mubr.bf16.gmra.mrb[0].mxu0 %v2033
    %v2357 = vpop.f32.mrb[0].mxu0
    %v2358 = vadd.f32 0.0, %v2357
    %v2359 = vpop.f32.mrb[0].mxu0
    %v2360 = vpop.f32.mrb[0].mxu0
    %v2361 = vadd.f32 0.0, %v2360
    %v2362 = vpop.f32.mrb[0].mxu0
    %2363 = vdwg.mxu0
    %2364 = vmatprep.subr.bf16.mxu0 0
    %2365 = vmatpush1.bf16.msra.mxu0 %v2235
    %2366 = vmatprep.subr.bf16.mxu0 0
    %2367 = vmatpush1.bf16.msra.mxu0 %v2236
    %2368 = vmatprep.subr.bf16.mxu0 0
    %2369 = vmatpush1.bf16.msra.mxu0 %v2237
    %2370 = vmatprep.subr.bf16.mxu0 0
    %2371 = vmatpush1.bf16.msra.mxu0 %v2238
    %2372 = vmatprep.subr.bf16.mxu0 0
    %2373 = vmatpush1.bf16.msra.mxu0 %v2239
    %2374 = vmatprep.subr.bf16.mxu0 0
    %2375 = vmatpush1.bf16.msra.mxu0 %v2240
    %2376 = vmatprep.subr.bf16.mxu0 0
    %2377 = vmatpush1.bf16.msra.mxu0 %v2241
    %2378 = vmatprep.subr.bf16.mxu0 0
    %2379 = vmatpush1.bf16.msra.mxu0 %v2242
    %2380 = vmatprep.subr.bf16.mxu0 0
    %2381 = vmatpush1.bf16.msra.mxu0 %v2243
    %2382 = vmatprep.subr.bf16.mxu0 0
    %2383 = vmatpush1.bf16.msra.mxu0 %v2244
    %2384 = vmatprep.subr.bf16.mxu0 0
    %2385 = vmatpush1.bf16.msra.mxu0 %v2245
    %2386 = vmatprep.subr.bf16.mxu0 0
    %2387 = vmatpush1.bf16.msra.mxu0 %v2246
    %2388 = vmatprep.subr.bf16.mxu0 0
    %2389 = vmatpush1.bf16.msra.mxu0 %v2247
    %2390 = vmatprep.subr.bf16.mxu0 0
    %2391 = vmatpush1.bf16.msra.mxu0 %v2248
    %2392 = vmatprep.subr.bf16.mxu0 0
    %2393 = vmatpush1.bf16.msra.mxu0 %v2249
    %2394 = vmatprep.subr.bf16.mxu0 0
    %2395 = vmatpush1.bf16.msra.mxu0 %v2250
    %2396 = vmatprep.mubr.bf16.mxu0 %v2030
    %2397 = vmatmul.mubr.bf16.gmra.mrb[0].mxu0 %v2029
    %v2398 = vpop.f32.mrb[0].mxu0
    %v2399 = vadd.f32 %v2350, %v2398
    %v2400 = vpop.f32.mrb[0].mxu0
    %v2401 = vpop.f32.mrb[0].mxu0
    %v2402 = vadd.f32 %v2353, %v2401
    %v2403 = vpop.f32.mrb[0].mxu0
    %2404 = vmatprep.mubr.bf16.mxu0 %v2036
    %2405 = vmatmul.mubr.bf16.gmra.mrb[0].mxu0 %v2035
    %v2406 = vpop.f32.mrb[0].mxu0
    %v2407 = vadd.f32 %v2358, %v2406
    %v2408 = vpop.f32.mrb[0].mxu0
    %v2409 = vpop.f32.mrb[0].mxu0
    %v2410 = vadd.f32 %v2361, %v2409
    %v2411 = vpop.f32.mrb[0].mxu0
    %2412 = vdwg.mxu0
    %2413 = vmatprep.subr.bf16.mxu0 0
    %2414 = vmatpush1.bf16.msra.mxu0 %v2251
    %2415 = vmatprep.subr.bf16.mxu0 0
    %2416 = vmatpush1.bf16.msra.mxu0 %v2252
    %2417 = vmatprep.subr.bf16.mxu0 0
    %2418 = vmatpush1.bf16.msra.mxu0 %v2253
    %2419 = vmatprep.subr.bf16.mxu0 0
    %2420 = vmatpush1.bf16.msra.mxu0 %v2254
    %2421 = vmatprep.subr.bf16.mxu0 0
    %2422 = vmatpush1.bf16.msra.mxu0 %v2255
    %2423 = vmatprep.subr.bf16.mxu0 0
    %2424 = vmatpush1.bf16.msra.mxu0 %v2256
    %2425 = vmatprep.subr.bf16.mxu0 0
    %2426 = vmatpush1.bf16.msra.mxu0 %v2257
    %2427 = vmatprep.subr.bf16.mxu0 0
    %2428 = vmatpush1.bf16.msra.mxu0 %v2258
    %2429 = vmatprep.subr.bf16.mxu0 0
    %2430 = vmatpush1.bf16.msra.mxu0 %v2259
    %2431 = vmatprep.subr.bf16.mxu0 0
    %2432 = vmatpush1.bf16.msra.mxu0 %v2260
    %2433 = vmatprep.subr.bf16.mxu0 0
    %2434 = vmatpush1.bf16.msra.mxu0 %v2313
    %2435 = vmatprep.subr.bf16.mxu0 0
    %2436 = vmatpush1.bf16.msra.mxu0 0
    %2437 = vmatprep.subr.bf16.mxu0 0
    %2438 = vmatpush1.bf16.msra.mxu0 0
    %2439 = vmatprep.subr.bf16.mxu0 0
    %2440 = vmatpush1.bf16.msra.mxu0 0
    %2441 = vmatprep.subr.bf16.mxu0 0
    %2442 = vmatpush1.bf16.msra.mxu0 0
    %2443 = vmatprep.subr.bf16.mxu0 0
    %2444 = vmatpush1.bf16.msra.mxu0 0
    %2445 = vmatprep.mubr.bf16.mxu0 %v2306
    %2446 = vmatmul.mubr.bf16.gmra.mrb[0].mxu0 %v2031
    %v2447 = vpop.f32.mrb[0].mxu0
    %v2448 = vadd.f32 %v2399, %v2447
    %v2449 = vpop.f32.mrb[0].mxu0
    %v2450 = vpop.f32.mrb[0].mxu0
    %v2451 = vadd.f32 %v2402, %v2450
    %v2452 = vpop.f32.mrb[0].mxu0
    %2453 = vmatprep.mubr.bf16.mxu0 %v2309
    %2454 = vmatmul.mubr.bf16.gmra.mrb[0].mxu0 %v2037
    %v2455 = vpop.f32.mrb[0].mxu0
    %v2456 = vadd.f32 %v2407, %v2455
    %v2457 = vpop.f32.mrb[0].mxu0
    %v2458 = vpop.f32.mrb[0].mxu0
    %v2459 = vadd.f32 %v2410, %v2458
    %v2460 = vpop.f32.mrb[0].mxu0
    %2461 = vdwg.mxu0
    %v2462 = vlaneseq
    %v2463 = vshrl.u32 %v2462, 7
    %v2464 = vsub.s32 0, %v2463
    %v2465 = vrot.slane %v1892, %v2464
    %v2466 = vmul.f32 %v2448, %v2465
    %v2467 = vmul.f32 %v2451, %v2465
    %v2468 = vmul.f32 %v2456, %v2465
    %v2469 = vmul.f32 %v2459, %v2465
    %v2470 = vlaneseq
    %v2471 = vshrl.u32 %v2470, 7
    %v2472 = vsub.s32 1, %v2471
    %v2473 = vrot.slane %v1892, %v2472
    %v2474 = vadd.f32 %v2466, %v2473
    %v2475 = vadd.f32 %v2467, %v2473
    %v2476 = vadd.f32 %v2468, %v2473
    %v2477 = vadd.f32 %v2469, %v2473
    %v2478 = vmax.f32 %v2474, 0.0
    %v2479 = vmax.f32 %v2475, 0.0
    %v2480 = vmax.f32 %v2476, 0.0
    %v2481 = vmax.f32 %v2477, 0.0
    %v2482 = vld [vmem:[%s27] sm:$0xff]
    %v2483 = vld [vmem:[%s27 + $0x8] sm:$0x3]
    %v2485 = vsel %vm488, %v2478, 0
    %v2488 = vsel %vm488, %v2479, 0
    %v2491 = vsel %vm488, %v2480, 0
    %v2494 = vsel %vm488, %v2481, 0
    %v2497 = vsel %vm501, %v2483, 0
    %2499 = vmatprep.subr.mxu0 0.0
    %2500 = vmatpush1.msra.mxu0 %v2482
    %2501 = vmatprep.subr.mxu0 0.0
    %2502 = vmatpush1.msra.mxu0 %v2497
    %2503 = vmatprep.subr.mxu0 0.0
    %2504 = vmatpush1.msra.mxu0 0.0
    %2505 = vmatprep.subr.mxu0 0.0
    %2506 = vmatpush1.msra.mxu0 0.0
    %2507 = vmatprep.subr.mxu0 0.0
    %2508 = vmatpush1.msra.mxu0 0.0
    %2509 = vmatprep.subr.mxu0 0.0
    %2510 = vmatpush1.msra.mxu0 0.0
    %2511 = vmatprep.subr.mxu0 0.0
    %2512 = vmatpush1.msra.mxu0 0.0
    %2513 = vmatprep.subr.mxu0 0.0
    %2514 = vmatpush1.msra.mxu0 0.0
    %2515 = vmatprep.subr.mxu0 0.0
    %2516 = vmatpush1.msra.mxu0 0.0
    %2517 = vmatprep.subr.mxu0 0.0
    %2518 = vmatpush1.msra.mxu0 0.0
    %2519 = vmatprep.subr.mxu0 0.0
    %2520 = vmatpush1.msra.mxu0 0.0
    %2521 = vmatprep.subr.mxu0 0.0
    %2522 = vmatpush1.msra.mxu0 0.0
    %2523 = vmatprep.subr.mxu0 0.0
    %2524 = vmatpush1.msra.mxu0 0.0
    %2525 = vmatprep.subr.mxu0 0.0
    %2526 = vmatpush1.msra.mxu0 0.0
    %2527 = vmatprep.subr.mxu0 0.0
    %2528 = vmatpush1.msra.mxu0 0.0
    %2529 = vmatprep.subr.mxu0 0.0
    %2530 = vmatpush1.msra.mxu0 0.0
    %2531 = vmatprep.subr.mxu0 0.0
    %2532 = vmatpush1.msra.mxu0 0.0
    %2533 = vmatprep.subr.mxu0 0.0
    %2534 = vmatpush1.msra.mxu0 0.0
    %2535 = vmatprep.subr.mxu0 0.0
    %2536 = vmatpush1.msra.mxu0 0.0
    %2537 = vmatprep.subr.mxu0 0.0
    %2538 = vmatpush1.msra.mxu0 0.0
    %2539 = vmatprep.subr.mxu0 0.0
    %2540 = vmatpush1.msra.mxu0 0.0
    %2541 = vmatprep.subr.mxu0 0.0
    %2542 = vmatpush1.msra.mxu0 0.0
    %2543 = vmatprep.subr.mxu0 0.0
    %2544 = vmatpush1.msra.mxu0 0.0
    %2545 = vmatprep.subr.mxu0 0.0
    %2546 = vmatpush1.msra.mxu0 0.0
    %2547 = vmatprep.subr.mxu0 0.0
    %2548 = vmatpush1.msra.mxu0 0.0
    %2549 = vmatprep.subr.mxu0 0.0
    %2550 = vmatpush1.msra.mxu0 0.0
    %2551 = vmatprep.subr.mxu0 0.0
    %2552 = vmatpush1.msra.mxu0 0.0
    %2553 = vmatprep.subr.mxu0 0.0
    %2554 = vmatpush1.msra.mxu0 0.0
    %2555 = vmatprep.subr.mxu0 0.0
    %2556 = vmatpush1.msra.mxu0 0.0
    %2557 = vmatprep.subr.mxu0 0.0
    %2558 = vmatpush1.msra.mxu0 0.0
    %2559 = vmatprep.subr.mxu0 0.0
    %2560 = vmatpush1.msra.mxu0 0.0
    %2561 = vmatprep.subr.mxu0 0.0
    %2562 = vmatpush1.msra.mxu0 0.0
    %2563 = vmatprep.mubr.f32.mxu0 0.0
    %2564 = vmatmul.mubr.f32.gmra.mrb[0].mxu0 %v2485
    %v2565 = vpop.f32.mrb[0].mxu0
    %v2566 = vadd.f32 0.0, %v2565
    %v2567 = vpop.f32.mrb[0].mxu0
    %2568 = vmatprep.mubr.f32.mxu0 0.0
    %2569 = vmatmul.mubr.f32.gmra.mrb[0].mxu0 %v2488
    %v2570 = vpop.f32.mrb[0].mxu0
    %v2571 = vadd.f32 0.0, %v2570
    %v2572 = vpop.f32.mrb[0].mxu0
    %2573 = vmatprep.mubr.f32.mxu0 0.0
    %2574 = vmatmul.mubr.f32.gmra.mrb[0].mxu0 %v2491
    %v2575 = vpop.f32.mrb[0].mxu0
    %v2576 = vadd.f32 0.0, %v2575
    %v2577 = vpop.f32.mrb[0].mxu0
    %2578 = vmatprep.mubr.f32.mxu0 0.0
    %2579 = vmatmul.mubr.f32.gmra.mrb[0].mxu0 %v2494
    %v2580 = vpop.f32.mrb[0].mxu0
    %v2581 = vadd.f32 0.0, %v2580
    %v2582 = vpop.f32.mrb[0].mxu0
    %2583 = vdwg.mxu0
    %s2584 = scalar_lea.vmem %s27, 16
    %v2585 = vld [vmem:[%s2584] sm:$0xff]
    %v2586 = vld [vmem:[%s2584 + $0x8] sm:$0x3]
    %v2588 = vsel %vm501, %v2586, 0
    %2590 = vmatprep.subr.mxu0 0.0
    %2591 = vmatpush1.msra.mxu0 %v2585
    %2592 = vmatprep.subr.mxu0 0.0
    %2593 = vmatpush1.msra.mxu0 %v2588
    %2594 = vmatprep.subr.mxu0 0.0
    %2595 = vmatpush1.msra.mxu0 0.0
    %2596 = vmatprep.subr.mxu0 0.0
    %2597 = vmatpush1.msra.mxu0 0.0
    %2598 = vmatprep.subr.mxu0 0.0
    %2599 = vmatpush1.msra.mxu0 0.0
    %2600 = vmatprep.subr.mxu0 0.0
    %2601 = vmatpush1.msra.mxu0 0.0
    %2602 = vmatprep.subr.mxu0 0.0
    %2603 = vmatpush1.msra.mxu0 0.0
    %2604 = vmatprep.subr.mxu0 0.0
    %2605 = vmatpush1.msra.mxu0 0.0
    %2606 = vmatprep.subr.mxu0 0.0
    %2607 = vmatpush1.msra.mxu0 0.0
    %2608 = vmatprep.subr.mxu0 0.0
    %2609 = vmatpush1.msra.mxu0 0.0
    %2610 = vmatprep.subr.mxu0 0.0
    %2611 = vmatpush1.msra.mxu0 0.0
    %2612 = vmatprep.subr.mxu0 0.0
    %2613 = vmatpush1.msra.mxu0 0.0
    %2614 = vmatprep.subr.mxu0 0.0
    %2615 = vmatpush1.msra.mxu0 0.0
    %2616 = vmatprep.subr.mxu0 0.0
    %2617 = vmatpush1.msra.mxu0 0.0
    %2618 = vmatprep.subr.mxu0 0.0
    %2619 = vmatpush1.msra.mxu0 0.0
    %2620 = vmatprep.subr.mxu0 0.0
    %2621 = vmatpush1.msra.mxu0 0.0
    %2622 = vmatprep.subr.mxu0 0.0
    %2623 = vmatpush1.msra.mxu0 0.0
    %2624 = vmatprep.subr.mxu0 0.0
    %2625 = vmatpush1.msra.mxu0 0.0
    %2626 = vmatprep.subr.mxu0 0.0
    %2627 = vmatpush1.msra.mxu0 0.0
    %2628 = vmatprep.subr.mxu0 0.0
    %2629 = vmatpush1.msra.mxu0 0.0
    %2630 = vmatprep.subr.mxu0 0.0
    %2631 = vmatpush1.msra.mxu0 0.0
    %2632 = vmatprep.subr.mxu0 0.0
    %2633 = vmatpush1.msra.mxu0 0.0
    %2634 = vmatprep.subr.mxu0 0.0
    %2635 = vmatpush1.msra.mxu0 0.0
    %2636 = vmatprep.subr.mxu0 0.0
    %2637 = vmatpush1.msra.mxu0 0.0
    %2638 = vmatprep.subr.mxu0 0.0
    %2639 = vmatpush1.msra.mxu0 0.0
    %2640 = vmatprep.subr.mxu0 0.0
    %2641 = vmatpush1.msra.mxu0 0.0
    %2642 = vmatprep.subr.mxu0 0.0
    %2643 = vmatpush1.msra.mxu0 0.0
    %2644 = vmatprep.subr.mxu0 0.0
    %2645 = vmatpush1.msra.mxu0 0.0
    %2646 = vmatprep.subr.mxu0 0.0
    %2647 = vmatpush1.msra.mxu0 0.0
    %2648 = vmatprep.subr.mxu0 0.0
    %2649 = vmatpush1.msra.mxu0 0.0
    %2650 = vmatprep.subr.mxu0 0.0
    %2651 = vmatpush1.msra.mxu0 0.0
    %2652 = vmatprep.subr.mxu0 0.0
    %2653 = vmatpush1.msra.mxu0 0.0
    %2654 = vmatprep.mubr.f32.mxu0 0.0
    %2655 = vmatmul.mubr.f32.gmra.mrb[0].mxu0 %v2485
    %v2656 = vpop.f32.mrb[0].mxu0
    %v2657 = vadd.f32 0.0, %v2656
    %v2658 = vpop.f32.mrb[0].mxu0
    %2659 = vmatprep.mubr.f32.mxu0 0.0
    %2660 = vmatmul.mubr.f32.gmra.mrb[0].mxu0 %v2488
    %v2661 = vpop.f32.mrb[0].mxu0
    %v2662 = vadd.f32 0.0, %v2661
    %v2663 = vpop.f32.mrb[0].mxu0
    %2664 = vmatprep.mubr.f32.mxu0 0.0
    %2665 = vmatmul.mubr.f32.gmra.mrb[0].mxu0 %v2491
    %v2666 = vpop.f32.mrb[0].mxu0
    %v2667 = vadd.f32 0.0, %v2666
    %v2668 = vpop.f32.mrb[0].mxu0
    %2669 = vmatprep.mubr.f32.mxu0 0.0
    %2670 = vmatmul.mubr.f32.gmra.mrb[0].mxu0 %v2494
    %v2671 = vpop.f32.mrb[0].mxu0
    %v2672 = vadd.f32 0.0, %v2671
    %v2673 = vpop.f32.mrb[0].mxu0
    %2674 = vdwg.mxu0
    %s2675 = scalar_lea.vmem %s27, 32
    %v2676 = vld [vmem:[%s2675] sm:$0xff]
    %v2677 = vld [vmem:[%s2675 + $0x8] sm:$0x3]
    %v2679 = vsel %vm501, %v2677, 0
    %2681 = vmatprep.subr.mxu0 0.0
    %2682 = vmatpush1.msra.mxu0 %v2676
    %2683 = vmatprep.subr.mxu0 0.0
    %2684 = vmatpush1.msra.mxu0 %v2679
    %2685 = vmatprep.subr.mxu0 0.0
    %2686 = vmatpush1.msra.mxu0 0.0
    %2687 = vmatprep.subr.mxu0 0.0
    %2688 = vmatpush1.msra.mxu0 0.0
    %2689 = vmatprep.subr.mxu0 0.0
    %2690 = vmatpush1.msra.mxu0 0.0
    %2691 = vmatprep.subr.mxu0 0.0
    %2692 = vmatpush1.msra.mxu0 0.0
    %2693 = vmatprep.subr.mxu0 0.0
    %2694 = vmatpush1.msra.mxu0 0.0
    %2695 = vmatprep.subr.mxu0 0.0
    %2696 = vmatpush1.msra.mxu0 0.0
    %2697 = vmatprep.subr.mxu0 0.0
    %2698 = vmatpush1.msra.mxu0 0.0
    %2699 = vmatprep.subr.mxu0 0.0
    %2700 = vmatpush1.msra.mxu0 0.0
    %2701 = vmatprep.subr.mxu0 0.0
    %2702 = vmatpush1.msra.mxu0 0.0
    %2703 = vmatprep.subr.mxu0 0.0
    %2704 = vmatpush1.msra.mxu0 0.0
    %2705 = vmatprep.subr.mxu0 0.0
    %2706 = vmatpush1.msra.mxu0 0.0
    %2707 = vmatprep.subr.mxu0 0.0
    %2708 = vmatpush1.msra.mxu0 0.0
    %2709 = vmatprep.subr.mxu0 0.0
    %2710 = vmatpush1.msra.mxu0 0.0
    %2711 = vmatprep.subr.mxu0 0.0
    %2712 = vmatpush1.msra.mxu0 0.0
    %2713 = vmatprep.subr.mxu0 0.0
    %2714 = vmatpush1.msra.mxu0 0.0
    %2715 = vmatprep.subr.mxu0 0.0
    %2716 = vmatpush1.msra.mxu0 0.0
    %2717 = vmatprep.subr.mxu0 0.0
    %2718 = vmatpush1.msra.mxu0 0.0
    %2719 = vmatprep.subr.mxu0 0.0
    %2720 = vmatpush1.msra.mxu0 0.0
    %2721 = vmatprep.subr.mxu0 0.0
    %2722 = vmatpush1.msra.mxu0 0.0
    %2723 = vmatprep.subr.mxu0 0.0
    %2724 = vmatpush1.msra.mxu0 0.0
    %2725 = vmatprep.subr.mxu0 0.0
    %2726 = vmatpush1.msra.mxu0 0.0
    %2727 = vmatprep.subr.mxu0 0.0
    %2728 = vmatpush1.msra.mxu0 0.0
    %2729 = vmatprep.subr.mxu0 0.0
    %2730 = vmatpush1.msra.mxu0 0.0
    %2731 = vmatprep.subr.mxu0 0.0
    %2732 = vmatpush1.msra.mxu0 0.0
    %2733 = vmatprep.subr.mxu0 0.0
    %2734 = vmatpush1.msra.mxu0 0.0
    %2735 = vmatprep.subr.mxu0 0.0
    %2736 = vmatpush1.msra.mxu0 0.0
    %2737 = vmatprep.subr.mxu0 0.0
    %2738 = vmatpush1.msra.mxu0 0.0
    %2739 = vmatprep.subr.mxu0 0.0
    %2740 = vmatpush1.msra.mxu0 0.0
    %2741 = vmatprep.subr.mxu0 0.0
    %2742 = vmatpush1.msra.mxu0 0.0
    %2743 = vmatprep.subr.mxu0 0.0
    %2744 = vmatpush1.msra.mxu0 0.0
    %2745 = vmatprep.mubr.f32.mxu0 0.0
    %2746 = vmatmul.mubr.f32.gmra.mrb[0].mxu0 %v2485
    %v2747 = vpop.f32.mrb[0].mxu0
    %v2748 = vadd.f32 0.0, %v2747
    %v2749 = vpop.f32.mrb[0].mxu0
    %2750 = vmatprep.mubr.f32.mxu0 0.0
    %2751 = vmatmul.mubr.f32.gmra.mrb[0].mxu0 %v2488
    %v2752 = vpop.f32.mrb[0].mxu0
    %v2753 = vadd.f32 0.0, %v2752
    %v2754 = vpop.f32.mrb[0].mxu0
    %2755 = vmatprep.mubr.f32.mxu0 0.0
    %2756 = vmatmul.mubr.f32.gmra.mrb[0].mxu0 %v2491
    %v2757 = vpop.f32.mrb[0].mxu0
    %v2758 = vadd.f32 0.0, %v2757
    %v2759 = vpop.f32.mrb[0].mxu0
    %2760 = vmatprep.mubr.f32.mxu0 0.0
    %2761 = vmatmul.mubr.f32.gmra.mrb[0].mxu0 %v2494
    %v2762 = vpop.f32.mrb[0].mxu0
    %v2763 = vadd.f32 0.0, %v2762
    %v2764 = vpop.f32.mrb[0].mxu0
    %2765 = vdwg.mxu0
    %v2770 = vrot.slane %v2566, 7
    %v2771 = vrot.slane %v2571, 7
    %v2772 = vsel %vm776, %v2770, %v2771
    %v2773 = vrot.slane %v2576, 7
    %v2774 = vsel %vm776, %v2771, %v2773
    %v2775 = vrot.slane %v2581, 7
    %v2776 = vsel %vm776, %v2773, %v2775
    %v2781 = vsel %vm776, 0.0, %v2770
    %v2782 = vmul.f32 %v2781, %v792
    %v2783 = vmul.f32 %v2772, %v797
    %v2784 = vmul.f32 %v2774, %v802
    %v2785 = vmul.f32 %v2776, %v807
    %v2790 = vrot.slane %v2748, 1
    %v2791 = vrot.slane %v2753, 1
    %v2792 = vsel %vm817, %v2790, %v2791
    %v2793 = vrot.slane %v2758, 1
    %v2794 = vsel %vm817, %v2791, %v2793
    %v2795 = vrot.slane %v2763, 1
    %v2796 = vsel %vm817, %v2793, %v2795
    %v2801 = vsel %vm817, %v2795, 0.0
    %v2802 = vmul.f32 %v2792, %v832
    %v2803 = vmul.f32 %v2794, %v836
    %v2804 = vmul.f32 %v2796, %v840
    %v2805 = vmul.f32 %v2801, %v844
    %v2806 = vadd.f32 %v2782, %v2657
    %v2807 = vadd.f32 %v2783, %v2662
    %v2808 = vadd.f32 %v2784, %v2667
    %v2809 = vadd.f32 %v2785, %v2672
    %v2810 = vadd.f32 %v2806, %v2802
    %v2811 = vadd.f32 %v2807, %v2803
    %v2812 = vadd.f32 %v2808, %v2804
    %v2813 = vadd.f32 %v2809, %v2805
    %v2814 = vlaneseq
    %v2815 = vshrl.u32 %v2814, 7
    %v2816 = vsub.s32 0, %v2815
    %v2817 = vrot.slane %v1893, %v2816
    %v2818 = vmul.f32 %v2810, %v2817
    %v2819 = vmul.f32 %v2811, %v2817
    %v2820 = vmul.f32 %v2812, %v2817
    %v2821 = vmul.f32 %v2813, %v2817
    %v2822 = vlaneseq
    %v2823 = vshrl.u32 %v2822, 7
    %v2824 = vsub.s32 1, %v2823
    %v2825 = vrot.slane %v1893, %v2824
    %v2826 = vadd.f32 %v2818, %v2825
    %v2827 = vadd.f32 %v2819, %v2825
    %v2828 = vadd.f32 %v2820, %v2825
    %v2829 = vadd.f32 %v2821, %v2825
    %v2830 = vmax.f32 %v2826, 0.0
    %v2831 = vmax.f32 %v2827, 0.0
    %v2832 = vmax.f32 %v2828, 0.0
    %v2833 = vmax.f32 %v2829, 0.0
    %2834 = vmatprep.subr.mxu0 0.0
    %2835 = vmatpush1.msra.mxu0 %v2830
    %2836 = vmatprep.subr.mxu0 0.0
    %2837 = vmatpush1.msra.mxu0 %v2831
    %2838 = vmatprep.subr.mxu0 0.0
    %2839 = vmatpush1.msra.mxu0 %v2832
    %2840 = vmatprep.subr.mxu0 0.0
    %2841 = vmatpush1.msra.mxu0 %v2833
    %2842 = vmatprep.subr.mxu0 0.0
    %2843 = vmatpush1.msra.mxu0 0.0
    %2844 = vmatprep.subr.mxu0 0.0
    %2845 = vmatpush1.msra.mxu0 0.0
    %2846 = vmatprep.subr.mxu0 0.0
    %2847 = vmatpush1.msra.mxu0 0.0
    %2848 = vmatprep.subr.mxu0 0.0
    %2849 = vmatpush1.msra.mxu0 0.0
    %2850 = vmatprep.subr.mxu0 0.0
    %2851 = vmatpush1.msra.mxu0 0.0
    %2852 = vmatprep.subr.mxu0 0.0
    %2853 = vmatpush1.msra.mxu0 0.0
    %2854 = vmatprep.subr.mxu0 0.0
    %2855 = vmatpush1.msra.mxu0 0.0
    %2856 = vmatprep.subr.mxu0 0.0
    %2857 = vmatpush1.msra.mxu0 0.0
    %2858 = vmatprep.subr.mxu0 0.0
    %2859 = vmatpush1.msra.mxu0 0.0
    %2860 = vmatprep.subr.mxu0 0.0
    %2861 = vmatpush1.msra.mxu0 0.0
    %2862 = vmatprep.subr.mxu0 0.0
    %2863 = vmatpush1.msra.mxu0 0.0
    %2864 = vmatprep.subr.mxu0 0.0
    %2865 = vmatpush1.msra.mxu0 0.0
    %2866 = vmatprep.subr.mxu0 0.0
    %2867 = vmatpush1.msra.mxu0 0.0
    %2868 = vmatprep.subr.mxu0 0.0
    %2869 = vmatpush1.msra.mxu0 0.0
    %2870 = vmatprep.subr.mxu0 0.0
    %2871 = vmatpush1.msra.mxu0 0.0
    %2872 = vmatprep.subr.mxu0 0.0
    %2873 = vmatpush1.msra.mxu0 0.0
    %2874 = vmatprep.subr.mxu0 0.0
    %2875 = vmatpush1.msra.mxu0 0.0
    %2876 = vmatprep.subr.mxu0 0.0
    %2877 = vmatpush1.msra.mxu0 0.0
    %2878 = vmatprep.subr.mxu0 0.0
    %2879 = vmatpush1.msra.mxu0 0.0
    %2880 = vmatprep.subr.mxu0 0.0
    %2881 = vmatpush1.msra.mxu0 0.0
    %2882 = vmatprep.subr.mxu0 0.0
    %2883 = vmatpush1.msra.mxu0 0.0
    %2884 = vmatprep.subr.mxu0 0.0
    %2885 = vmatpush1.msra.mxu0 0.0
    %2886 = vmatprep.subr.mxu0 0.0
    %2887 = vmatpush1.msra.mxu0 0.0
    %2888 = vmatprep.subr.mxu0 0.0
    %2889 = vmatpush1.msra.mxu0 0.0
    %2890 = vmatprep.subr.mxu0 0.0
    %2891 = vmatpush1.msra.mxu0 0.0
    %2892 = vmatprep.subr.mxu0 0.0
    %2893 = vmatpush1.msra.mxu0 0.0
    %2894 = vmatprep.subr.mxu0 0.0
    %2895 = vmatpush1.msra.mxu0 0.0
    %2896 = vmatprep.subr.mxu0 0.0
    %2897 = vmatpush1.msra.mxu0 0.0
    %2898 = vmatprep.mubr.f32.mxu0 0.0
    %2899 = vmatmul.mubr.f32.gmra.mrb[0].mxu0 %v1750
    %v2900 = vpop.f32.mrb[0].mxu0
    %v2901 = vadd.f32 0.0, %v2900
    %v2902 = vpop.f32.mrb[0].mxu0
    %2903 = vdwg.mxu0
    %v2904 = vadd.f32 %v1889, %v2901
    %v2905 = vld [vmem:[%s35] sm:$0x3]
    %v2906 = vld [vmem:[%s39] sm:$0x3]
    %v2907 = vld [vmem:[%s31] sm:$0xff]
    %v2908 = vld [vmem:[%s31 + $0x8] sm:$0xf]
    %v2909 = vld [vmem:[%s31 + $0xc] sm:$0xff]
    %v2910 = vld [vmem:[%s31 + $0x14] sm:$0xf]
    %v2911 = vld [vmem:[%s31 + $0x18] sm:$0xff]
    %v2912 = vld [vmem:[%s31 + $0x20] sm:$0xf]
    %v2913 = vld [vmem:[%s31 + $0x24] sm:$0xff]
    %v2914 = vld [vmem:[%s31 + $0x2c] sm:$0xf]
    %v2915 = vld [vmem:[%s33] sm:$0xf]
    %v2916 = vld [vmem:[%s33 + $0x4] sm:$0xf]
    %v2917 = vld [vmem:[%s33 + $0x8] sm:$0xf]
    %v2918 = vld [vmem:[%s33 + $0xc] sm:$0xf]
    %v2919 = vld [vmem:[%s33 + $0x10] sm:$0xf]
    %v2920 = vld [vmem:[%s33 + $0x14] sm:$0xf]
    %v2921 = vld [vmem:[%s33 + $0x18] sm:$0xf]
    %v2922 = vld [vmem:[%s33 + $0x1c] sm:$0xf]
    %v2923 = vld [vmem:[%s33 + $0x20] sm:$0xf]
    %v2924 = vld [vmem:[%s33 + $0x24] sm:$0xf]
    %v2925 = vld [vmem:[%s33 + $0x28] sm:$0xf]
    %v2926 = vld [vmem:[%s33 + $0x2c] sm:$0xf]
    %v2927 = vld [vmem:[%s33 + $0x30] sm:$0xf]
    %v2928 = vld [vmem:[%s33 + $0x34] sm:$0xf]
    %v2929 = vld [vmem:[%s33 + $0x38] sm:$0xf]
    %v2930 = vld [vmem:[%s33 + $0x3c] sm:$0xf]
    %v2931 = vld [vmem:[%s33 + $0x40] sm:$0xf]
    %v2932 = vld [vmem:[%s33 + $0x44] sm:$0xf]
    %v2933 = vld [vmem:[%s33 + $0x48] sm:$0xf]
    %v2934 = vld [vmem:[%s33 + $0x4c] sm:$0xf]
    %v2935 = vld [vmem:[%s33 + $0x50] sm:$0xf]
    %v2936 = vld [vmem:[%s33 + $0x54] sm:$0xf]
    %v2937 = vld [vmem:[%s33 + $0x58] sm:$0xf]
    %v2938 = vld [vmem:[%s33 + $0x5c] sm:$0xf]
    %v2939 = vld [vmem:[%s33 + $0x60] sm:$0xf]
    %v2940 = vld [vmem:[%s33 + $0x64] sm:$0xf]
    %v2941 = vld [vmem:[%s33 + $0x68] sm:$0xf]
    %v2942 = vld [vmem:[%s33 + $0x6c] sm:$0xf]
    %v2943 = vld [vmem:[%s33 + $0x70] sm:$0xf]
    %v2944 = vld [vmem:[%s33 + $0x74] sm:$0xf]
    %v2945 = vld [vmem:[%s33 + $0x78] sm:$0xf]
    %v2946 = vld [vmem:[%s33 + $0x7c] sm:$0xf]
    %v2947 = vld [vmem:[%s33 + $0x80] sm:$0xf]
    %v2948 = vld [vmem:[%s33 + $0x84] sm:$0xf]
    %v2949 = vld [vmem:[%s33 + $0x88] sm:$0xf]
    %v2950 = vld [vmem:[%s33 + $0x8c] sm:$0xf]
    %v2951 = vld [vmem:[%s33 + $0x90] sm:$0xf]
    %v2952 = vld [vmem:[%s33 + $0x94] sm:$0xf]
    %v2953 = vld [vmem:[%s33 + $0x98] sm:$0xf]
    %v2954 = vld [vmem:[%s33 + $0x9c] sm:$0xf]
    %v2955 = vld [vmem:[%s33 + $0xa0] sm:$0xf]
    %v2956 = vld [vmem:[%s33 + $0xa4] sm:$0xf]
    %v2957 = vld [vmem:[%s33 + $0xa8] sm:$0xf]
    %v2958 = vld [vmem:[%s33 + $0xac] sm:$0xf]
    %v2959 = vld [vmem:[%s33 + $0xb0] sm:$0xf]
    %v2968 = vunpack.c.l.b16 %v2907
    %v2969 = vunpack.c.h.b16 %v2907
    %v2970 = vunpack.c.l.b16 %v2908
    %v2971 = vunpack.c.l.b16 %v2909
    %v2972 = vunpack.c.h.b16 %v2909
    %v2973 = vunpack.c.l.b16 %v2910
    %v2974 = vunpack.c.l.b16 %v2911
    %v2975 = vunpack.c.h.b16 %v2911
    %v2976 = vunpack.c.l.b16 %v2912
    %v2977 = vunpack.c.l.b16 %v2913
    %v2978 = vunpack.c.h.b16 %v2913
    %v2979 = vunpack.c.l.b16 %v2914
    %v2980 = vpack.c.b16 %v2971, %v2968
    %v2981 = vpack.c.b16 %v2972, %v2969
    %v2982 = vpack.c.b16 %v2973, %v2970
    %v2983 = vpack.c.b16 %v2977, %v2974
    %v2984 = vpack.c.b16 %v2978, %v2975
    %v2985 = vpack.c.b16 %v2979, %v2976
    %v3035 = vunpack.c.l.b16 %v2915
    %v3036 = vunpack.c.l.b16 %v2916
    %v3037 = vunpack.c.l.b16 %v2917
    %v3038 = vunpack.c.l.b16 %v2918
    %v3039 = vunpack.c.l.b16 %v2919
    %v3040 = vunpack.c.l.b16 %v2920
    %v3041 = vunpack.c.l.b16 %v2921
    %v3042 = vunpack.c.l.b16 %v2922
    %v3043 = vunpack.c.l.b16 %v2923
    %v3044 = vunpack.c.l.b16 %v2924
    %v3045 = vunpack.c.l.b16 %v2925
    %v3046 = vunpack.c.l.b16 %v2926
    %v3047 = vunpack.c.l.b16 %v2927
    %v3048 = vunpack.c.l.b16 %v2928
    %v3049 = vunpack.c.l.b16 %v2929
    %v3050 = vunpack.c.l.b16 %v2930
    %v3051 = vunpack.c.l.b16 %v2931
    %v3052 = vunpack.c.l.b16 %v2932
    %v3053 = vunpack.c.l.b16 %v2933
    %v3054 = vunpack.c.l.b16 %v2934
    %v3055 = vunpack.c.l.b16 %v2935
    %v3056 = vunpack.c.l.b16 %v2936
    %v3057 = vunpack.c.l.b16 %v2937
    %v3058 = vunpack.c.l.b16 %v2938
    %v3059 = vunpack.c.l.b16 %v2939
    %v3060 = vunpack.c.l.b16 %v2940
    %v3061 = vunpack.c.l.b16 %v2941
    %v3062 = vunpack.c.l.b16 %v2942
    %v3063 = vunpack.c.l.b16 %v2943
    %v3064 = vunpack.c.l.b16 %v2944
    %v3065 = vunpack.c.l.b16 %v2945
    %v3066 = vunpack.c.l.b16 %v2946
    %v3067 = vunpack.c.l.b16 %v2947
    %v3068 = vunpack.c.l.b16 %v2948
    %v3069 = vunpack.c.l.b16 %v2949
    %v3070 = vunpack.c.l.b16 %v2950
    %v3071 = vunpack.c.l.b16 %v2951
    %v3072 = vunpack.c.l.b16 %v2952
    %v3073 = vunpack.c.l.b16 %v2953
    %v3074 = vunpack.c.l.b16 %v2954
    %v3075 = vunpack.c.l.b16 %v2955
    %v3076 = vunpack.c.l.b16 %v2956
    %v3077 = vunpack.c.l.b16 %v2957
    %v3078 = vunpack.c.l.b16 %v2958
    %v3079 = vunpack.c.l.b16 %v2959
    %v3080 = vpack.c.b16 %v3036, %v3035
    %v3081 = vpack.c.b16 %v3038, %v3037
    %v3082 = vpack.c.b16 %v3040, %v3039
    %v3083 = vpack.c.b16 %v3042, %v3041
    %v3084 = vpack.c.b16 %v3044, %v3043
    %v3085 = vpack.c.b16 %v3046, %v3045
    %v3086 = vpack.c.b16 %v3048, %v3047
    %v3087 = vpack.c.b16 %v3050, %v3049
    %v3088 = vpack.c.b16 %v3052, %v3051
    %v3089 = vpack.c.b16 %v3054, %v3053
    %v3090 = vpack.c.b16 %v3056, %v3055
    %v3091 = vpack.c.b16 %v3058, %v3057
    %v3092 = vpack.c.b16 %v3060, %v3059
    %v3093 = vpack.c.b16 %v3062, %v3061
    %v3094 = vpack.c.b16 %v3064, %v3063
    %v3095 = vpack.c.b16 %v3066, %v3065
    %v3096 = vpack.c.b16 %v3068, %v3067
    %v3097 = vpack.c.b16 %v3070, %v3069
    %v3098 = vpack.c.b16 %v3072, %v3071
    %v3099 = vpack.c.b16 %v3074, %v3073
    %v3100 = vpack.c.b16 %v3076, %v3075
    %v3101 = vpack.c.b16 %v3078, %v3077
    %v3102 = vpack.c.b16 %v3079, %v3079
    %vm3125 = vcmask 850944
    %v3127 = vsel %vm3125, %v2982, 0
    %v3130 = vsel %vm3125, %v2985, 0
    %v3133 = vsel %vm2311, %v3102, 0
    %3135 = vmatprep.subr.bf16.mxu0 0
    %3136 = vmatpush1.bf16.msra.mxu0 %v3080
    %3137 = vmatprep.subr.bf16.mxu0 0
    %3138 = vmatpush1.bf16.msra.mxu0 %v3081
    %3139 = vmatprep.subr.bf16.mxu0 0
    %3140 = vmatpush1.bf16.msra.mxu0 %v3082
    %3141 = vmatprep.subr.bf16.mxu0 0
    %3142 = vmatpush1.bf16.msra.mxu0 %v3083
    %3143 = vmatprep.subr.bf16.mxu0 0
    %3144 = vmatpush1.bf16.msra.mxu0 %v3084
    %3145 = vmatprep.subr.bf16.mxu0 0
    %3146 = vmatpush1.bf16.msra.mxu0 %v3085
    %3147 = vmatprep.subr.bf16.mxu0 0
    %3148 = vmatpush1.bf16.msra.mxu0 %v3086
    %3149 = vmatprep.subr.bf16.mxu0 0
    %3150 = vmatpush1.bf16.msra.mxu0 %v3087
    %3151 = vmatprep.subr.bf16.mxu0 0
    %3152 = vmatpush1.bf16.msra.mxu0 %v3088
    %3153 = vmatprep.subr.bf16.mxu0 0
    %3154 = vmatpush1.bf16.msra.mxu0 %v3089
    %3155 = vmatprep.subr.bf16.mxu0 0
    %3156 = vmatpush1.bf16.msra.mxu0 %v3090
    %3157 = vmatprep.subr.bf16.mxu0 0
    %3158 = vmatpush1.bf16.msra.mxu0 %v3091
    %3159 = vmatprep.subr.bf16.mxu0 0
    %3160 = vmatpush1.bf16.msra.mxu0 %v3092
    %3161 = vmatprep.subr.bf16.mxu0 0
    %3162 = vmatpush1.bf16.msra.mxu0 %v3093
    %3163 = vmatprep.subr.bf16.mxu0 0
    %3164 = vmatpush1.bf16.msra.mxu0 %v3094
    %3165 = vmatprep.subr.bf16.mxu0 0
    %3166 = vmatpush1.bf16.msra.mxu0 %v3095
    %3167 = vmatprep.mubr.bf16.mxu0 %v2981
    %3168 = vmatmul.mubr.bf16.gmra.mrb[0].mxu0 %v2980
    %v3169 = vpop.f32.mrb[0].mxu0
    %v3170 = vadd.f32 0.0, %v3169
    %v3171 = vpop.f32.mrb[0].mxu0
    %v3172 = vpop.f32.mrb[0].mxu0
    %v3173 = vadd.f32 0.0, %v3172
    %v3174 = vpop.f32.mrb[0].mxu0
    %3175 = vmatprep.mubr.bf16.mxu0 %v2984
    %3176 = vmatmul.mubr.bf16.gmra.mrb[0].mxu0 %v2983
    %v3177 = vpop.f32.mrb[0].mxu0
    %v3178 = vadd.f32 0.0, %v3177
    %v3179 = vpop.f32.mrb[0].mxu0
    %v3180 = vpop.f32.mrb[0].mxu0
    %v3181 = vadd.f32 0.0, %v3180
    %v3182 = vpop.f32.mrb[0].mxu0
    %3183 = vdwg.mxu0
    %3184 = vmatprep.subr.bf16.mxu0 0
    %3185 = vmatpush1.bf16.msra.mxu0 %v3096
    %3186 = vmatprep.subr.bf16.mxu0 0
    %3187 = vmatpush1.bf16.msra.mxu0 %v3097
    %3188 = vmatprep.subr.bf16.mxu0 0
    %3189 = vmatpush1.bf16.msra.mxu0 %v3098
    %3190 = vmatprep.subr.bf16.mxu0 0
    %3191 = vmatpush1.bf16.msra.mxu0 %v3099
    %3192 = vmatprep.subr.bf16.mxu0 0
    %3193 = vmatpush1.bf16.msra.mxu0 %v3100
    %3194 = vmatprep.subr.bf16.mxu0 0
    %3195 = vmatpush1.bf16.msra.mxu0 %v3101
    %3196 = vmatprep.subr.bf16.mxu0 0
    %3197 = vmatpush1.bf16.msra.mxu0 %v3133
    %3198 = vmatprep.subr.bf16.mxu0 0
    %3199 = vmatpush1.bf16.msra.mxu0 0
    %3200 = vmatprep.subr.bf16.mxu0 0
    %3201 = vmatpush1.bf16.msra.mxu0 0
    %3202 = vmatprep.subr.bf16.mxu0 0
    %3203 = vmatpush1.bf16.msra.mxu0 0
    %3204 = vmatprep.subr.bf16.mxu0 0
    %3205 = vmatpush1.bf16.msra.mxu0 0
    %3206 = vmatprep.subr.bf16.mxu0 0
    %3207 = vmatpush1.bf16.msra.mxu0 0
    %3208 = vmatprep.subr.bf16.mxu0 0
    %3209 = vmatpush1.bf16.msra.mxu0 0
    %3210 = vmatprep.subr.bf16.mxu0 0
    %3211 = vmatpush1.bf16.msra.mxu0 0
    %3212 = vmatprep.subr.bf16.mxu0 0
    %3213 = vmatpush1.bf16.msra.mxu0 0
    %3214 = vmatprep.subr.bf16.mxu0 0
    %3215 = vmatpush1.bf16.msra.mxu0 0
    %3216 = vmatprep.mubr.bf16.mxu0 0
    %3217 = vmatmul.mubr.bf16.gmra.mrb[0].mxu0 %v3127
    %v3218 = vpop.f32.mrb[0].mxu0
    %v3219 = vadd.f32 %v3170, %v3218
    %v3220 = vpop.f32.mrb[0].mxu0
    %v3221 = vpop.f32.mrb[0].mxu0
    %v3222 = vadd.f32 %v3173, %v3221
    %v3223 = vpop.f32.mrb[0].mxu0
    %3224 = vmatprep.mubr.bf16.mxu0 0
    %3225 = vmatmul.mubr.bf16.gmra.mrb[0].mxu0 %v3130
    %v3226 = vpop.f32.mrb[0].mxu0
    %v3227 = vadd.f32 %v3178, %v3226
    %v3228 = vpop.f32.mrb[0].mxu0
    %v3229 = vpop.f32.mrb[0].mxu0
    %v3230 = vadd.f32 %v3181, %v3229
    %v3231 = vpop.f32.mrb[0].mxu0
    %3232 = vdwg.mxu0
    %v3233 = vlaneseq
    %v3234 = vshrl.u32 %v3233, 7
    %v3235 = vsub.s32 0, %v3234
    %v3236 = vrot.slane %v2905, %v3235
    %v3237 = vmul.f32 %v3219, %v3236
    %v3238 = vmul.f32 %v3222, %v3236
    %v3239 = vmul.f32 %v3227, %v3236
    %v3240 = vmul.f32 %v3230, %v3236
    %v3241 = vlaneseq
    %v3242 = vshrl.u32 %v3241, 7
    %v3243 = vsub.s32 1, %v3242
    %v3244 = vrot.slane %v2905, %v3243
    %v3245 = vadd.f32 %v3237, %v3244
    %v3246 = vadd.f32 %v3238, %v3244
    %v3247 = vadd.f32 %v3239, %v3244
    %v3248 = vadd.f32 %v3240, %v3244
    %v3249 = vmax.f32 %v3245, 0.0
    %v3250 = vmax.f32 %v3246, 0.0
    %v3251 = vmax.f32 %v3247, 0.0
    %v3252 = vmax.f32 %v3248, 0.0
    %v3253 = vld [vmem:[%s37] sm:$0xff]
    %v3254 = vld [vmem:[%s37 + $0x8] sm:$0xff]
    %v3255 = vld [vmem:[%s37 + $0x10] sm:$0xff]
    %v3256 = vld [vmem:[%s37 + $0x18] sm:$0xff]
    %v3257 = vld [vmem:[%s37 + $0x20] sm:$0xff]
    %v3258 = vld [vmem:[%s37 + $0x28] sm:$0xff]
    %v3259 = vld [vmem:[%s37 + $0x30] sm:$0xff]
    %v3260 = vld [vmem:[%s37 + $0x38] sm:$0xff]
    %v3261 = vld [vmem:[%s37 + $0x40] sm:$0xff]
    %v3262 = vld [vmem:[%s37 + $0x48] sm:$0xff]
    %vm3263 = vcmask 654336
    %v3265 = vsel %vm3263, %v3249, 0
    %v3268 = vsel %vm3263, %v3250, 0
    %v3271 = vsel %vm3263, %v3251, 0
    %v3274 = vsel %vm3263, %v3252, 0
    %3276 = vmatprep.subr.mxu0 0.0
    %3277 = vmatpush1.msra.mxu0 %v3253
    %3278 = vmatprep.subr.mxu0 0.0
    %3279 = vmatpush1.msra.mxu0 %v3254
    %3280 = vmatprep.subr.mxu0 0.0
    %3281 = vmatpush1.msra.mxu0 %v3255
    %3282 = vmatprep.subr.mxu0 0.0
    %3283 = vmatpush1.msra.mxu0 %v3256
    %3284 = vmatprep.subr.mxu0 0.0
    %3285 = vmatpush1.msra.mxu0 %v3257
    %3286 = vmatprep.subr.mxu0 0.0
    %3287 = vmatpush1.msra.mxu0 %v3258
    %3288 = vmatprep.subr.mxu0 0.0
    %3289 = vmatpush1.msra.mxu0 %v3259
    %3290 = vmatprep.subr.mxu0 0.0
    %3291 = vmatpush1.msra.mxu0 %v3260
    %3292 = vmatprep.subr.mxu0 0.0
    %3293 = vmatpush1.msra.mxu0 %v3261
    %3294 = vmatprep.subr.mxu0 0.0
    %3295 = vmatpush1.msra.mxu0 %v3262
    %3296 = vmatprep.subr.mxu0 0.0
    %3297 = vmatpush1.msra.mxu0 0.0
    %3298 = vmatprep.subr.mxu0 0.0
    %3299 = vmatpush1.msra.mxu0 0.0
    %3300 = vmatprep.subr.mxu0 0.0
    %3301 = vmatpush1.msra.mxu0 0.0
    %3302 = vmatprep.subr.mxu0 0.0
    %3303 = vmatpush1.msra.mxu0 0.0
    %3304 = vmatprep.subr.mxu0 0.0
    %3305 = vmatpush1.msra.mxu0 0.0
    %3306 = vmatprep.subr.mxu0 0.0
    %3307 = vmatpush1.msra.mxu0 0.0
    %3308 = vmatprep.subr.mxu0 0.0
    %3309 = vmatpush1.msra.mxu0 0.0
    %3310 = vmatprep.subr.mxu0 0.0
    %3311 = vmatpush1.msra.mxu0 0.0
    %3312 = vmatprep.subr.mxu0 0.0
    %3313 = vmatpush1.msra.mxu0 0.0
    %3314 = vmatprep.subr.mxu0 0.0
    %3315 = vmatpush1.msra.mxu0 0.0
    %3316 = vmatprep.subr.mxu0 0.0
    %3317 = vmatpush1.msra.mxu0 0.0
    %3318 = vmatprep.subr.mxu0 0.0
    %3319 = vmatpush1.msra.mxu0 0.0
    %3320 = vmatprep.subr.mxu0 0.0
    %3321 = vmatpush1.msra.mxu0 0.0
    %3322 = vmatprep.subr.mxu0 0.0
    %3323 = vmatpush1.msra.mxu0 0.0
    %3324 = vmatprep.subr.mxu0 0.0
    %3325 = vmatpush1.msra.mxu0 0.0
    %3326 = vmatprep.subr.mxu0 0.0
    %3327 = vmatpush1.msra.mxu0 0.0
    %3328 = vmatprep.subr.mxu0 0.0
    %3329 = vmatpush1.msra.mxu0 0.0
    %3330 = vmatprep.subr.mxu0 0.0
    %3331 = vmatpush1.msra.mxu0 0.0
    %3332 = vmatprep.subr.mxu0 0.0
    %3333 = vmatpush1.msra.mxu0 0.0
    %3334 = vmatprep.subr.mxu0 0.0
    %3335 = vmatpush1.msra.mxu0 0.0
    %3336 = vmatprep.subr.mxu0 0.0
    %3337 = vmatpush1.msra.mxu0 0.0
    %3338 = vmatprep.subr.mxu0 0.0
    %3339 = vmatpush1.msra.mxu0 0.0
    %3340 = vmatprep.mubr.f32.mxu0 0.0
    %3341 = vmatmul.mubr.f32.gmra.mrb[0].mxu0 %v3265
    %v3342 = vpop.f32.mrb[0].mxu0
    %v3343 = vadd.f32 0.0, %v3342
    %v3344 = vpop.f32.mrb[0].mxu0
    %3345 = vmatprep.mubr.f32.mxu0 0.0
    %3346 = vmatmul.mubr.f32.gmra.mrb[0].mxu0 %v3268
    %v3347 = vpop.f32.mrb[0].mxu0
    %v3348 = vadd.f32 0.0, %v3347
    %v3349 = vpop.f32.mrb[0].mxu0
    %3350 = vmatprep.mubr.f32.mxu0 0.0
    %3351 = vmatmul.mubr.f32.gmra.mrb[0].mxu0 %v3271
    %v3352 = vpop.f32.mrb[0].mxu0
    %v3353 = vadd.f32 0.0, %v3352
    %v3354 = vpop.f32.mrb[0].mxu0
    %3355 = vmatprep.mubr.f32.mxu0 0.0
    %3356 = vmatmul.mubr.f32.gmra.mrb[0].mxu0 %v3274
    %v3357 = vpop.f32.mrb[0].mxu0
    %v3358 = vadd.f32 0.0, %v3357
    %v3359 = vpop.f32.mrb[0].mxu0
    %3360 = vdwg.mxu0
    %v3361 = vlaneseq
    %v3362 = vshrl.u32 %v3361, 7
    %v3363 = vsub.s32 0, %v3362
    %v3364 = vrot.slane %v2906, %v3363
    %v3365 = vmul.f32 %v3343, %v3364
    %v3366 = vmul.f32 %v3348, %v3364
    %v3367 = vmul.f32 %v3353, %v3364
    %v3368 = vmul.f32 %v3358, %v3364
    %v3369 = vlaneseq
    %v3370 = vshrl.u32 %v3369, 7
    %v3371 = vsub.s32 1, %v3370
    %v3372 = vrot.slane %v2906, %v3371
    %v3373 = vadd.f32 %v3365, %v3372
    %v3374 = vadd.f32 %v3366, %v3372
    %v3375 = vadd.f32 %v3367, %v3372
    %v3376 = vadd.f32 %v3368, %v3372
    %v3377 = vmax.f32 %v3373, 0.0
    %v3378 = vmax.f32 %v3374, 0.0
    %v3379 = vmax.f32 %v3375, 0.0
    %v3380 = vmax.f32 %v3376, 0.0
    %3381 = vmatprep.subr.mxu0 0.0
    %3382 = vmatpush1.msra.mxu0 %v3377
    %3383 = vmatprep.subr.mxu0 0.0
    %3384 = vmatpush1.msra.mxu0 %v3378
    %3385 = vmatprep.subr.mxu0 0.0
    %3386 = vmatpush1.msra.mxu0 %v3379
    %3387 = vmatprep.subr.mxu0 0.0
    %3388 = vmatpush1.msra.mxu0 %v3380
    %3389 = vmatprep.subr.mxu0 0.0
    %3390 = vmatpush1.msra.mxu0 0.0
    %3391 = vmatprep.subr.mxu0 0.0
    %3392 = vmatpush1.msra.mxu0 0.0
    %3393 = vmatprep.subr.mxu0 0.0
    %3394 = vmatpush1.msra.mxu0 0.0
    %3395 = vmatprep.subr.mxu0 0.0
    %3396 = vmatpush1.msra.mxu0 0.0
    %3397 = vmatprep.subr.mxu0 0.0
    %3398 = vmatpush1.msra.mxu0 0.0
    %3399 = vmatprep.subr.mxu0 0.0
    %3400 = vmatpush1.msra.mxu0 0.0
    %3401 = vmatprep.subr.mxu0 0.0
    %3402 = vmatpush1.msra.mxu0 0.0
    %3403 = vmatprep.subr.mxu0 0.0
    %3404 = vmatpush1.msra.mxu0 0.0
    %3405 = vmatprep.subr.mxu0 0.0
    %3406 = vmatpush1.msra.mxu0 0.0
    %3407 = vmatprep.subr.mxu0 0.0
    %3408 = vmatpush1.msra.mxu0 0.0
    %3409 = vmatprep.subr.mxu0 0.0
    %3410 = vmatpush1.msra.mxu0 0.0
    %3411 = vmatprep.subr.mxu0 0.0
    %3412 = vmatpush1.msra.mxu0 0.0
    %3413 = vmatprep.subr.mxu0 0.0
    %3414 = vmatpush1.msra.mxu0 0.0
    %3415 = vmatprep.subr.mxu0 0.0
    %3416 = vmatpush1.msra.mxu0 0.0
    %3417 = vmatprep.subr.mxu0 0.0
    %3418 = vmatpush1.msra.mxu0 0.0
    %3419 = vmatprep.subr.mxu0 0.0
    %3420 = vmatpush1.msra.mxu0 0.0
    %3421 = vmatprep.subr.mxu0 0.0
    %3422 = vmatpush1.msra.mxu0 0.0
    %3423 = vmatprep.subr.mxu0 0.0
    %3424 = vmatpush1.msra.mxu0 0.0
    %3425 = vmatprep.subr.mxu0 0.0
    %3426 = vmatpush1.msra.mxu0 0.0
    %3427 = vmatprep.subr.mxu0 0.0
    %3428 = vmatpush1.msra.mxu0 0.0
    %3429 = vmatprep.subr.mxu0 0.0
    %3430 = vmatpush1.msra.mxu0 0.0
    %3431 = vmatprep.subr.mxu0 0.0
    %3432 = vmatpush1.msra.mxu0 0.0
    %3433 = vmatprep.subr.mxu0 0.0
    %3434 = vmatpush1.msra.mxu0 0.0
    %3435 = vmatprep.subr.mxu0 0.0
    %3436 = vmatpush1.msra.mxu0 0.0
    %3437 = vmatprep.subr.mxu0 0.0
    %3438 = vmatpush1.msra.mxu0 0.0
    %3439 = vmatprep.subr.mxu0 0.0
    %3440 = vmatpush1.msra.mxu0 0.0
    %3441 = vmatprep.subr.mxu0 0.0
    %3442 = vmatpush1.msra.mxu0 0.0
    %3443 = vmatprep.subr.mxu0 0.0
    %3444 = vmatpush1.msra.mxu0 0.0
    %3445 = vmatprep.mubr.f32.mxu0 0.0
    %3446 = vmatmul.mubr.f32.gmra.mrb[0].mxu0 %v1750
    %v3447 = vpop.f32.mrb[0].mxu0
    %v3448 = vadd.f32 0.0, %v3447
    %v3449 = vpop.f32.mrb[0].mxu0
    %3450 = vdwg.mxu0
    %v3451 = vadd.f32 %v2904, %v3448
    %v3452 = vld [vmem:[%s45] sm:$0x3]
    %v3453 = vld [vmem:[%s49] sm:$0x3]
    %v3454 = vld [vmem:[%s41] sm:$0xff]
    %v3455 = vld [vmem:[%s41 + $0x8] sm:$0xff]
    %v3456 = vld [vmem:[%s41 + $0x10] sm:$0xff]
    %v3457 = vld [vmem:[%s41 + $0x18] sm:$0xff]
    %v3458 = vld [vmem:[%s41 + $0x20] sm:$0xff]
    %v3459 = vld [vmem:[%s41 + $0x28] sm:$0xff]
    %v3460 = vld [vmem:[%s41 + $0x30] sm:$0xff]
    %v3461 = vld [vmem:[%s41 + $0x38] sm:$0xff]
    %v3462 = vld [vmem:[%s43] sm:$0xf]
    %v3463 = vld [vmem:[%s43 + $0x4] sm:$0xf]
    %v3464 = vld [vmem:[%s43 + $0x8] sm:$0xf]
    %v3465 = vld [vmem:[%s43 + $0xc] sm:$0xf]
    %v3466 = vld [vmem:[%s43 + $0x10] sm:$0xf]
    %v3467 = vld [vmem:[%s43 + $0x14] sm:$0xf]
    %v3468 = vld [vmem:[%s43 + $0x18] sm:$0xf]
    %v3469 = vld [vmem:[%s43 + $0x1c] sm:$0xf]
    %v3470 = vld [vmem:[%s43 + $0x20] sm:$0xf]
    %v3471 = vld [vmem:[%s43 + $0x24] sm:$0xf]
    %v3472 = vld [vmem:[%s43 + $0x28] sm:$0xf]
    %v3473 = vld [vmem:[%s43 + $0x2c] sm:$0xf]
    %v3474 = vld [vmem:[%s43 + $0x30] sm:$0xf]
    %v3475 = vld [vmem:[%s43 + $0x34] sm:$0xf]
    %v3476 = vld [vmem:[%s43 + $0x38] sm:$0xf]
    %v3477 = vld [vmem:[%s43 + $0x3c] sm:$0xf]
    %v3478 = vld [vmem:[%s43 + $0x40] sm:$0xf]
    %v3479 = vld [vmem:[%s43 + $0x44] sm:$0xf]
    %v3480 = vld [vmem:[%s43 + $0x48] sm:$0xf]
    %v3481 = vld [vmem:[%s43 + $0x4c] sm:$0xf]
    %v3482 = vld [vmem:[%s43 + $0x50] sm:$0xf]
    %v3483 = vld [vmem:[%s43 + $0x54] sm:$0xf]
    %v3484 = vld [vmem:[%s43 + $0x58] sm:$0xf]
    %v3485 = vld [vmem:[%s43 + $0x5c] sm:$0xf]
    %v3486 = vld [vmem:[%s43 + $0x60] sm:$0xf]
    %v3487 = vld [vmem:[%s43 + $0x64] sm:$0xf]
    %v3488 = vld [vmem:[%s43 + $0x68] sm:$0xf]
    %v3489 = vld [vmem:[%s43 + $0x6c] sm:$0xf]
    %v3490 = vld [vmem:[%s43 + $0x70] sm:$0xf]
    %v3491 = vld [vmem:[%s43 + $0x74] sm:$0xf]
    %v3492 = vld [vmem:[%s43 + $0x78] sm:$0xf]
    %v3493 = vld [vmem:[%s43 + $0x7c] sm:$0xf]
    %v3494 = vld [vmem:[%s43 + $0x80] sm:$0xf]
    %v3495 = vld [vmem:[%s43 + $0x84] sm:$0xf]
    %v3496 = vld [vmem:[%s43 + $0x88] sm:$0xf]
    %v3497 = vld [vmem:[%s43 + $0x8c] sm:$0xf]
    %v3498 = vld [vmem:[%s43 + $0x90] sm:$0xf]
    %v3499 = vld [vmem:[%s43 + $0x94] sm:$0xf]
    %v3500 = vld [vmem:[%s43 + $0x98] sm:$0xf]
    %v3501 = vld [vmem:[%s43 + $0x9c] sm:$0xf]
    %v3502 = vld [vmem:[%s43 + $0xa0] sm:$0xf]
    %v3503 = vld [vmem:[%s43 + $0xa4] sm:$0xf]
    %v3504 = vld [vmem:[%s43 + $0xa8] sm:$0xf]
    %v3505 = vld [vmem:[%s43 + $0xac] sm:$0xf]
    %v3506 = vld [vmem:[%s43 + $0xb0] sm:$0xf]
    %v3507 = vld [vmem:[%s43 + $0xb4] sm:$0xf]
    %v3508 = vld [vmem:[%s43 + $0xb8] sm:$0xf]
    %v3509 = vld [vmem:[%s43 + $0xbc] sm:$0xf]
    %v3510 = vld [vmem:[%s43 + $0xc0] sm:$0xf]
    %v3511 = vld [vmem:[%s43 + $0xc4] sm:$0xf]
    %v3512 = vld [vmem:[%s43 + $0xc8] sm:$0xf]
    %v3513 = vld [vmem:[%s43 + $0xcc] sm:$0xf]
    %v3514 = vld [vmem:[%s43 + $0xd0] sm:$0xf]
    %v3515 = vld [vmem:[%s43 + $0xd4] sm:$0xf]
    %v3516 = vld [vmem:[%s43 + $0xd8] sm:$0xf]
    %v3517 = vld [vmem:[%s43 + $0xdc] sm:$0xf]
    %v3518 = vld [vmem:[%s43 + $0xe0] sm:$0xf]
    %v3519 = vld [vmem:[%s43 + $0xe4] sm:$0xf]
    %v3520 = vld [vmem:[%s43 + $0xe8] sm:$0xf]
    %v3521 = vld [vmem:[%s43 + $0xec] sm:$0xf]
    %v3530 = vunpack.c.l.b16 %v3454
    %v3531 = vunpack.c.h.b16 %v3454
    %v3532 = vunpack.c.l.b16 %v3455
    %v3533 = vunpack.c.h.b16 %v3455
    %v3534 = vunpack.c.l.b16 %v3456
    %v3535 = vunpack.c.h.b16 %v3456
    %v3536 = vunpack.c.l.b16 %v3457
    %v3537 = vunpack.c.h.b16 %v3457
    %v3538 = vunpack.c.l.b16 %v3458
    %v3539 = vunpack.c.h.b16 %v3458
    %v3540 = vunpack.c.l.b16 %v3459
    %v3541 = vunpack.c.h.b16 %v3459
    %v3542 = vunpack.c.l.b16 %v3460
    %v3543 = vunpack.c.h.b16 %v3460
    %v3544 = vunpack.c.l.b16 %v3461
    %v3545 = vunpack.c.h.b16 %v3461
    %v3546 = vpack.c.b16 %v3534, %v3530
    %v3547 = vpack.c.b16 %v3535, %v3531
    %v3548 = vpack.c.b16 %v3536, %v3532
    %v3549 = vpack.c.b16 %v3537, %v3533
    %v3550 = vpack.c.b16 %v3542, %v3538
    %v3551 = vpack.c.b16 %v3543, %v3539
    %v3552 = vpack.c.b16 %v3544, %v3540
    %v3553 = vpack.c.b16 %v3545, %v3541
    %v3620 = vunpack.c.l.b16 %v3462
    %v3621 = vunpack.c.l.b16 %v3463
    %v3622 = vunpack.c.l.b16 %v3464
    %v3623 = vunpack.c.l.b16 %v3465
    %v3624 = vunpack.c.l.b16 %v3466
    %v3625 = vunpack.c.l.b16 %v3467
    %v3626 = vunpack.c.l.b16 %v3468
    %v3627 = vunpack.c.l.b16 %v3469
    %v3628 = vunpack.c.l.b16 %v3470
    %v3629 = vunpack.c.l.b16 %v3471
    %v3630 = vunpack.c.l.b16 %v3472
    %v3631 = vunpack.c.l.b16 %v3473
    %v3632 = vunpack.c.l.b16 %v3474
    %v3633 = vunpack.c.l.b16 %v3475
    %v3634 = vunpack.c.l.b16 %v3476
    %v3635 = vunpack.c.l.b16 %v3477
    %v3636 = vunpack.c.l.b16 %v3478
    %v3637 = vunpack.c.l.b16 %v3479
    %v3638 = vunpack.c.l.b16 %v3480
    %v3639 = vunpack.c.l.b16 %v3481
    %v3640 = vunpack.c.l.b16 %v3482
    %v3641 = vunpack.c.l.b16 %v3483
    %v3642 = vunpack.c.l.b16 %v3484
    %v3643 = vunpack.c.l.b16 %v3485
    %v3644 = vunpack.c.l.b16 %v3486
    %v3645 = vunpack.c.l.b16 %v3487
    %v3646 = vunpack.c.l.b16 %v3488
    %v3647 = vunpack.c.l.b16 %v3489
    %v3648 = vunpack.c.l.b16 %v3490
    %v3649 = vunpack.c.l.b16 %v3491
    %v3650 = vunpack.c.l.b16 %v3492
    %v3651 = vunpack.c.l.b16 %v3493
    %v3652 = vunpack.c.l.b16 %v3494
    %v3653 = vunpack.c.l.b16 %v3495
    %v3654 = vunpack.c.l.b16 %v3496
    %v3655 = vunpack.c.l.b16 %v3497
    %v3656 = vunpack.c.l.b16 %v3498
    %v3657 = vunpack.c.l.b16 %v3499
    %v3658 = vunpack.c.l.b16 %v3500
    %v3659 = vunpack.c.l.b16 %v3501
    %v3660 = vunpack.c.l.b16 %v3502
    %v3661 = vunpack.c.l.b16 %v3503
    %v3662 = vunpack.c.l.b16 %v3504
    %v3663 = vunpack.c.l.b16 %v3505
    %v3664 = vunpack.c.l.b16 %v3506
    %v3665 = vunpack.c.l.b16 %v3507
    %v3666 = vunpack.c.l.b16 %v3508
    %v3667 = vunpack.c.l.b16 %v3509
    %v3668 = vunpack.c.l.b16 %v3510
    %v3669 = vunpack.c.l.b16 %v3511
    %v3670 = vunpack.c.l.b16 %v3512
    %v3671 = vunpack.c.l.b16 %v3513
    %v3672 = vunpack.c.l.b16 %v3514
    %v3673 = vunpack.c.l.b16 %v3515
    %v3674 = vunpack.c.l.b16 %v3516
    %v3675 = vunpack.c.l.b16 %v3517
    %v3676 = vunpack.c.l.b16 %v3518
    %v3677 = vunpack.c.l.b16 %v3519
    %v3678 = vunpack.c.l.b16 %v3520
    %v3679 = vunpack.c.l.b16 %v3521
    %v3680 = vpack.c.b16 %v3621, %v3620
    %v3681 = vpack.c.b16 %v3623, %v3622
    %v3682 = vpack.c.b16 %v3625, %v3624
    %v3683 = vpack.c.b16 %v3627, %v3626
    %v3684 = vpack.c.b16 %v3629, %v3628
    %v3685 = vpack.c.b16 %v3631, %v3630
    %v3686 = vpack.c.b16 %v3633, %v3632
    %v3687 = vpack.c.b16 %v3635, %v3634
    %v3688 = vpack.c.b16 %v3637, %v3636
    %v3689 = vpack.c.b16 %v3639, %v3638
    %v3690 = vpack.c.b16 %v3641, %v3640
    %v3691 = vpack.c.b16 %v3643, %v3642
    %v3692 = vpack.c.b16 %v3645, %v3644
    %v3693 = vpack.c.b16 %v3647, %v3646
    %v3694 = vpack.c.b16 %v3649, %v3648
    %v3695 = vpack.c.b16 %v3651, %v3650
    %v3696 = vpack.c.b16 %v3653, %v3652
    %v3697 = vpack.c.b16 %v3655, %v3654
    %v3698 = vpack.c.b16 %v3657, %v3656
    %v3699 = vpack.c.b16 %v3659, %v3658
    %v3700 = vpack.c.b16 %v3661, %v3660
    %v3701 = vpack.c.b16 %v3663, %v3662
    %v3702 = vpack.c.b16 %v3665, %v3664
    %v3703 = vpack.c.b16 %v3667, %v3666
    %v3704 = vpack.c.b16 %v3669, %v3668
    %v3705 = vpack.c.b16 %v3671, %v3670
    %v3706 = vpack.c.b16 %v3673, %v3672
    %v3707 = vpack.c.b16 %v3675, %v3674
    %v3708 = vpack.c.b16 %v3677, %v3676
    %v3709 = vpack.c.b16 %v3679, %v3678
    %vm3740 = vcmask 785408
    %v3742 = vsel %vm3740, %v3549, 0
    %v3745 = vsel %vm3740, %v3553, 0
    %3747 = vmatprep.subr.bf16.mxu0 0
    %3748 = vmatpush1.bf16.msra.mxu0 %v3680
    %3749 = vmatprep.subr.bf16.mxu0 0
    %3750 = vmatpush1.bf16.msra.mxu0 %v3681
    %3751 = vmatprep.subr.bf16.mxu0 0
    %3752 = vmatpush1.bf16.msra.mxu0 %v3682
    %3753 = vmatprep.subr.bf16.mxu0 0
    %3754 = vmatpush1.bf16.msra.mxu0 %v3683
    %3755 = vmatprep.subr.bf16.mxu0 0
    %3756 = vmatpush1.bf16.msra.mxu0 %v3684
    %3757 = vmatprep.subr.bf16.mxu0 0
    %3758 = vmatpush1.bf16.msra.mxu0 %v3685
    %3759 = vmatprep.subr.bf16.mxu0 0
    %3760 = vmatpush1.bf16.msra.mxu0 %v3686
    %3761 = vmatprep.subr.bf16.mxu0 0
    %3762 = vmatpush1.bf16.msra.mxu0 %v3687
    %3763 = vmatprep.subr.bf16.mxu0 0
    %3764 = vmatpush1.bf16.msra.mxu0 %v3688
    %3765 = vmatprep.subr.bf16.mxu0 0
    %3766 = vmatpush1.bf16.msra.mxu0 %v3689
    %3767 = vmatprep.subr.bf16.mxu0 0
    %3768 = vmatpush1.bf16.msra.mxu0 %v3690
    %3769 = vmatprep.subr.bf16.mxu0 0
    %3770 = vmatpush1.bf16.msra.mxu0 %v3691
    %3771 = vmatprep.subr.bf16.mxu0 0
    %3772 = vmatpush1.bf16.msra.mxu0 %v3692
    %3773 = vmatprep.subr.bf16.mxu0 0
    %3774 = vmatpush1.bf16.msra.mxu0 %v3693
    %3775 = vmatprep.subr.bf16.mxu0 0
    %3776 = vmatpush1.bf16.msra.mxu0 %v3694
    %3777 = vmatprep.subr.bf16.mxu0 0
    %3778 = vmatpush1.bf16.msra.mxu0 %v3695
    %3779 = vmatprep.mubr.bf16.mxu0 %v3547
    %3780 = vmatmul.mubr.bf16.gmra.mrb[0].mxu0 %v3546
    %v3781 = vpop.f32.mrb[0].mxu0
    %v3782 = vadd.f32 0.0, %v3781
    %v3783 = vpop.f32.mrb[0].mxu0
    %v3784 = vpop.f32.mrb[0].mxu0
    %v3785 = vadd.f32 0.0, %v3784
    %v3786 = vpop.f32.mrb[0].mxu0
    %3787 = vmatprep.mubr.bf16.mxu0 %v3551
    %3788 = vmatmul.mubr.bf16.gmra.mrb[0].mxu0 %v3550
    %v3789 = vpop.f32.mrb[0].mxu0
    %v3790 = vadd.f32 0.0, %v3789
    %v3791 = vpop.f32.mrb[0].mxu0
    %v3792 = vpop.f32.mrb[0].mxu0
    %v3793 = vadd.f32 0.0, %v3792
    %v3794 = vpop.f32.mrb[0].mxu0
    %3795 = vdwg.mxu0
    %3796 = vmatprep.subr.bf16.mxu0 0
    %3797 = vmatpush1.bf16.msra.mxu0 %v3696
    %3798 = vmatprep.subr.bf16.mxu0 0
    %3799 = vmatpush1.bf16.msra.mxu0 %v3697
    %3800 = vmatprep.subr.bf16.mxu0 0
    %3801 = vmatpush1.bf16.msra.mxu0 %v3698
    %3802 = vmatprep.subr.bf16.mxu0 0
    %3803 = vmatpush1.bf16.msra.mxu0 %v3699
    %3804 = vmatprep.subr.bf16.mxu0 0
    %3805 = vmatpush1.bf16.msra.mxu0 %v3700
    %3806 = vmatprep.subr.bf16.mxu0 0
    %3807 = vmatpush1.bf16.msra.mxu0 %v3701
    %3808 = vmatprep.subr.bf16.mxu0 0
    %3809 = vmatpush1.bf16.msra.mxu0 %v3702
    %3810 = vmatprep.subr.bf16.mxu0 0
    %3811 = vmatpush1.bf16.msra.mxu0 %v3703
    %3812 = vmatprep.subr.bf16.mxu0 0
    %3813 = vmatpush1.bf16.msra.mxu0 %v3704
    %3814 = vmatprep.subr.bf16.mxu0 0
    %3815 = vmatpush1.bf16.msra.mxu0 %v3705
    %3816 = vmatprep.subr.bf16.mxu0 0
    %3817 = vmatpush1.bf16.msra.mxu0 %v3706
    %3818 = vmatprep.subr.bf16.mxu0 0
    %3819 = vmatpush1.bf16.msra.mxu0 %v3707
    %3820 = vmatprep.subr.bf16.mxu0 0
    %3821 = vmatpush1.bf16.msra.mxu0 %v3708
    %3822 = vmatprep.subr.bf16.mxu0 0
    %3823 = vmatpush1.bf16.msra.mxu0 %v3709
    %3824 = vmatprep.subr.bf16.mxu0 0
    %3825 = vmatpush1.bf16.msra.mxu0 0
    %3826 = vmatprep.subr.bf16.mxu0 0
    %3827 = vmatpush1.bf16.msra.mxu0 0
    %3828 = vmatprep.mubr.bf16.mxu0 %v3742
    %3829 = vmatmul.mubr.bf16.gmra.mrb[0].mxu0 %v3548
    %v3830 = vpop.f32.mrb[0].mxu0
    %v3831 = vadd.f32 %v3782, %v3830
    %v3832 = vpop.f32.mrb[0].mxu0
    %v3833 = vpop.f32.mrb[0].mxu0
    %v3834 = vadd.f32 %v3785, %v3833
    %v3835 = vpop.f32.mrb[0].mxu0
    %3836 = vmatprep.mubr.bf16.mxu0 %v3745
    %3837 = vmatmul.mubr.bf16.gmra.mrb[0].mxu0 %v3552
    %v3838 = vpop.f32.mrb[0].mxu0
    %v3839 = vadd.f32 %v3790, %v3838
    %v3840 = vpop.f32.mrb[0].mxu0
    %v3841 = vpop.f32.mrb[0].mxu0
    %v3842 = vadd.f32 %v3793, %v3841
    %v3843 = vpop.f32.mrb[0].mxu0
    %3844 = vdwg.mxu0
    %v3845 = vlaneseq
    %v3846 = vshrl.u32 %v3845, 7
    %v3847 = vsub.s32 0, %v3846
    %v3848 = vrot.slane %v3452, %v3847
    %v3849 = vmul.f32 %v3831, %v3848
    %v3850 = vmul.f32 %v3834, %v3848
    %v3851 = vmul.f32 %v3839, %v3848
    %v3852 = vmul.f32 %v3842, %v3848
    %v3853 = vlaneseq
    %v3854 = vshrl.u32 %v3853, 7
    %v3855 = vsub.s32 1, %v3854
    %v3856 = vrot.slane %v3452, %v3855
    %v3857 = vadd.f32 %v3849, %v3856
    %v3858 = vadd.f32 %v3850, %v3856
    %v3859 = vadd.f32 %v3851, %v3856
    %v3860 = vadd.f32 %v3852, %v3856
    %v3861 = vmax.f32 %v3857, 0.0
    %v3862 = vmax.f32 %v3858, 0.0
    %v3863 = vmax.f32 %v3859, 0.0
    %v3864 = vmax.f32 %v3860, 0.0
    %v3865 = vld [vmem:[%s47] sm:$0xff]
    %v3866 = vld [vmem:[%s47 + $0x8] sm:$0xff]
    %v3867 = vld [vmem:[%s47 + $0x10] sm:$0xff]
    %v3868 = vld [vmem:[%s47 + $0x18] sm:$0xff]
    %v3869 = vld [vmem:[%s47 + $0x20] sm:$0xff]
    %v3870 = vld [vmem:[%s47 + $0x28] sm:$0xff]
    %v3871 = vld [vmem:[%s47 + $0x30] sm:$0xff]
    %v3872 = vld [vmem:[%s47 + $0x38] sm:$0xff]
    %v3873 = vld [vmem:[%s47 + $0x40] sm:$0xff]
    %v3874 = vld [vmem:[%s47 + $0x48] sm:$0xff]
    %v3876 = vsel %vm3263, %v3861, 0
    %v3879 = vsel %vm3263, %v3862, 0
    %v3882 = vsel %vm3263, %v3863, 0
    %v3885 = vsel %vm3263, %v3864, 0
    %3887 = vmatprep.subr.mxu0 0.0
    %3888 = vmatpush1.msra.mxu0 %v3865
    %3889 = vmatprep.subr.mxu0 0.0
    %3890 = vmatpush1.msra.mxu0 %v3866
    %3891 = vmatprep.subr.mxu0 0.0
    %3892 = vmatpush1.msra.mxu0 %v3867
    %3893 = vmatprep.subr.mxu0 0.0
    %3894 = vmatpush1.msra.mxu0 %v3868
    %3895 = vmatprep.subr.mxu0 0.0
    %3896 = vmatpush1.msra.mxu0 %v3869
    %3897 = vmatprep.subr.mxu0 0.0
    %3898 = vmatpush1.msra.mxu0 %v3870
    %3899 = vmatprep.subr.mxu0 0.0
    %3900 = vmatpush1.msra.mxu0 %v3871
    %3901 = vmatprep.subr.mxu0 0.0
    %3902 = vmatpush1.msra.mxu0 %v3872
    %3903 = vmatprep.subr.mxu0 0.0
    %3904 = vmatpush1.msra.mxu0 %v3873
    %3905 = vmatprep.subr.mxu0 0.0
    %3906 = vmatpush1.msra.mxu0 %v3874
    %3907 = vmatprep.subr.mxu0 0.0
    %3908 = vmatpush1.msra.mxu0 0.0
    %3909 = vmatprep.subr.mxu0 0.0
    %3910 = vmatpush1.msra.mxu0 0.0
    %3911 = vmatprep.subr.mxu0 0.0
    %3912 = vmatpush1.msra.mxu0 0.0
    %3913 = vmatprep.subr.mxu0 0.0
    %3914 = vmatpush1.msra.mxu0 0.0
    %3915 = vmatprep.subr.mxu0 0.0
    %3916 = vmatpush1.msra.mxu0 0.0
    %3917 = vmatprep.subr.mxu0 0.0
    %3918 = vmatpush1.msra.mxu0 0.0
    %3919 = vmatprep.subr.mxu0 0.0
    %3920 = vmatpush1.msra.mxu0 0.0
    %3921 = vmatprep.subr.mxu0 0.0
    %3922 = vmatpush1.msra.mxu0 0.0
    %3923 = vmatprep.subr.mxu0 0.0
    %3924 = vmatpush1.msra.mxu0 0.0
    %3925 = vmatprep.subr.mxu0 0.0
    %3926 = vmatpush1.msra.mxu0 0.0
    %3927 = vmatprep.subr.mxu0 0.0
    %3928 = vmatpush1.msra.mxu0 0.0
    %3929 = vmatprep.subr.mxu0 0.0
    %3930 = vmatpush1.msra.mxu0 0.0
    %3931 = vmatprep.subr.mxu0 0.0
    %3932 = vmatpush1.msra.mxu0 0.0
    %3933 = vmatprep.subr.mxu0 0.0
    %3934 = vmatpush1.msra.mxu0 0.0
    %3935 = vmatprep.subr.mxu0 0.0
    %3936 = vmatpush1.msra.mxu0 0.0
    %3937 = vmatprep.subr.mxu0 0.0
    %3938 = vmatpush1.msra.mxu0 0.0
    %3939 = vmatprep.subr.mxu0 0.0
    %3940 = vmatpush1.msra.mxu0 0.0
    %3941 = vmatprep.subr.mxu0 0.0
    %3942 = vmatpush1.msra.mxu0 0.0
    %3943 = vmatprep.subr.mxu0 0.0
    %3944 = vmatpush1.msra.mxu0 0.0
    %3945 = vmatprep.subr.mxu0 0.0
    %3946 = vmatpush1.msra.mxu0 0.0
    %3947 = vmatprep.subr.mxu0 0.0
    %3948 = vmatpush1.msra.mxu0 0.0
    %3949 = vmatprep.subr.mxu0 0.0
    %3950 = vmatpush1.msra.mxu0 0.0
    %3951 = vmatprep.mubr.f32.mxu0 0.0
    %3952 = vmatmul.mubr.f32.gmra.mrb[0].mxu0 %v3876
    %v3953 = vpop.f32.mrb[0].mxu0
    %v3954 = vadd.f32 0.0, %v3953
    %v3955 = vpop.f32.mrb[0].mxu0
    %3956 = vmatprep.mubr.f32.mxu0 0.0
    %3957 = vmatmul.mubr.f32.gmra.mrb[0].mxu0 %v3879
    %v3958 = vpop.f32.mrb[0].mxu0
    %v3959 = vadd.f32 0.0, %v3958
    %v3960 = vpop.f32.mrb[0].mxu0
    %3961 = vmatprep.mubr.f32.mxu0 0.0
    %3962 = vmatmul.mubr.f32.gmra.mrb[0].mxu0 %v3882
    %v3963 = vpop.f32.mrb[0].mxu0
    %v3964 = vadd.f32 0.0, %v3963
    %v3965 = vpop.f32.mrb[0].mxu0
    %3966 = vmatprep.mubr.f32.mxu0 0.0
    %3967 = vmatmul.mubr.f32.gmra.mrb[0].mxu0 %v3885
    %v3968 = vpop.f32.mrb[0].mxu0
    %v3969 = vadd.f32 0.0, %v3968
    %v3970 = vpop.f32.mrb[0].mxu0
    %3971 = vdwg.mxu0
    %v3972 = vlaneseq
    %v3973 = vshrl.u32 %v3972, 7
    %v3974 = vsub.s32 0, %v3973
    %v3975 = vrot.slane %v3453, %v3974
    %v3976 = vmul.f32 %v3954, %v3975
    %v3977 = vmul.f32 %v3959, %v3975
    %v3978 = vmul.f32 %v3964, %v3975
    %v3979 = vmul.f32 %v3969, %v3975
    %v3980 = vlaneseq
    %v3981 = vshrl.u32 %v3980, 7
    %v3982 = vsub.s32 1, %v3981
    %v3983 = vrot.slane %v3453, %v3982
    %v3984 = vadd.f32 %v3976, %v3983
    %v3985 = vadd.f32 %v3977, %v3983
    %v3986 = vadd.f32 %v3978, %v3983
    %v3987 = vadd.f32 %v3979, %v3983
    %v3988 = vmax.f32 %v3984, 0.0
    %v3989 = vmax.f32 %v3985, 0.0
    %v3990 = vmax.f32 %v3986, 0.0
    %v3991 = vmax.f32 %v3987, 0.0
    %3992 = vmatprep.subr.mxu0 0.0
    %3993 = vmatpush1.msra.mxu0 %v3988
    %3994 = vmatprep.subr.mxu0 0.0
    %3995 = vmatpush1.msra.mxu0 %v3989
    %3996 = vmatprep.subr.mxu0 0.0
    %3997 = vmatpush1.msra.mxu0 %v3990
    %3998 = vmatprep.subr.mxu0 0.0
    %3999 = vmatpush1.msra.mxu0 %v3991
    %4000 = vmatprep.subr.mxu0 0.0
    %4001 = vmatpush1.msra.mxu0 0.0
    %4002 = vmatprep.subr.mxu0 0.0
    %4003 = vmatpush1.msra.mxu0 0.0
    %4004 = vmatprep.subr.mxu0 0.0
    %4005 = vmatpush1.msra.mxu0 0.0
    %4006 = vmatprep.subr.mxu0 0.0
    %4007 = vmatpush1.msra.mxu0 0.0
    %4008 = vmatprep.subr.mxu0 0.0
    %4009 = vmatpush1.msra.mxu0 0.0
    %4010 = vmatprep.subr.mxu0 0.0
    %4011 = vmatpush1.msra.mxu0 0.0
    %4012 = vmatprep.subr.mxu0 0.0
    %4013 = vmatpush1.msra.mxu0 0.0
    %4014 = vmatprep.subr.mxu0 0.0
    %4015 = vmatpush1.msra.mxu0 0.0
    %4016 = vmatprep.subr.mxu0 0.0
    %4017 = vmatpush1.msra.mxu0 0.0
    %4018 = vmatprep.subr.mxu0 0.0
    %4019 = vmatpush1.msra.mxu0 0.0
    %4020 = vmatprep.subr.mxu0 0.0
    %4021 = vmatpush1.msra.mxu0 0.0
    %4022 = vmatprep.subr.mxu0 0.0
    %4023 = vmatpush1.msra.mxu0 0.0
    %4024 = vmatprep.subr.mxu0 0.0
    %4025 = vmatpush1.msra.mxu0 0.0
    %4026 = vmatprep.subr.mxu0 0.0
    %4027 = vmatpush1.msra.mxu0 0.0
    %4028 = vmatprep.subr.mxu0 0.0
    %4029 = vmatpush1.msra.mxu0 0.0
    %4030 = vmatprep.subr.mxu0 0.0
    %4031 = vmatpush1.msra.mxu0 0.0
    %4032 = vmatprep.subr.mxu0 0.0
    %4033 = vmatpush1.msra.mxu0 0.0
    %4034 = vmatprep.subr.mxu0 0.0
    %4035 = vmatpush1.msra.mxu0 0.0
    %4036 = vmatprep.subr.mxu0 0.0
    %4037 = vmatpush1.msra.mxu0 0.0
    %4038 = vmatprep.subr.mxu0 0.0
    %4039 = vmatpush1.msra.mxu0 0.0
    %4040 = vmatprep.subr.mxu0 0.0
    %4041 = vmatpush1.msra.mxu0 0.0
    %4042 = vmatprep.subr.mxu0 0.0
    %4043 = vmatpush1.msra.mxu0 0.0
    %4044 = vmatprep.subr.mxu0 0.0
    %4045 = vmatpush1.msra.mxu0 0.0
    %4046 = vmatprep.subr.mxu0 0.0
    %4047 = vmatpush1.msra.mxu0 0.0
    %4048 = vmatprep.subr.mxu0 0.0
    %4049 = vmatpush1.msra.mxu0 0.0
    %4050 = vmatprep.subr.mxu0 0.0
    %4051 = vmatpush1.msra.mxu0 0.0
    %4052 = vmatprep.subr.mxu0 0.0
    %4053 = vmatpush1.msra.mxu0 0.0
    %4054 = vmatprep.subr.mxu0 0.0
    %4055 = vmatpush1.msra.mxu0 0.0
    %4056 = vmatprep.mubr.f32.mxu0 0.0
    %4057 = vmatmul.mubr.f32.gmra.mrb[0].mxu0 %v1750
    %v4058 = vpop.f32.mrb[0].mxu0
    %v4059 = vadd.f32 0.0, %v4058
    %v4060 = vpop.f32.mrb[0].mxu0
    %4061 = vdwg.mxu0
    %v4062 = vadd.f32 %v3451, %v4059
    %v4063 = vld [vmem:[%s55] sm:$0x3]
    %v4064 = vld [vmem:[%s59] sm:$0x3]
    %v4065 = vld [vmem:[%s51] sm:$0xff]
    %v4066 = vld [vmem:[%s51 + $0x8] sm:$0xff]
    %v4067 = vld [vmem:[%s51 + $0x10] sm:$0xff]
    %v4068 = vld [vmem:[%s51 + $0x18] sm:$0xff]
    %v4069 = vld [vmem:[%s51 + $0x20] sm:$0xff]
    %v4070 = vld [vmem:[%s51 + $0x28] sm:$0xff]
    %v4071 = vld [vmem:[%s51 + $0x30] sm:$0xff]
    %v4072 = vld [vmem:[%s51 + $0x38] sm:$0xff]
    %v4073 = vld [vmem:[%s51 + $0x40] sm:$0xff]
    %v4074 = vld [vmem:[%s51 + $0x48] sm:$0xff]
    %v4075 = vld [vmem:[%s51 + $0x50] sm:$0xff]
    %v4076 = vld [vmem:[%s51 + $0x58] sm:$0xff]
    %v4077 = vld [vmem:[%s53] sm:$0xf]
    %v4078 = vld [vmem:[%s53 + $0x4] sm:$0xf]
    %v4079 = vld [vmem:[%s53 + $0x8] sm:$0xf]
    %v4080 = vld [vmem:[%s53 + $0xc] sm:$0xf]
    %v4081 = vld [vmem:[%s53 + $0x10] sm:$0xf]
    %v4082 = vld [vmem:[%s53 + $0x14] sm:$0xf]
    %v4083 = vld [vmem:[%s53 + $0x18] sm:$0xf]
    %v4084 = vld [vmem:[%s53 + $0x1c] sm:$0xf]
    %v4085 = vld [vmem:[%s53 + $0x20] sm:$0xf]
    %v4086 = vld [vmem:[%s53 + $0x24] sm:$0xf]
    %v4087 = vld [vmem:[%s53 + $0x28] sm:$0xf]
    %v4088 = vld [vmem:[%s53 + $0x2c] sm:$0xf]
    %v4089 = vld [vmem:[%s53 + $0x30] sm:$0xf]
    %v4090 = vld [vmem:[%s53 + $0x34] sm:$0xf]
    %v4091 = vld [vmem:[%s53 + $0x38] sm:$0xf]
    %v4092 = vld [vmem:[%s53 + $0x3c] sm:$0xf]
    %v4093 = vld [vmem:[%s53 + $0x40] sm:$0xf]
    %v4094 = vld [vmem:[%s53 + $0x44] sm:$0xf]
    %v4095 = vld [vmem:[%s53 + $0x48] sm:$0xf]
    %v4096 = vld [vmem:[%s53 + $0x4c] sm:$0xf]
    %v4097 = vld [vmem:[%s53 + $0x50] sm:$0xf]
    %v4098 = vld [vmem:[%s53 + $0x54] sm:$0xf]
    %v4099 = vld [vmem:[%s53 + $0x58] sm:$0xf]
    %v4100 = vld [vmem:[%s53 + $0x5c] sm:$0xf]
    %v4101 = vld [vmem:[%s53 + $0x60] sm:$0xf]
    %v4102 = vld [vmem:[%s53 + $0x64] sm:$0xf]
    %v4103 = vld [vmem:[%s53 + $0x68] sm:$0xf]
    %v4104 = vld [vmem:[%s53 + $0x6c] sm:$0xf]
    %v4105 = vld [vmem:[%s53 + $0x70] sm:$0xf]
    %v4106 = vld [vmem:[%s53 + $0x74] sm:$0xf]
    %v4107 = vld [vmem:[%s53 + $0x78] sm:$0xf]
    %v4108 = vld [vmem:[%s53 + $0x7c] sm:$0xf]
    %v4109 = vld [vmem:[%s53 + $0x80] sm:$0xf]
    %v4110 = vld [vmem:[%s53 + $0x84] sm:$0xf]
    %v4111 = vld [vmem:[%s53 + $0x88] sm:$0xf]
    %v4112 = vld [vmem:[%s53 + $0x8c] sm:$0xf]
    %v4113 = vld [vmem:[%s53 + $0x90] sm:$0xf]
    %v4114 = vld [vmem:[%s53 + $0x94] sm:$0xf]
    %v4115 = vld [vmem:[%s53 + $0x98] sm:$0xf]
    %v4116 = vld [vmem:[%s53 + $0x9c] sm:$0xf]
    %v4117 = vld [vmem:[%s53 + $0xa0] sm:$0xf]
    %v4118 = vld [vmem:[%s53 + $0xa4] sm:$0xf]
    %v4119 = vld [vmem:[%s53 + $0xa8] sm:$0xf]
    %v4120 = vld [vmem:[%s53 + $0xac] sm:$0xf]
    %v4121 = vld [vmem:[%s53 + $0xb0] sm:$0xf]
    %v4122 = vld [vmem:[%s53 + $0xb4] sm:$0xf]
    %v4123 = vld [vmem:[%s53 + $0xb8] sm:$0xf]
    %v4124 = vld [vmem:[%s53 + $0xbc] sm:$0xf]
    %v4125 = vld [vmem:[%s53 + $0xc0] sm:$0xf]
    %v4126 = vld [vmem:[%s53 + $0xc4] sm:$0xf]
    %v4127 = vld [vmem:[%s53 + $0xc8] sm:$0xf]
    %v4128 = vld [vmem:[%s53 + $0xcc] sm:$0xf]
    %v4129 = vld [vmem:[%s53 + $0xd0] sm:$0xf]
    %v4130 = vld [vmem:[%s53 + $0xd4] sm:$0xf]
    %v4131 = vld [vmem:[%s53 + $0xd8] sm:$0xf]
    %v4132 = vld [vmem:[%s53 + $0xdc] sm:$0xf]
    %v4133 = vld [vmem:[%s53 + $0xe0] sm:$0xf]
    %v4134 = vld [vmem:[%s53 + $0xe4] sm:$0xf]
    %v4135 = vld [vmem:[%s53 + $0xe8] sm:$0xf]
    %v4136 = vld [vmem:[%s53 + $0xec] sm:$0xf]
    %v4137 = vld [vmem:[%s53 + $0xf0] sm:$0xf]
    %v4138 = vld [vmem:[%s53 + $0xf4] sm:$0xf]
    %v4139 = vld [vmem:[%s53 + $0xf8] sm:$0xf]
    %v4140 = vld [vmem:[%s53 + $0xfc] sm:$0xf]
    %v4141 = vld [vmem:[%s53 + $0x100] sm:$0xf]
    %v4142 = vld [vmem:[%s53 + $0x104] sm:$0xf]
    %v4143 = vld [vmem:[%s53 + $0x108] sm:$0xf]
    %v4144 = vld [vmem:[%s53 + $0x10c] sm:$0xf]
    %v4145 = vld [vmem:[%s53 + $0x110] sm:$0xf]
    %v4146 = vld [vmem:[%s53 + $0x114] sm:$0xf]
    %v4147 = vld [vmem:[%s53 + $0x118] sm:$0xf]
    %v4148 = vld [vmem:[%s53 + $0x11c] sm:$0xf]
    %v4149 = vld [vmem:[%s53 + $0x120] sm:$0xf]
    %v4150 = vld [vmem:[%s53 + $0x124] sm:$0xf]
    %v4151 = vld [vmem:[%s53 + $0x128] sm:$0xf]
    %v4152 = vld [vmem:[%s53 + $0x12c] sm:$0xf]
    %v4153 = vld [vmem:[%s53 + $0x130] sm:$0xf]
    %v4154 = vld [vmem:[%s53 + $0x134] sm:$0xf]
    %v4155 = vld [vmem:[%s53 + $0x138] sm:$0xf]
    %v4156 = vld [vmem:[%s53 + $0x13c] sm:$0xf]
    %v4157 = vld [vmem:[%s53 + $0x140] sm:$0xf]
    %v4158 = vld [vmem:[%s53 + $0x144] sm:$0xf]
    %v4159 = vld [vmem:[%s53 + $0x148] sm:$0xf]
    %v4160 = vld [vmem:[%s53 + $0x14c] sm:$0xf]
    %v4161 = vld [vmem:[%s53 + $0x150] sm:$0xf]
    %v4162 = vld [vmem:[%s53 + $0x154] sm:$0xf]
    %v4163 = vld [vmem:[%s53 + $0x158] sm:$0xf]
    %v4164 = vld [vmem:[%s53 + $0x15c] sm:$0xf]
    %v4165 = vld [vmem:[%s53 + $0x160] sm:$0xf]
    %v4166 = vld [vmem:[%s53 + $0x164] sm:$0xf]
    %v4179 = vunpack.c.l.b16 %v4065
    %v4180 = vunpack.c.h.b16 %v4065
    %v4181 = vunpack.c.l.b16 %v4066
    %v4182 = vunpack.c.h.b16 %v4066
    %v4183 = vunpack.c.l.b16 %v4067
    %v4184 = vunpack.c.h.b16 %v4067
    %v4185 = vunpack.c.l.b16 %v4068
    %v4186 = vunpack.c.h.b16 %v4068
    %v4187 = vunpack.c.l.b16 %v4069
    %v4188 = vunpack.c.h.b16 %v4069
    %v4189 = vunpack.c.l.b16 %v4070
    %v4190 = vunpack.c.h.b16 %v4070
    %v4191 = vunpack.c.l.b16 %v4071
    %v4192 = vunpack.c.h.b16 %v4071
    %v4193 = vunpack.c.l.b16 %v4072
    %v4194 = vunpack.c.h.b16 %v4072
    %v4195 = vunpack.c.l.b16 %v4073
    %v4196 = vunpack.c.h.b16 %v4073
    %v4197 = vunpack.c.l.b16 %v4074
    %v4198 = vunpack.c.h.b16 %v4074
    %v4199 = vunpack.c.l.b16 %v4075
    %v4200 = vunpack.c.h.b16 %v4075
    %v4201 = vunpack.c.l.b16 %v4076
    %v4202 = vunpack.c.h.b16 %v4076
    %v4203 = vpack.c.b16 %v4185, %v4179
    %v4204 = vpack.c.b16 %v4186, %v4180
    %v4205 = vpack.c.b16 %v4187, %v4181
    %v4206 = vpack.c.b16 %v4188, %v4182
    %v4207 = vpack.c.b16 %v4189, %v4183
    %v4208 = vpack.c.b16 %v4190, %v4184
    %v4209 = vpack.c.b16 %v4197, %v4191
    %v4210 = vpack.c.b16 %v4198, %v4192
    %v4211 = vpack.c.b16 %v4199, %v4193
    %v4212 = vpack.c.b16 %v4200, %v4194
    %v4213 = vpack.c.b16 %v4201, %v4195
    %v4214 = vpack.c.b16 %v4202, %v4196
    %v4315 = vunpack.c.l.b16 %v4077
    %v4316 = vunpack.c.l.b16 %v4078
    %v4317 = vunpack.c.l.b16 %v4079
    %v4318 = vunpack.c.l.b16 %v4080
    %v4319 = vunpack.c.l.b16 %v4081
    %v4320 = vunpack.c.l.b16 %v4082
    %v4321 = vunpack.c.l.b16 %v4083
    %v4322 = vunpack.c.l.b16 %v4084
    %v4323 = vunpack.c.l.b16 %v4085
    %v4324 = vunpack.c.l.b16 %v4086
    %v4325 = vunpack.c.l.b16 %v4087
    %v4326 = vunpack.c.l.b16 %v4088
    %v4327 = vunpack.c.l.b16 %v4089
    %v4328 = vunpack.c.l.b16 %v4090
    %v4329 = vunpack.c.l.b16 %v4091
    %v4330 = vunpack.c.l.b16 %v4092
    %v4331 = vunpack.c.l.b16 %v4093
    %v4332 = vunpack.c.l.b16 %v4094
    %v4333 = vunpack.c.l.b16 %v4095
    %v4334 = vunpack.c.l.b16 %v4096
    %v4335 = vunpack.c.l.b16 %v4097
    %v4336 = vunpack.c.l.b16 %v4098
    %v4337 = vunpack.c.l.b16 %v4099
    %v4338 = vunpack.c.l.b16 %v4100
    %v4339 = vunpack.c.l.b16 %v4101
    %v4340 = vunpack.c.l.b16 %v4102
    %v4341 = vunpack.c.l.b16 %v4103
    %v4342 = vunpack.c.l.b16 %v4104
    %v4343 = vunpack.c.l.b16 %v4105
    %v4344 = vunpack.c.l.b16 %v4106
    %v4345 = vunpack.c.l.b16 %v4107
    %v4346 = vunpack.c.l.b16 %v4108
    %v4347 = vunpack.c.l.b16 %v4109
    %v4348 = vunpack.c.l.b16 %v4110
    %v4349 = vunpack.c.l.b16 %v4111
    %v4350 = vunpack.c.l.b16 %v4112
    %v4351 = vunpack.c.l.b16 %v4113
    %v4352 = vunpack.c.l.b16 %v4114
    %v4353 = vunpack.c.l.b16 %v4115
    %v4354 = vunpack.c.l.b16 %v4116
    %v4355 = vunpack.c.l.b16 %v4117
    %v4356 = vunpack.c.l.b16 %v4118
    %v4357 = vunpack.c.l.b16 %v4119
    %v4358 = vunpack.c.l.b16 %v4120
    %v4359 = vunpack.c.l.b16 %v4121
    %v4360 = vunpack.c.l.b16 %v4122
    %v4361 = vunpack.c.l.b16 %v4123
    %v4362 = vunpack.c.l.b16 %v4124
    %v4363 = vunpack.c.l.b16 %v4125
    %v4364 = vunpack.c.l.b16 %v4126
    %v4365 = vunpack.c.l.b16 %v4127
    %v4366 = vunpack.c.l.b16 %v4128
    %v4367 = vunpack.c.l.b16 %v4129
    %v4368 = vunpack.c.l.b16 %v4130
    %v4369 = vunpack.c.l.b16 %v4131
    %v4370 = vunpack.c.l.b16 %v4132
    %v4371 = vunpack.c.l.b16 %v4133
    %v4372 = vunpack.c.l.b16 %v4134
    %v4373 = vunpack.c.l.b16 %v4135
    %v4374 = vunpack.c.l.b16 %v4136
    %v4375 = vunpack.c.l.b16 %v4137
    %v4376 = vunpack.c.l.b16 %v4138
    %v4377 = vunpack.c.l.b16 %v4139
    %v4378 = vunpack.c.l.b16 %v4140
    %v4379 = vunpack.c.l.b16 %v4141
    %v4380 = vunpack.c.l.b16 %v4142
    %v4381 = vunpack.c.l.b16 %v4143
    %v4382 = vunpack.c.l.b16 %v4144
    %v4383 = vunpack.c.l.b16 %v4145
    %v4384 = vunpack.c.l.b16 %v4146
    %v4385 = vunpack.c.l.b16 %v4147
    %v4386 = vunpack.c.l.b16 %v4148
    %v4387 = vunpack.c.l.b16 %v4149
    %v4388 = vunpack.c.l.b16 %v4150
    %v4389 = vunpack.c.l.b16 %v4151
    %v4390 = vunpack.c.l.b16 %v4152
    %v4391 = vunpack.c.l.b16 %v4153
    %v4392 = vunpack.c.l.b16 %v4154
    %v4393 = vunpack.c.l.b16 %v4155
    %v4394 = vunpack.c.l.b16 %v4156
    %v4395 = vunpack.c.l.b16 %v4157
    %v4396 = vunpack.c.l.b16 %v4158
    %v4397 = vunpack.c.l.b16 %v4159
    %v4398 = vunpack.c.l.b16 %v4160
    %v4399 = vunpack.c.l.b16 %v4161
    %v4400 = vunpack.c.l.b16 %v4162
    %v4401 = vunpack.c.l.b16 %v4163
    %v4402 = vunpack.c.l.b16 %v4164
    %v4403 = vunpack.c.l.b16 %v4165
    %v4404 = vunpack.c.l.b16 %v4166
    %v4405 = vpack.c.b16 %v4316, %v4315
    %v4406 = vpack.c.b16 %v4318, %v4317
    %v4407 = vpack.c.b16 %v4320, %v4319
    %v4408 = vpack.c.b16 %v4322, %v4321
    %v4409 = vpack.c.b16 %v4324, %v4323
    %v4410 = vpack.c.b16 %v4326, %v4325
    %v4411 = vpack.c.b16 %v4328, %v4327
    %v4412 = vpack.c.b16 %v4330, %v4329
    %v4413 = vpack.c.b16 %v4332, %v4331
    %v4414 = vpack.c.b16 %v4334, %v4333
    %v4415 = vpack.c.b16 %v4336, %v4335
    %v4416 = vpack.c.b16 %v4338, %v4337
    %v4417 = vpack.c.b16 %v4340, %v4339
    %v4418 = vpack.c.b16 %v4342, %v4341
    %v4419 = vpack.c.b16 %v4344, %v4343
    %v4420 = vpack.c.b16 %v4346, %v4345
    %v4421 = vpack.c.b16 %v4348, %v4347
    %v4422 = vpack.c.b16 %v4350, %v4349
    %v4423 = vpack.c.b16 %v4352, %v4351
    %v4424 = vpack.c.b16 %v4354, %v4353
    %v4425 = vpack.c.b16 %v4356, %v4355
    %v4426 = vpack.c.b16 %v4358, %v4357
    %v4427 = vpack.c.b16 %v4360, %v4359
    %v4428 = vpack.c.b16 %v4362, %v4361
    %v4429 = vpack.c.b16 %v4364, %v4363
    %v4430 = vpack.c.b16 %v4366, %v4365
    %v4431 = vpack.c.b16 %v4368, %v4367
    %v4432 = vpack.c.b16 %v4370, %v4369
    %v4433 = vpack.c.b16 %v4372, %v4371
    %v4434 = vpack.c.b16 %v4374, %v4373
    %v4435 = vpack.c.b16 %v4376, %v4375
    %v4436 = vpack.c.b16 %v4378, %v4377
    %v4437 = vpack.c.b16 %v4380, %v4379
    %v4438 = vpack.c.b16 %v4382, %v4381
    %v4439 = vpack.c.b16 %v4384, %v4383
    %v4440 = vpack.c.b16 %v4386, %v4385
    %v4441 = vpack.c.b16 %v4388, %v4387
    %v4442 = vpack.c.b16 %v4390, %v4389
    %v4443 = vpack.c.b16 %v4392, %v4391
    %v4444 = vpack.c.b16 %v4394, %v4393
    %v4445 = vpack.c.b16 %v4396, %v4395
    %v4446 = vpack.c.b16 %v4398, %v4397
    %v4447 = vpack.c.b16 %v4400, %v4399
    %v4448 = vpack.c.b16 %v4402, %v4401
    %v4449 = vpack.c.b16 %v4404, %v4403
    %v4496 = vsel %vm3263, %v4208, 0
    %v4499 = vsel %vm3263, %v4214, 0
    %4501 = vmatprep.subr.bf16.mxu0 0
    %4502 = vmatpush1.bf16.msra.mxu0 %v4405
    %4503 = vmatprep.subr.bf16.mxu0 0
    %4504 = vmatpush1.bf16.msra.mxu0 %v4406
    %4505 = vmatprep.subr.bf16.mxu0 0
    %4506 = vmatpush1.bf16.msra.mxu0 %v4407
    %4507 = vmatprep.subr.bf16.mxu0 0
    %4508 = vmatpush1.bf16.msra.mxu0 %v4408
    %4509 = vmatprep.subr.bf16.mxu0 0
    %4510 = vmatpush1.bf16.msra.mxu0 %v4409
    %4511 = vmatprep.subr.bf16.mxu0 0
    %4512 = vmatpush1.bf16.msra.mxu0 %v4410
    %4513 = vmatprep.subr.bf16.mxu0 0
    %4514 = vmatpush1.bf16.msra.mxu0 %v4411
    %4515 = vmatprep.subr.bf16.mxu0 0
    %4516 = vmatpush1.bf16.msra.mxu0 %v4412
    %4517 = vmatprep.subr.bf16.mxu0 0
    %4518 = vmatpush1.bf16.msra.mxu0 %v4413
    %4519 = vmatprep.subr.bf16.mxu0 0
    %4520 = vmatpush1.bf16.msra.mxu0 %v4414
    %4521 = vmatprep.subr.bf16.mxu0 0
    %4522 = vmatpush1.bf16.msra.mxu0 %v4415
    %4523 = vmatprep.subr.bf16.mxu0 0
    %4524 = vmatpush1.bf16.msra.mxu0 %v4416
    %4525 = vmatprep.subr.bf16.mxu0 0
    %4526 = vmatpush1.bf16.msra.mxu0 %v4417
    %4527 = vmatprep.subr.bf16.mxu0 0
    %4528 = vmatpush1.bf16.msra.mxu0 %v4418
    %4529 = vmatprep.subr.bf16.mxu0 0
    %4530 = vmatpush1.bf16.msra.mxu0 %v4419
    %4531 = vmatprep.subr.bf16.mxu0 0
    %4532 = vmatpush1.bf16.msra.mxu0 %v4420
    %4533 = vmatprep.mubr.bf16.mxu0 %v4204
    %4534 = vmatmul.mubr.bf16.gmra.mrb[0].mxu0 %v4203
    %v4535 = vpop.f32.mrb[0].mxu0
    %v4536 = vadd.f32 0.0, %v4535
    %v4537 = vpop.f32.mrb[0].mxu0
    %v4538 = vpop.f32.mrb[0].mxu0
    %v4539 = vadd.f32 0.0, %v4538
    %v4540 = vpop.f32.mrb[0].mxu0
    %4541 = vmatprep.mubr.bf16.mxu0 %v4210
    %4542 = vmatmul.mubr.bf16.gmra.mrb[0].mxu0 %v4209
    %v4543 = vpop.f32.mrb[0].mxu0
    %v4544 = vadd.f32 0.0, %v4543
    %v4545 = vpop.f32.mrb[0].mxu0
    %v4546 = vpop.f32.mrb[0].mxu0
    %v4547 = vadd.f32 0.0, %v4546
    %v4548 = vpop.f32.mrb[0].mxu0
    %4549 = vdwg.mxu0
    %4550 = vmatprep.subr.bf16.mxu0 0
    %4551 = vmatpush1.bf16.msra.mxu0 %v4421
    %4552 = vmatprep.subr.bf16.mxu0 0
    %4553 = vmatpush1.bf16.msra.mxu0 %v4422
    %4554 = vmatprep.subr.bf16.mxu0 0
    %4555 = vmatpush1.bf16.msra.mxu0 %v4423
    %4556 = vmatprep.subr.bf16.mxu0 0
    %4557 = vmatpush1.bf16.msra.mxu0 %v4424
    %4558 = vmatprep.subr.bf16.mxu0 0
    %4559 = vmatpush1.bf16.msra.mxu0 %v4425
    %4560 = vmatprep.subr.bf16.mxu0 0
    %4561 = vmatpush1.bf16.msra.mxu0 %v4426
    %4562 = vmatprep.subr.bf16.mxu0 0
    %4563 = vmatpush1.bf16.msra.mxu0 %v4427
    %4564 = vmatprep.subr.bf16.mxu0 0
    %4565 = vmatpush1.bf16.msra.mxu0 %v4428
    %4566 = vmatprep.subr.bf16.mxu0 0
    %4567 = vmatpush1.bf16.msra.mxu0 %v4429
    %4568 = vmatprep.subr.bf16.mxu0 0
    %4569 = vmatpush1.bf16.msra.mxu0 %v4430
    %4570 = vmatprep.subr.bf16.mxu0 0
    %4571 = vmatpush1.bf16.msra.mxu0 %v4431
    %4572 = vmatprep.subr.bf16.mxu0 0
    %4573 = vmatpush1.bf16.msra.mxu0 %v4432
    %4574 = vmatprep.subr.bf16.mxu0 0
    %4575 = vmatpush1.bf16.msra.mxu0 %v4433
    %4576 = vmatprep.subr.bf16.mxu0 0
    %4577 = vmatpush1.bf16.msra.mxu0 %v4434
    %4578 = vmatprep.subr.bf16.mxu0 0
    %4579 = vmatpush1.bf16.msra.mxu0 %v4435
    %4580 = vmatprep.subr.bf16.mxu0 0
    %4581 = vmatpush1.bf16.msra.mxu0 %v4436
    %4582 = vmatprep.mubr.bf16.mxu0 %v4206
    %4583 = vmatmul.mubr.bf16.gmra.mrb[0].mxu0 %v4205
    %v4584 = vpop.f32.mrb[0].mxu0
    %v4585 = vadd.f32 %v4536, %v4584
    %v4586 = vpop.f32.mrb[0].mxu0
    %v4587 = vpop.f32.mrb[0].mxu0
    %v4588 = vadd.f32 %v4539, %v4587
    %v4589 = vpop.f32.mrb[0].mxu0
    %4590 = vmatprep.mubr.bf16.mxu0 %v4212
    %4591 = vmatmul.mubr.bf16.gmra.mrb[0].mxu0 %v4211
    %v4592 = vpop.f32.mrb[0].mxu0
    %v4593 = vadd.f32 %v4544, %v4592
    %v4594 = vpop.f32.mrb[0].mxu0
    %v4595 = vpop.f32.mrb[0].mxu0
    %v4596 = vadd.f32 %v4547, %v4595
    %v4597 = vpop.f32.mrb[0].mxu0
    %4598 = vdwg.mxu0
    %4599 = vmatprep.subr.bf16.mxu0 0
    %4600 = vmatpush1.bf16.msra.mxu0 %v4437
    %4601 = vmatprep.subr.bf16.mxu0 0
    %4602 = vmatpush1.bf16.msra.mxu0 %v4438
    %4603 = vmatprep.subr.bf16.mxu0 0
    %4604 = vmatpush1.bf16.msra.mxu0 %v4439
    %4605 = vmatprep.subr.bf16.mxu0 0
    %4606 = vmatpush1.bf16.msra.mxu0 %v4440
    %4607 = vmatprep.subr.bf16.mxu0 0
    %4608 = vmatpush1.bf16.msra.mxu0 %v4441
    %4609 = vmatprep.subr.bf16.mxu0 0
    %4610 = vmatpush1.bf16.msra.mxu0 %v4442
    %4611 = vmatprep.subr.bf16.mxu0 0
    %4612 = vmatpush1.bf16.msra.mxu0 %v4443
    %4613 = vmatprep.subr.bf16.mxu0 0
    %4614 = vmatpush1.bf16.msra.mxu0 %v4444
    %4615 = vmatprep.subr.bf16.mxu0 0
    %4616 = vmatpush1.bf16.msra.mxu0 %v4445
    %4617 = vmatprep.subr.bf16.mxu0 0
    %4618 = vmatpush1.bf16.msra.mxu0 %v4446
    %4619 = vmatprep.subr.bf16.mxu0 0
    %4620 = vmatpush1.bf16.msra.mxu0 %v4447
    %4621 = vmatprep.subr.bf16.mxu0 0
    %4622 = vmatpush1.bf16.msra.mxu0 %v4448
    %4623 = vmatprep.subr.bf16.mxu0 0
    %4624 = vmatpush1.bf16.msra.mxu0 %v4449
    %4625 = vmatprep.subr.bf16.mxu0 0
    %4626 = vmatpush1.bf16.msra.mxu0 0
    %4627 = vmatprep.subr.bf16.mxu0 0
    %4628 = vmatpush1.bf16.msra.mxu0 0
    %4629 = vmatprep.subr.bf16.mxu0 0
    %4630 = vmatpush1.bf16.msra.mxu0 0
    %4631 = vmatprep.mubr.bf16.mxu0 %v4496
    %4632 = vmatmul.mubr.bf16.gmra.mrb[0].mxu0 %v4207
    %v4633 = vpop.f32.mrb[0].mxu0
    %v4634 = vadd.f32 %v4585, %v4633
    %v4635 = vpop.f32.mrb[0].mxu0
    %v4636 = vpop.f32.mrb[0].mxu0
    %v4637 = vadd.f32 %v4588, %v4636
    %v4638 = vpop.f32.mrb[0].mxu0
    %4639 = vmatprep.mubr.bf16.mxu0 %v4499
    %4640 = vmatmul.mubr.bf16.gmra.mrb[0].mxu0 %v4213
    %v4641 = vpop.f32.mrb[0].mxu0
    %v4642 = vadd.f32 %v4593, %v4641
    %v4643 = vpop.f32.mrb[0].mxu0
    %v4644 = vpop.f32.mrb[0].mxu0
    %v4645 = vadd.f32 %v4596, %v4644
    %v4646 = vpop.f32.mrb[0].mxu0
    %4647 = vdwg.mxu0
    %v4648 = vlaneseq
    %v4649 = vshrl.u32 %v4648, 7
    %v4650 = vsub.s32 0, %v4649
    %v4651 = vrot.slane %v4063, %v4650
    %v4652 = vmul.f32 %v4634, %v4651
    %v4653 = vmul.f32 %v4637, %v4651
    %v4654 = vmul.f32 %v4642, %v4651
    %v4655 = vmul.f32 %v4645, %v4651
    %v4656 = vlaneseq
    %v4657 = vshrl.u32 %v4656, 7
    %v4658 = vsub.s32 1, %v4657
    %v4659 = vrot.slane %v4063, %v4658
    %v4660 = vadd.f32 %v4652, %v4659
    %v4661 = vadd.f32 %v4653, %v4659
    %v4662 = vadd.f32 %v4654, %v4659
    %v4663 = vadd.f32 %v4655, %v4659
    %v4664 = vmax.f32 %v4660, 0.0
    %v4665 = vmax.f32 %v4661, 0.0
    %v4666 = vmax.f32 %v4662, 0.0
    %v4667 = vmax.f32 %v4663, 0.0
    %v4668 = vld [vmem:[%s57] sm:$0xff]
    %v4669 = vld [vmem:[%s57 + $0x8] sm:$0xff]
    %v4670 = vld [vmem:[%s57 + $0x10] sm:$0xff]
    %v4671 = vld [vmem:[%s57 + $0x18] sm:$0xff]
    %v4672 = vld [vmem:[%s57 + $0x20] sm:$0xff]
    %v4673 = vld [vmem:[%s57 + $0x28] sm:$0xff]
    %v4674 = vld [vmem:[%s57 + $0x30] sm:$0xff]
    %v4675 = vld [vmem:[%s57 + $0x38] sm:$0xff]
    %v4676 = vld [vmem:[%s57 + $0x40] sm:$0xff]
    %v4677 = vld [vmem:[%s57 + $0x48] sm:$0xff]
    %v4679 = vsel %vm3263, %v4664, 0
    %v4682 = vsel %vm3263, %v4665, 0
    %v4685 = vsel %vm3263, %v4666, 0
    %v4688 = vsel %vm3263, %v4667, 0
    %4690 = vmatprep.subr.mxu0 0.0
    %4691 = vmatpush1.msra.mxu0 %v4668
    %4692 = vmatprep.subr.mxu0 0.0
    %4693 = vmatpush1.msra.mxu0 %v4669
    %4694 = vmatprep.subr.mxu0 0.0
    %4695 = vmatpush1.msra.mxu0 %v4670
    %4696 = vmatprep.subr.mxu0 0.0
    %4697 = vmatpush1.msra.mxu0 %v4671
    %4698 = vmatprep.subr.mxu0 0.0
    %4699 = vmatpush1.msra.mxu0 %v4672
    %4700 = vmatprep.subr.mxu0 0.0
    %4701 = vmatpush1.msra.mxu0 %v4673
    %4702 = vmatprep.subr.mxu0 0.0
    %4703 = vmatpush1.msra.mxu0 %v4674
    %4704 = vmatprep.subr.mxu0 0.0
    %4705 = vmatpush1.msra.mxu0 %v4675
    %4706 = vmatprep.subr.mxu0 0.0
    %4707 = vmatpush1.msra.mxu0 %v4676
    %4708 = vmatprep.subr.mxu0 0.0
    %4709 = vmatpush1.msra.mxu0 %v4677
    %4710 = vmatprep.subr.mxu0 0.0
    %4711 = vmatpush1.msra.mxu0 0.0
    %4712 = vmatprep.subr.mxu0 0.0
    %4713 = vmatpush1.msra.mxu0 0.0
    %4714 = vmatprep.subr.mxu0 0.0
    %4715 = vmatpush1.msra.mxu0 0.0
    %4716 = vmatprep.subr.mxu0 0.0
    %4717 = vmatpush1.msra.mxu0 0.0
    %4718 = vmatprep.subr.mxu0 0.0
    %4719 = vmatpush1.msra.mxu0 0.0
    %4720 = vmatprep.subr.mxu0 0.0
    %4721 = vmatpush1.msra.mxu0 0.0
    %4722 = vmatprep.subr.mxu0 0.0
    %4723 = vmatpush1.msra.mxu0 0.0
    %4724 = vmatprep.subr.mxu0 0.0
    %4725 = vmatpush1.msra.mxu0 0.0
    %4726 = vmatprep.subr.mxu0 0.0
    %4727 = vmatpush1.msra.mxu0 0.0
    %4728 = vmatprep.subr.mxu0 0.0
    %4729 = vmatpush1.msra.mxu0 0.0
    %4730 = vmatprep.subr.mxu0 0.0
    %4731 = vmatpush1.msra.mxu0 0.0
    %4732 = vmatprep.subr.mxu0 0.0
    %4733 = vmatpush1.msra.mxu0 0.0
    %4734 = vmatprep.subr.mxu0 0.0
    %4735 = vmatpush1.msra.mxu0 0.0
    %4736 = vmatprep.subr.mxu0 0.0
    %4737 = vmatpush1.msra.mxu0 0.0
    %4738 = vmatprep.subr.mxu0 0.0
    %4739 = vmatpush1.msra.mxu0 0.0
    %4740 = vmatprep.subr.mxu0 0.0
    %4741 = vmatpush1.msra.mxu0 0.0
    %4742 = vmatprep.subr.mxu0 0.0
    %4743 = vmatpush1.msra.mxu0 0.0
    %4744 = vmatprep.subr.mxu0 0.0
    %4745 = vmatpush1.msra.mxu0 0.0
    %4746 = vmatprep.subr.mxu0 0.0
    %4747 = vmatpush1.msra.mxu0 0.0
    %4748 = vmatprep.subr.mxu0 0.0
    %4749 = vmatpush1.msra.mxu0 0.0
    %4750 = vmatprep.subr.mxu0 0.0
    %4751 = vmatpush1.msra.mxu0 0.0
    %4752 = vmatprep.subr.mxu0 0.0
    %4753 = vmatpush1.msra.mxu0 0.0
    %4754 = vmatprep.mubr.f32.mxu0 0.0
    %4755 = vmatmul.mubr.f32.gmra.mrb[0].mxu0 %v4679
    %v4756 = vpop.f32.mrb[0].mxu0
    %v4757 = vadd.f32 0.0, %v4756
    %v4758 = vpop.f32.mrb[0].mxu0
    %4759 = vmatprep.mubr.f32.mxu0 0.0
    %4760 = vmatmul.mubr.f32.gmra.mrb[0].mxu0 %v4682
    %v4761 = vpop.f32.mrb[0].mxu0
    %v4762 = vadd.f32 0.0, %v4761
    %v4763 = vpop.f32.mrb[0].mxu0
    %4764 = vmatprep.mubr.f32.mxu0 0.0
    %4765 = vmatmul.mubr.f32.gmra.mrb[0].mxu0 %v4685
    %v4766 = vpop.f32.mrb[0].mxu0
    %v4767 = vadd.f32 0.0, %v4766
    %v4768 = vpop.f32.mrb[0].mxu0
    %4769 = vmatprep.mubr.f32.mxu0 0.0
    %4770 = vmatmul.mubr.f32.gmra.mrb[0].mxu0 %v4688
    %v4771 = vpop.f32.mrb[0].mxu0
    %v4772 = vadd.f32 0.0, %v4771
    %v4773 = vpop.f32.mrb[0].mxu0
    %4774 = vdwg.mxu0
    %v4775 = vlaneseq
    %v4776 = vshrl.u32 %v4775, 7
    %v4777 = vsub.s32 0, %v4776
    %v4778 = vrot.slane %v4064, %v4777
    %v4779 = vmul.f32 %v4757, %v4778
    %v4780 = vmul.f32 %v4762, %v4778
    %v4781 = vmul.f32 %v4767, %v4778
    %v4782 = vmul.f32 %v4772, %v4778
    %v4783 = vlaneseq
    %v4784 = vshrl.u32 %v4783, 7
    %v4785 = vsub.s32 1, %v4784
    %v4786 = vrot.slane %v4064, %v4785
    %v4787 = vadd.f32 %v4779, %v4786
    %v4788 = vadd.f32 %v4780, %v4786
    %v4789 = vadd.f32 %v4781, %v4786
    %v4790 = vadd.f32 %v4782, %v4786
    %v4791 = vmax.f32 %v4787, 0.0
    %v4792 = vmax.f32 %v4788, 0.0
    %v4793 = vmax.f32 %v4789, 0.0
    %v4794 = vmax.f32 %v4790, 0.0
    %4795 = vmatprep.subr.mxu0 0.0
    %4796 = vmatpush1.msra.mxu0 %v4791
    %4797 = vmatprep.subr.mxu0 0.0
    %4798 = vmatpush1.msra.mxu0 %v4792
    %4799 = vmatprep.subr.mxu0 0.0
    %4800 = vmatpush1.msra.mxu0 %v4793
    %4801 = vmatprep.subr.mxu0 0.0
    %4802 = vmatpush1.msra.mxu0 %v4794
    %4803 = vmatprep.subr.mxu0 0.0
    %4804 = vmatpush1.msra.mxu0 0.0
    %4805 = vmatprep.subr.mxu0 0.0
    %4806 = vmatpush1.msra.mxu0 0.0
    %4807 = vmatprep.subr.mxu0 0.0
    %4808 = vmatpush1.msra.mxu0 0.0
    %4809 = vmatprep.subr.mxu0 0.0
    %4810 = vmatpush1.msra.mxu0 0.0
    %4811 = vmatprep.subr.mxu0 0.0
    %4812 = vmatpush1.msra.mxu0 0.0
    %4813 = vmatprep.subr.mxu0 0.0
    %4814 = vmatpush1.msra.mxu0 0.0
    %4815 = vmatprep.subr.mxu0 0.0
    %4816 = vmatpush1.msra.mxu0 0.0
    %4817 = vmatprep.subr.mxu0 0.0
    %4818 = vmatpush1.msra.mxu0 0.0
    %4819 = vmatprep.subr.mxu0 0.0
    %4820 = vmatpush1.msra.mxu0 0.0
    %4821 = vmatprep.subr.mxu0 0.0
    %4822 = vmatpush1.msra.mxu0 0.0
    %4823 = vmatprep.subr.mxu0 0.0
    %4824 = vmatpush1.msra.mxu0 0.0
    %4825 = vmatprep.subr.mxu0 0.0
    %4826 = vmatpush1.msra.mxu0 0.0
    %4827 = vmatprep.subr.mxu0 0.0
    %4828 = vmatpush1.msra.mxu0 0.0
    %4829 = vmatprep.subr.mxu0 0.0
    %4830 = vmatpush1.msra.mxu0 0.0
    %4831 = vmatprep.subr.mxu0 0.0
    %4832 = vmatpush1.msra.mxu0 0.0
    %4833 = vmatprep.subr.mxu0 0.0
    %4834 = vmatpush1.msra.mxu0 0.0
    %4835 = vmatprep.subr.mxu0 0.0
    %4836 = vmatpush1.msra.mxu0 0.0
    %4837 = vmatprep.subr.mxu0 0.0
    %4838 = vmatpush1.msra.mxu0 0.0
    %4839 = vmatprep.subr.mxu0 0.0
    %4840 = vmatpush1.msra.mxu0 0.0
    %4841 = vmatprep.subr.mxu0 0.0
    %4842 = vmatpush1.msra.mxu0 0.0
    %4843 = vmatprep.subr.mxu0 0.0
    %4844 = vmatpush1.msra.mxu0 0.0
    %4845 = vmatprep.subr.mxu0 0.0
    %4846 = vmatpush1.msra.mxu0 0.0
    %4847 = vmatprep.subr.mxu0 0.0
    %4848 = vmatpush1.msra.mxu0 0.0
    %4849 = vmatprep.subr.mxu0 0.0
    %4850 = vmatpush1.msra.mxu0 0.0
    %4851 = vmatprep.subr.mxu0 0.0
    %4852 = vmatpush1.msra.mxu0 0.0
    %4853 = vmatprep.subr.mxu0 0.0
    %4854 = vmatpush1.msra.mxu0 0.0
    %4855 = vmatprep.subr.mxu0 0.0
    %4856 = vmatpush1.msra.mxu0 0.0
    %4857 = vmatprep.subr.mxu0 0.0
    %4858 = vmatpush1.msra.mxu0 0.0
    %4859 = vmatprep.mubr.f32.mxu0 0.0
    %4860 = vmatmul.mubr.f32.gmra.mrb[0].mxu0 %v1750
    %v4861 = vpop.f32.mrb[0].mxu0
    %v4862 = vadd.f32 0.0, %v4861
    %v4863 = vpop.f32.mrb[0].mxu0
    %4864 = vdwg.mxu0
    %v4865 = vadd.f32 %v4062, %v4862
    %v4866 = vld [vmem:[%s65] sm:$0x3]
    %v4867 = vlaneseq
    %v4868 = vshrl.u32 %v4867, 7
    %v4869 = vsub.s32 0, %v4868
    %v4870 = vrot.slane %v4866, %v4869
    %v4871 = vmul.f32 %v4865, %v4870
    %v4872 = vlaneseq
    %v4873 = vshrl.u32 %v4872, 7
    %v4874 = vsub.s32 1, %v4873
    %v4875 = vrot.slane %v4866, %v4874
    %v4876 = vadd.f32 %v4871, %v4875
    %v4877 = vld [vmem:[%s67] sm:$0xff]
    %v4878 = vld [vmem:[%s67 + $0x8] sm:$0x3]
    %v4879 = vld [vmem:[%s69] sm:$0x1]
    %v4881 = vlaneseq
    %v4882 = vshrl.u32 %v4881, 7
    %v4883 = vsub.s32 0, %v4882
    %v4884 = vrot.slane %v4879, %v4883
    %v4887 = vsel %vm488, %v4876, 0
    %v4890 = vsel %vm501, %v4878, 0
    %4892 = vmatprep.subr.mxu0 0.0
    %4893 = vmatpush1.msra.mxu0 %v4877
    %4894 = vmatprep.subr.mxu0 0.0
    %4895 = vmatpush1.msra.mxu0 %v4890
    %4896 = vmatprep.subr.mxu0 0.0
    %4897 = vmatpush1.msra.mxu0 0.0
    %4898 = vmatprep.subr.mxu0 0.0
    %4899 = vmatpush1.msra.mxu0 0.0
    %4900 = vmatprep.subr.mxu0 0.0
    %4901 = vmatpush1.msra.mxu0 0.0
    %4902 = vmatprep.subr.mxu0 0.0
    %4903 = vmatpush1.msra.mxu0 0.0
    %4904 = vmatprep.subr.mxu0 0.0
    %4905 = vmatpush1.msra.mxu0 0.0
    %4906 = vmatprep.subr.mxu0 0.0
    %4907 = vmatpush1.msra.mxu0 0.0
    %4908 = vmatprep.subr.mxu0 0.0
    %4909 = vmatpush1.msra.mxu0 0.0
    %4910 = vmatprep.subr.mxu0 0.0
    %4911 = vmatpush1.msra.mxu0 0.0
    %4912 = vmatprep.subr.mxu0 0.0
    %4913 = vmatpush1.msra.mxu0 0.0
    %4914 = vmatprep.subr.mxu0 0.0
    %4915 = vmatpush1.msra.mxu0 0.0
    %4916 = vmatprep.subr.mxu0 0.0
    %4917 = vmatpush1.msra.mxu0 0.0
    %4918 = vmatprep.subr.mxu0 0.0
    %4919 = vmatpush1.msra.mxu0 0.0
    %4920 = vmatprep.subr.mxu0 0.0
    %4921 = vmatpush1.msra.mxu0 0.0
    %4922 = vmatprep.subr.mxu0 0.0
    %4923 = vmatpush1.msra.mxu0 0.0
    %4924 = vmatprep.subr.mxu0 0.0
    %4925 = vmatpush1.msra.mxu0 0.0
    %4926 = vmatprep.subr.mxu0 0.0
    %4927 = vmatpush1.msra.mxu0 0.0
    %4928 = vmatprep.subr.mxu0 0.0
    %4929 = vmatpush1.msra.mxu0 0.0
    %4930 = vmatprep.subr.mxu0 0.0
    %4931 = vmatpush1.msra.mxu0 0.0
    %4932 = vmatprep.subr.mxu0 0.0
    %4933 = vmatpush1.msra.mxu0 0.0
    %4934 = vmatprep.subr.mxu0 0.0
    %4935 = vmatpush1.msra.mxu0 0.0
    %4936 = vmatprep.subr.mxu0 0.0
    %4937 = vmatpush1.msra.mxu0 0.0
    %4938 = vmatprep.subr.mxu0 0.0
    %4939 = vmatpush1.msra.mxu0 0.0
    %4940 = vmatprep.subr.mxu0 0.0
    %4941 = vmatpush1.msra.mxu0 0.0
    %4942 = vmatprep.subr.mxu0 0.0
    %4943 = vmatpush1.msra.mxu0 0.0
    %4944 = vmatprep.subr.mxu0 0.0
    %4945 = vmatpush1.msra.mxu0 0.0
    %4946 = vmatprep.subr.mxu0 0.0
    %4947 = vmatpush1.msra.mxu0 0.0
    %4948 = vmatprep.subr.mxu0 0.0
    %4949 = vmatpush1.msra.mxu0 0.0
    %4950 = vmatprep.subr.mxu0 0.0
    %4951 = vmatpush1.msra.mxu0 0.0
    %4952 = vmatprep.subr.mxu0 0.0
    %4953 = vmatpush1.msra.mxu0 0.0
    %4954 = vmatprep.subr.mxu0 0.0
    %4955 = vmatpush1.msra.mxu0 0.0
    %4956 = vmatprep.mubr.f32.mxu0 0.0
    %4957 = vmatmul.mubr.f32.gmra.mrb[0].mxu0 %v4887
    %v4958 = vpop.f32.mrb[0].mxu0
    %v4959 = vadd.f32 %v4884, %v4958
    %v4960 = vpop.f32.mrb[0].mxu0
    %4961 = vdwg.mxu0
    %v4962 = vmax.f32 %v4959, 0.0
    %v4963 = vld [vmem:[%s71] sm:$0xff]
    %v4964 = vld [vmem:[%s71 + $0x8] sm:$0xff]
    %v4965 = vld [vmem:[%s71 + $0x10] sm:$0xff]
    %v4966 = vld [vmem:[%s71 + $0x18] sm:$0xff]
    %v4967 = vld [vmem:[%s71 + $0x20] sm:$0xff]
    %v4968 = vld [vmem:[%s71 + $0x28] sm:$0xff]
    %v4969 = vld [vmem:[%s71 + $0x30] sm:$0xff]
    %v4970 = vld [vmem:[%s71 + $0x38] sm:$0xff]
    %v4971 = vld [vmem:[%s71 + $0x40] sm:$0xff]
    %v4972 = vld [vmem:[%s71 + $0x48] sm:$0xff]
    %v4973 = vld [vmem:[%s71 + $0x50] sm:$0xff]
    %v4974 = vld [vmem:[%s71 + $0x58] sm:$0xff]
    %v4975 = vld [vmem:[%s71 + $0x60] sm:$0xf]
    %v4976 = vld [vmem:[%s73] sm:$0x1]
    %v4978 = vlaneseq
    %v4979 = vshrl.u32 %v4978, 7
    %v4980 = vsub.s32 0, %v4979
    %v4981 = vrot.slane %v4976, %v4980
    %vm4983 = vcmask 818176
    %v4985 = vsel %vm4983, %v4962, 0
    %v4988 = vsel %vm2311, %v4975, 0
    %4990 = vmatprep.subr.mxu0 0.0
    %4991 = vmatpush1.msra.mxu0 %v4963
    %4992 = vmatprep.subr.mxu0 0.0
    %4993 = vmatpush1.msra.mxu0 %v4964
    %4994 = vmatprep.subr.mxu0 0.0
    %4995 = vmatpush1.msra.mxu0 %v4965
    %4996 = vmatprep.subr.mxu0 0.0
    %4997 = vmatpush1.msra.mxu0 %v4966
    %4998 = vmatprep.subr.mxu0 0.0
    %4999 = vmatpush1.msra.mxu0 %v4967
    %5000 = vmatprep.subr.mxu0 0.0
    %5001 = vmatpush1.msra.mxu0 %v4968
    %5002 = vmatprep.subr.mxu0 0.0
    %5003 = vmatpush1.msra.mxu0 %v4969
    %5004 = vmatprep.subr.mxu0 0.0
    %5005 = vmatpush1.msra.mxu0 %v4970
    %5006 = vmatprep.subr.mxu0 0.0
    %5007 = vmatpush1.msra.mxu0 %v4971
    %5008 = vmatprep.subr.mxu0 0.0
    %5009 = vmatpush1.msra.mxu0 %v4972
    %5010 = vmatprep.subr.mxu0 0.0
    %5011 = vmatpush1.msra.mxu0 %v4973
    %5012 = vmatprep.subr.mxu0 0.0
    %5013 = vmatpush1.msra.mxu0 %v4974
    %5014 = vmatprep.subr.mxu0 0.0
    %5015 = vmatpush1.msra.mxu0 %v4988
    %5016 = vmatprep.subr.mxu0 0.0
    %5017 = vmatpush1.msra.mxu0 0.0
    %5018 = vmatprep.subr.mxu0 0.0
    %5019 = vmatpush1.msra.mxu0 0.0
    %5020 = vmatprep.subr.mxu0 0.0
    %5021 = vmatpush1.msra.mxu0 0.0
    %5022 = vmatprep.subr.mxu0 0.0
    %5023 = vmatpush1.msra.mxu0 0.0
    %5024 = vmatprep.subr.mxu0 0.0
    %5025 = vmatpush1.msra.mxu0 0.0
    %5026 = vmatprep.subr.mxu0 0.0
    %5027 = vmatpush1.msra.mxu0 0.0
    %5028 = vmatprep.subr.mxu0 0.0
    %5029 = vmatpush1.msra.mxu0 0.0
    %5030 = vmatprep.subr.mxu0 0.0
    %5031 = vmatpush1.msra.mxu0 0.0
    %5032 = vmatprep.subr.mxu0 0.0
    %5033 = vmatpush1.msra.mxu0 0.0
    %5034 = vmatprep.subr.mxu0 0.0
    %5035 = vmatpush1.msra.mxu0 0.0
    %5036 = vmatprep.subr.mxu0 0.0
    %5037 = vmatpush1.msra.mxu0 0.0
    %5038 = vmatprep.subr.mxu0 0.0
    %5039 = vmatpush1.msra.mxu0 0.0
    %5040 = vmatprep.subr.mxu0 0.0
    %5041 = vmatpush1.msra.mxu0 0.0
    %5042 = vmatprep.subr.mxu0 0.0
    %5043 = vmatpush1.msra.mxu0 0.0
    %5044 = vmatprep.subr.mxu0 0.0
    %5045 = vmatpush1.msra.mxu0 0.0
    %5046 = vmatprep.subr.mxu0 0.0
    %5047 = vmatpush1.msra.mxu0 0.0
    %5048 = vmatprep.subr.mxu0 0.0
    %5049 = vmatpush1.msra.mxu0 0.0
    %5050 = vmatprep.subr.mxu0 0.0
    %5051 = vmatpush1.msra.mxu0 0.0
    %5052 = vmatprep.subr.mxu0 0.0
    %5053 = vmatpush1.msra.mxu0 0.0
    %5054 = vmatprep.mubr.f32.mxu0 0.0
    %5055 = vmatmul.mubr.f32.gmra.mrb[0].mxu0 %v4985
    %v5056 = vpop.f32.mrb[0].mxu0
    %v5057 = vadd.f32 %v4981, %v5056
    %v5058 = vpop.f32.mrb[0].mxu0
    %5059 = vdwg.mxu0
    %vm5060 = vcmask 9216
    %5061 = vst.msk [vmem:[#allocation2] sm:$0x3] %vm5060, %v5057
    // Predicated region
    $region150: #{mshcnn_forward.1} parent=1 // pred_check
      _
    $region151: #{mshcnn_forward.1} parent=1 // pred_check_branch
      %5063 = sbr.rel (0) target = $region153
    $region152: #{mshcnn_forward.1} parent=1 // pred_region
      %s5065 = ssub.s32 32, 32
      %5066 = vsyncadd [#allocation3], %s5065
      %s5068 = sshll.u32 [#allocation2], 4
      %s5069 = int_to_ptr.vmem [resolvable:$true] %s5068
      %5071 = dma.vmem_to_hbm [thread:$0]  %s5069, 32, %s75, [#allocation3]
    $region153: #{mshcnn_forward.1} parent=1 // pred_fallthru
      _
    // Predicated region
    $region154: #{mshcnn_forward.1} parent=1 // pred_check
      _
    $region155: #{mshcnn_forward.1} parent=1 // pred_check_branch
      %5073 = sbr.rel (0) target = $region157
    $region156: #{mshcnn_forward.1} parent=1 // pred_region
      %5074 = dma.done [#allocation3], 32
    $region157: #{mshcnn_forward.1} parent=1 // pred_fallthru
      _
    %5075 = vsyncpa [#allocation3], 1

</llo_original>
